<compile_context>
chip_gen: v6e
topology: v6e:2x2x1
jax: 0.10.0
libtpu: 0.0.40
codegen_flags: <defaults>
</compile_context>

<pallas_src>
import functools

import jax
import jax.numpy as jnp
from jax import lax
from jax.experimental import pallas as pl
from jax.experimental.pallas import tpu as pltpu


_ACTS = {
    "relu": lambda v: jnp.maximum(v, 0.0),
    "tanh": jnp.tanh,
    "sigmoid": jax.nn.sigmoid,
    "gelu": jax.nn.gelu,
    "leaky_relu": lambda v: jnp.where(v >= 0, v, 0.01 * v),
}


def _act(name):
    return _ACTS.get(name, _ACTS["relu"])      # matches the module's fallback


def _layer_geometry(l0, config):
    """Static (Python int) per-layer geometry."""
    ks, ss, ch = config["kernel_size"], config["stride"], config["channels"]
    layers = []
    l_in = l0
    for i in range(3):
        k, s = ks[i], ss[i]
        pad = s                                    # Conv1d(padding=stride)
        l_out = (l_in + 2 * pad - k) // s + 1
        l_pool = l_out // 2                        # MaxPool1d(2), floor
        m = ((pad + 7) // 8) * 8                   # 8-aligned data offset in staging buf
        layers.append(dict(k=k, s=s, pad=pad, m=m,
                           c_in=ch[i], c_out=ch[i + 1],
                           l_in=l_in, l_out=l_out, l_pool=l_pool,
                           l_buf=m + l_in + pad))
        l_in = l_pool
    return tuple(layers)


# ----------------------------------------------------------------------------
# Fused Pallas kernel: one batch element per grid step.
# ----------------------------------------------------------------------------
def _fused_forward_kernel(x_ref, w1_ref, b1_ref, w2_ref, b2_ref, w3_ref, b3_ref,
                          fw1_ref, fb1_ref, fw2_ref, fb2_ref, o_ref,
                          xp1_ref, xp2_ref, xp3_ref, *, layers, acts):
    def stage(xp_ref, value, cfg):
        # In-kernel zero padding: clear the staging buffer, drop the input at
        # an 8-aligned offset m (padded sequence logically starts at m - pad).
        xp_ref[...] = jnp.zeros(xp_ref.shape, jnp.float32)
        xp_ref[pl.ds(cfg["m"], cfg["l_in"]), :] = value

    def conv_act_pool(xp_ref, w_ref, b_ref, cfg, act_name):
        k, s, c_in, c_out = cfg["k"], cfg["s"], cfg["c_in"], cfg["c_out"]
        l_pool = cfg["l_pool"]
        base = cfg["m"] - cfg["pad"]
        acc_e = jnp.zeros((l_pool, c_out), jnp.float32)
        acc_o = jnp.zeros((l_pool, c_out), jnp.float32)
        # VPU broadcast-FMA over taps / input channels (no per-tap MXU matmuls).
        # Even / odd conv outputs are accumulated separately so the maxpool
        # becomes a single elementwise max (no scratch round trip).
        for t in range(k):
            xs_e = xp_ref[pl.ds(base + t, l_pool, 2 * s), :]       # (l_pool, c_in)
            xs_o = xp_ref[pl.ds(base + t + s, l_pool, 2 * s), :]
            for ci in range(c_in):
                wrow = w_ref[pl.ds(t * c_in + ci, 1), :]           # (1, c_out)
                acc_e = acc_e + xs_e[:, ci:ci + 1] * wrow
                acc_o = acc_o + xs_o[:, ci:ci + 1] * wrow
        bias = b_ref[...]                                           # (1, c_out)
        fn = _act(act_name)
        return jnp.maximum(fn(acc_e + bias), fn(acc_o + bias))      # (l_pool, c_out)

    cfg1, cfg2, cfg3 = layers

    stage(xp1_ref, x_ref[...], cfg1)
    y1 = conv_act_pool(xp1_ref, w1_ref, b1_ref, cfg1, acts[0])

    stage(xp2_ref, y1, cfg2)
    y2 = conv_act_pool(xp2_ref, w2_ref, b2_ref, cfg2, acts[1])

    stage(xp3_ref, y2, cfg3)
    y3 = conv_act_pool(xp3_ref, w3_ref, b3_ref, cfg3, acts[2])      # (l3p, c3)

    # MLP head.  PyTorch's channel-major flatten is folded into fw1's layout:
    # fw1[c][j, l] == W1[j, c*l3p + l], so fc1 = sum_c fw1[c] @ y3[:, c].
    h = fb1_ref[...]                                                # (hidden, 1)
    for c in range(cfg3["c_out"]):
        h = h + jnp.dot(fw1_ref[c], y3[:, c:c + 1],
                        preferred_element_type=jnp.float32)
    h = jnp.maximum(h, 0.0)                                         # F.relu
    out = jnp.dot(fw2_ref[...], h,
                  preferred_element_type=jnp.float32) + fb2_ref[...]  # (d_out, 1)
    o_ref[...] = out.astype(o_ref.dtype)


# ----------------------------------------------------------------------------
# One-time parameter preparation (hoisted out of the forward).
# ----------------------------------------------------------------------------
def prepare_params(params, config):
    ks, ch, dims = config["kernel_size"], config["channels"], config["linear_dims"]
    p = {}
    for i in range(3):
        w = params[f"conv{i + 1}_w"].astype(jnp.float32)            # (c_out, c_in, k)
        # row (t * c_in + ci) holds w[:, ci, t]  -> shape (k * c_in, c_out)
        p[f"conv{i + 1}_w"] = jnp.transpose(w, (2, 1, 0)).reshape(ks[i] * ch[i], ch[i + 1])
        p[f"conv{i + 1}_b"] = params[f"conv{i + 1}_b"].astype(jnp.float32).reshape(1, ch[i + 1])
    c3 = ch[3]
    l3p = dims[0] // c3
    # fc1: (hidden, c3*l3p) -> (c3, hidden, l3p) so fw1[c][j, l] = W1[j, c*l3p + l]
    p["fc1_w"] = (params["fc1_w"].astype(jnp.float32)
                  .reshape(dims[1], c3, l3p).transpose(1, 0, 2))
    p["fc1_b"] = params["fc1_b"].astype(jnp.float32).reshape(dims[1], 1)
    p["fc2_w"] = params["fc2_w"].astype(jnp.float32)                # (d_out, hidden)
    p["fc2_b"] = params["fc2_b"].astype(jnp.float32).reshape(dims[2], 1)
    return p


# ----------------------------------------------------------------------------
# Forward wrapper: single pallas_call.
# ----------------------------------------------------------------------------
def freq_encoder_forward(x_ncl, prepped, config):
    """Fused Pallas forward.  x_ncl: (N, channels[0], L) like PyTorch Conv1d input."""
    n, c0, l0 = x_ncl.shape
    layers = _layer_geometry(l0, config)
    cfg1, cfg2, cfg3 = layers
    assert cfg3["c_out"] * cfg3["l_pool"] == config["linear_dims"][0], \
        "flattened width != linear_dims[0]"
    d_out = config["linear_dims"][2]
    acts = tuple(a.lower() if isinstance(a, str) else "relu"
                 for a in config["activations"])

    x_nlc = jnp.transpose(x_ncl, (0, 2, 1)).astype(jnp.float32)     # NCL -> NLC, once

    kern = functools.partial(_fused_forward_kernel, layers=layers, acts=acts)
    out = pl.pallas_call(
        kern,
        out_shape=jax.ShapeDtypeStruct((n, d_out, 1), jnp.float32),
        grid=(n,),
        in_specs=[
            pl.BlockSpec((None, l0, c0), lambda i: (i, 0, 0)),
            pl.BlockSpec(prepped["conv1_w"].shape, lambda i: (0, 0)),
            pl.BlockSpec(prepped["conv1_b"].shape, lambda i: (0, 0)),
            pl.BlockSpec(prepped["conv2_w"].shape, lambda i: (0, 0)),
            pl.BlockSpec(prepped["conv2_b"].shape, lambda i: (0, 0)),
            pl.BlockSpec(prepped["conv3_w"].shape, lambda i: (0, 0)),
            pl.BlockSpec(prepped["conv3_b"].shape, lambda i: (0, 0)),
            pl.BlockSpec(prepped["fc1_w"].shape, lambda i: (0, 0, 0)),
            pl.BlockSpec(prepped["fc1_b"].shape, lambda i: (0, 0)),
            pl.BlockSpec(prepped["fc2_w"].shape, lambda i: (0, 0)),
            pl.BlockSpec(prepped["fc2_b"].shape, lambda i: (0, 0)),
        ],
        out_specs=pl.BlockSpec((None, d_out, 1), lambda i: (i, 0, 0)),
        scratch_shapes=[
            pltpu.VMEM((cfg1["l_buf"], cfg1["c_in"]), jnp.float32),
            pltpu.VMEM((cfg2["l_buf"], cfg2["c_in"]), jnp.float32),
            pltpu.VMEM((cfg3["l_buf"], cfg3["c_in"]), jnp.float32),
        ],
        compiler_params=pltpu.CompilerParams(dimension_semantics=("parallel",)),
    )(x_nlc,
      prepped["conv1_w"], prepped["conv1_b"],
      prepped["conv2_w"], prepped["conv2_b"],
      prepped["conv3_w"], prepped["conv3_b"],
      prepped["fc1_w"], prepped["fc1_b"],
      prepped["fc2_w"], prepped["fc2_b"])
    return out.reshape(n, d_out)


# ----------------------------------------------------------------------------
# Pure-JAX reference (mirrors the PyTorch forward exactly)
# ----------------------------------------------------------------------------
def reference_forward(x_ncl, params, config):
    x = x_ncl.astype(jnp.float32)
    for i in range(3):
        w = params[f"conv{i + 1}_w"].astype(jnp.float32)
        b = params[f"conv{i + 1}_b"].astype(jnp.float32)
        s = config["stride"][i]
        x = lax.conv_general_dilated(
            x, w, window_strides=(s,), padding=[(s, s)],
            dimension_numbers=("NCH", "OIH", "NCH"))
        x = x + b[None, :, None]
        x = _act(config["activations"][i])(x)
        n_, c_, l_ = x.shape
        x = x[..., : 2 * (l_ // 2)].reshape(n_, c_, l_ // 2, 2).max(axis=-1)
    x = x.reshape(x.shape[0], -1)
    x = jnp.maximum(x @ params["fc1_w"].T + params["fc1_b"], 0.0)
    x = x @ params["fc2_w"].T + params["fc2_b"]
    return x


# ----------------------------------------------------------------------------
if __name__ == "__main__":
    config = dict(
        kernel_size=[8, 4, 4],
        stride=[4, 2, 2],
        channels=[1, 2, 3, 4],
        activations=["relu", "relu", "relu"],
        linear_dims=[32, 8, 2],
    )
    c = config["channels"]
    k = config["kernel_size"]
    d = config["linear_dims"]

    key = jax.random.PRNGKey(0)
    keys = jax.random.split(key, 11)
    params = {
        "conv1_w": 0.1 * jax.random.normal(keys[0], (c[1], c[0], k[0]), jnp.float32),
        "conv1_b": 0.1 * jax.random.normal(keys[1], (c[1],), jnp.float32),
        "conv2_w": 0.1 * jax.random.normal(keys[2], (c[2], c[1], k[1]), jnp.float32),
        "conv2_b": 0.1 * jax.random.normal(keys[3], (c[2],), jnp.float32),
        "conv3_w": 0.1 * jax.random.normal(keys[4], (c[3], c[2], k[2]), jnp.float32),
        "conv3_b": 0.1 * jax.random.normal(keys[5], (c[3],), jnp.float32),
        "fc1_w": 0.1 * jax.random.normal(keys[6], (d[1], d[0]), jnp.float32),
        "fc1_b": 0.1 * jax.random.normal(keys[7], (d[1],), jnp.float32),
        "fc2_w": 0.1 * jax.random.normal(keys[8], (d[2], d[1]), jnp.float32),
        "fc2_b": 0.1 * jax.random.normal(keys[9], (d[2],), jnp.float32),
    }

    # L chosen so the flattened feature width == linear_dims[0] == 32:
    # 940 -conv1-> 236 -pool-> 118 -conv2-> 60 -pool-> 30 -conv3-> 16 -pool-> 8; 8*4ch = 32.
    batch, length = 2, 940
    x = jax.random.normal(keys[10], (batch, c[0], length), jnp.float32)

    prepped = prepare_params(params, config)          # one-time weight re-layout
    fwd = jax.jit(lambda xx, pp: freq_encoder_forward(xx, pp, config))

    out = jax.block_until_ready(fwd(x, prepped))
    ref = reference_forward(x, params, config)

    assert out.shape == (batch, d[2]), out.shape
    max_err = float(jnp.max(jnp.abs(out - ref)))
    assert max_err < 1e-4, f"mismatch vs reference: {max_err}"
    print("KERNEL_OK")
</pallas_src>

<mosaic_0001>
module attributes {stable_mosaic.version = 11 : i64} {
  func.func @_fused_forward_kernel(%arg0: i32, %arg1: memref<1x940x1xf32, #tpu.memory_space<vmem>>, %arg2: memref<8x2xf32, #tpu.memory_space<vmem>>, %arg3: memref<1x2xf32, #tpu.memory_space<vmem>>, %arg4: memref<8x3xf32, #tpu.memory_space<vmem>>, %arg5: memref<1x3xf32, #tpu.memory_space<vmem>>, %arg6: memref<12x4xf32, #tpu.memory_space<vmem>>, %arg7: memref<1x4xf32, #tpu.memory_space<vmem>>, %arg8: memref<4x8x8xf32, #tpu.memory_space<vmem>>, %arg9: memref<8x1xf32, #tpu.memory_space<vmem>>, %arg10: memref<2x8xf32, #tpu.memory_space<vmem>>, %arg11: memref<2x1xf32, #tpu.memory_space<vmem>>, %arg12: memref<1x2x1xf32, #tpu.memory_space<vmem>>, %arg13: memref<952x1xf32, #tpu.memory_space<vmem>>, %arg14: memref<128x2xf32, #tpu.memory_space<vmem>>, %arg15: memref<40x3xf32, #tpu.memory_space<vmem>>) attributes {dimension_semantics = [#tpu.dimension_semantics<parallel>], iteration_bounds = array<i64: 2>, scalar_prefetch = 0 : i64, scratch_operands = 3 : i64, tpu.core_type = #tpu.core_type<tc>, window_params = [{transform_indices = @transform_0, window_bounds = array<i64: 1, 940, 1>}, {pipeline_mode = #tpu.pipeline_mode<synchronous>, transform_indices = @transform_1, window_bounds = array<i64: 8, 2>}, {pipeline_mode = #tpu.pipeline_mode<synchronous>, transform_indices = @transform_2, window_bounds = array<i64: 1, 2>}, {pipeline_mode = #tpu.pipeline_mode<synchronous>, transform_indices = @transform_3, window_bounds = array<i64: 8, 3>}, {pipeline_mode = #tpu.pipeline_mode<synchronous>, transform_indices = @transform_4, window_bounds = array<i64: 1, 3>}, {pipeline_mode = #tpu.pipeline_mode<synchronous>, transform_indices = @transform_5, window_bounds = array<i64: 12, 4>}, {pipeline_mode = #tpu.pipeline_mode<synchronous>, transform_indices = @transform_6, window_bounds = array<i64: 1, 4>}, {pipeline_mode = #tpu.pipeline_mode<synchronous>, transform_indices = @transform_7, window_bounds = array<i64: 4, 8, 8>}, {pipeline_mode = #tpu.pipeline_mode<synchronous>, transform_indices = @transform_8, window_bounds = array<i64: 8, 1>}, {pipeline_mode = #tpu.pipeline_mode<synchronous>, transform_indices = @transform_9, window_bounds = array<i64: 2, 8>}, {pipeline_mode = #tpu.pipeline_mode<synchronous>, transform_indices = @transform_10, window_bounds = array<i64: 2, 1>}, {transform_indices = @transform_11, window_bounds = array<i64: 1, 2, 1>}]} {
    %c0 = arith.constant 0 : index
    %c0_0 = arith.constant 0 : index
    %c0_1 = arith.constant 0 : index
    %0 = vector.load %arg1[%c0, %c0_0, %c0_1] : memref<1x940x1xf32, #tpu.memory_space<vmem>>, vector<1x940x1xf32>
    %1 = vector.shape_cast %0 : vector<1x940x1xf32> to vector<940x1xf32>
    %cst = arith.constant 0.000000e+00 : f32
    %2 = vector.broadcast %cst : f32 to vector<952x1xf32>
    %c0_2 = arith.constant 0 : index
    %c0_3 = arith.constant 0 : index
    %3 = vector.load %arg13[%c0_2, %c0_3] : memref<952x1xf32, #tpu.memory_space<vmem>>, vector<952x1xf32>
    tpu.vector_store %arg13[%c0_2, %c0_3], %2 {strides = array<i32>} : memref<952x1xf32, #tpu.memory_space<vmem>>, vector<952x1xf32>,
    %c8 = arith.constant 8 : index
    %c0_4 = arith.constant 0 : index
    %4 = vector.load %arg13[%c8, %c0_4] : memref<952x1xf32, #tpu.memory_space<vmem>>, vector<940x1xf32>
    tpu.vector_store %arg13[%c8, %c0_4], %1 {strides = array<i32>} : memref<952x1xf32, #tpu.memory_space<vmem>>, vector<940x1xf32>,
    %cst_5 = arith.constant 0.000000e+00 : f32
    %5 = vector.broadcast %cst_5 : f32 to vector<118x2xf32>
    %cst_6 = arith.constant 0.000000e+00 : f32
    %6 = vector.broadcast %cst_6 : f32 to vector<118x2xf32>
    %c4 = arith.constant 4 : index
    %c0_7 = arith.constant 0 : index
    %7 = tpu.strided_load %arg13[%c4, %c0_7] {strides = array<i32: 8, 1>} : memref<952x1xf32, #tpu.memory_space<vmem>>, vector<118x1xf32>
    %c8_8 = arith.constant 8 : index
    %c0_9 = arith.constant 0 : index
    %8 = tpu.strided_load %arg13[%c8_8, %c0_9] {strides = array<i32: 8, 1>} : memref<952x1xf32, #tpu.memory_space<vmem>>, vector<118x1xf32>
    %c0_10 = arith.constant 0 : index
    %c0_11 = arith.constant 0 : index
    %9 = vector.load %arg2[%c0_10, %c0_11] : memref<8x2xf32, #tpu.memory_space<vmem>>, vector<1x2xf32>
    %10 = vector.broadcast %7 : vector<118x1xf32> to vector<118x2xf32>
    %11 = vector.broadcast %9 : vector<1x2xf32> to vector<118x2xf32>
    %12 = arith.mulf %10, %11 : vector<118x2xf32>
    %13 = arith.addf %5, %12 : vector<118x2xf32>
    %14 = vector.broadcast %8 : vector<118x1xf32> to vector<118x2xf32>
    %15 = vector.broadcast %9 : vector<1x2xf32> to vector<118x2xf32>
    %16 = arith.mulf %14, %15 : vector<118x2xf32>
    %17 = arith.addf %6, %16 : vector<118x2xf32>
    %c5 = arith.constant 5 : index
    %c0_12 = arith.constant 0 : index
    %18 = tpu.strided_load %arg13[%c5, %c0_12] {strides = array<i32: 8, 1>} : memref<952x1xf32, #tpu.memory_space<vmem>>, vector<118x1xf32>
    %c9 = arith.constant 9 : index
    %c0_13 = arith.constant 0 : index
    %19 = tpu.strided_load %arg13[%c9, %c0_13] {strides = array<i32: 8, 1>} : memref<952x1xf32, #tpu.memory_space<vmem>>, vector<118x1xf32>
    %c1 = arith.constant 1 : index
    %c0_14 = arith.constant 0 : index
    %20 = vector.load %arg2[%c1, %c0_14] : memref<8x2xf32, #tpu.memory_space<vmem>>, vector<1x2xf32>
    %21 = vector.broadcast %18 : vector<118x1xf32> to vector<118x2xf32>
    %22 = vector.broadcast %20 : vector<1x2xf32> to vector<118x2xf32>
    %23 = arith.mulf %21, %22 : vector<118x2xf32>
    %24 = arith.addf %13, %23 : vector<118x2xf32>
    %25 = vector.broadcast %19 : vector<118x1xf32> to vector<118x2xf32>
    %26 = vector.broadcast %20 : vector<1x2xf32> to vector<118x2xf32>
    %27 = arith.mulf %25, %26 : vector<118x2xf32>
    %28 = arith.addf %17, %27 : vector<118x2xf32>
    %c6 = arith.constant 6 : index
    %c0_15 = arith.constant 0 : index
    %29 = tpu.strided_load %arg13[%c6, %c0_15] {strides = array<i32: 8, 1>} : memref<952x1xf32, #tpu.memory_space<vmem>>, vector<118x1xf32>
    %c10 = arith.constant 10 : index
    %c0_16 = arith.constant 0 : index
    %30 = tpu.strided_load %arg13[%c10, %c0_16] {strides = array<i32: 8, 1>} : memref<952x1xf32, #tpu.memory_space<vmem>>, vector<118x1xf32>
    %c2 = arith.constant 2 : index
    %c0_17 = arith.constant 0 : index
    %31 = vector.load %arg2[%c2, %c0_17] : memref<8x2xf32, #tpu.memory_space<vmem>>, vector<1x2xf32>
    %32 = vector.broadcast %29 : vector<118x1xf32> to vector<118x2xf32>
    %33 = vector.broadcast %31 : vector<1x2xf32> to vector<118x2xf32>
    %34 = arith.mulf %32, %33 : vector<118x2xf32>
    %35 = arith.addf %24, %34 : vector<118x2xf32>
    %36 = vector.broadcast %30 : vector<118x1xf32> to vector<118x2xf32>
    %37 = vector.broadcast %31 : vector<1x2xf32> to vector<118x2xf32>
    %38 = arith.mulf %36, %37 : vector<118x2xf32>
    %39 = arith.addf %28, %38 : vector<118x2xf32>
    %c7 = arith.constant 7 : index
    %c0_18 = arith.constant 0 : index
    %40 = tpu.strided_load %arg13[%c7, %c0_18] {strides = array<i32: 8, 1>} : memref<952x1xf32, #tpu.memory_space<vmem>>, vector<118x1xf32>
    %c11 = arith.constant 11 : index
    %c0_19 = arith.constant 0 : index
    %41 = tpu.strided_load %arg13[%c11, %c0_19] {strides = array<i32: 8, 1>} : memref<952x1xf32, #tpu.memory_space<vmem>>, vector<118x1xf32>
    %c3 = arith.constant 3 : index
    %c0_20 = arith.constant 0 : index
    %42 = vector.load %arg2[%c3, %c0_20] : memref<8x2xf32, #tpu.memory_space<vmem>>, vector<1x2xf32>
    %43 = vector.broadcast %40 : vector<118x1xf32> to vector<118x2xf32>
    %44 = vector.broadcast %42 : vector<1x2xf32> to vector<118x2xf32>
    %45 = arith.mulf %43, %44 : vector<118x2xf32>
    %46 = arith.addf %35, %45 : vector<118x2xf32>
    %47 = vector.broadcast %41 : vector<118x1xf32> to vector<118x2xf32>
    %48 = vector.broadcast %42 : vector<1x2xf32> to vector<118x2xf32>
    %49 = arith.mulf %47, %48 : vector<118x2xf32>
    %50 = arith.addf %39, %49 : vector<118x2xf32>
    %c8_21 = arith.constant 8 : index
    %c0_22 = arith.constant 0 : index
    %51 = tpu.strided_load %arg13[%c8_21, %c0_22] {strides = array<i32: 8, 1>} : memref<952x1xf32, #tpu.memory_space<vmem>>, vector<118x1xf32>
    %c12 = arith.constant 12 : index
    %c0_23 = arith.constant 0 : index
    %52 = tpu.strided_load %arg13[%c12, %c0_23] {strides = array<i32: 8, 1>} : memref<952x1xf32, #tpu.memory_space<vmem>>, vector<118x1xf32>
    %c4_24 = arith.constant 4 : index
    %c0_25 = arith.constant 0 : index
    %53 = vector.load %arg2[%c4_24, %c0_25] : memref<8x2xf32, #tpu.memory_space<vmem>>, vector<1x2xf32>
    %54 = vector.broadcast %51 : vector<118x1xf32> to vector<118x2xf32>
    %55 = vector.broadcast %53 : vector<1x2xf32> to vector<118x2xf32>
    %56 = arith.mulf %54, %55 : vector<118x2xf32>
    %57 = arith.addf %46, %56 : vector<118x2xf32>
    %58 = vector.broadcast %52 : vector<118x1xf32> to vector<118x2xf32>
    %59 = vector.broadcast %53 : vector<1x2xf32> to vector<118x2xf32>
    %60 = arith.mulf %58, %59 : vector<118x2xf32>
    %61 = arith.addf %50, %60 : vector<118x2xf32>
    %c9_26 = arith.constant 9 : index
    %c0_27 = arith.constant 0 : index
    %62 = tpu.strided_load %arg13[%c9_26, %c0_27] {strides = array<i32: 8, 1>} : memref<952x1xf32, #tpu.memory_space<vmem>>, vector<118x1xf32>
    %c13 = arith.constant 13 : index
    %c0_28 = arith.constant 0 : index
    %63 = tpu.strided_load %arg13[%c13, %c0_28] {strides = array<i32: 8, 1>} : memref<952x1xf32, #tpu.memory_space<vmem>>, vector<118x1xf32>
    %c5_29 = arith.constant 5 : index
    %c0_30 = arith.constant 0 : index
    %64 = vector.load %arg2[%c5_29, %c0_30] : memref<8x2xf32, #tpu.memory_space<vmem>>, vector<1x2xf32>
    %65 = vector.broadcast %62 : vector<118x1xf32> to vector<118x2xf32>
    %66 = vector.broadcast %64 : vector<1x2xf32> to vector<118x2xf32>
    %67 = arith.mulf %65, %66 : vector<118x2xf32>
    %68 = arith.addf %57, %67 : vector<118x2xf32>
    %69 = vector.broadcast %63 : vector<118x1xf32> to vector<118x2xf32>
    %70 = vector.broadcast %64 : vector<1x2xf32> to vector<118x2xf32>
    %71 = arith.mulf %69, %70 : vector<118x2xf32>
    %72 = arith.addf %61, %71 : vector<118x2xf32>
    %c10_31 = arith.constant 10 : index
    %c0_32 = arith.constant 0 : index
    %73 = tpu.strided_load %arg13[%c10_31, %c0_32] {strides = array<i32: 8, 1>} : memref<952x1xf32, #tpu.memory_space<vmem>>, vector<118x1xf32>
    %c14 = arith.constant 14 : index
    %c0_33 = arith.constant 0 : index
    %74 = tpu.strided_load %arg13[%c14, %c0_33] {strides = array<i32: 8, 1>} : memref<952x1xf32, #tpu.memory_space<vmem>>, vector<118x1xf32>
    %c6_34 = arith.constant 6 : index
    %c0_35 = arith.constant 0 : index
    %75 = vector.load %arg2[%c6_34, %c0_35] : memref<8x2xf32, #tpu.memory_space<vmem>>, vector<1x2xf32>
    %76 = vector.broadcast %73 : vector<118x1xf32> to vector<118x2xf32>
    %77 = vector.broadcast %75 : vector<1x2xf32> to vector<118x2xf32>
    %78 = arith.mulf %76, %77 : vector<118x2xf32>
    %79 = arith.addf %68, %78 : vector<118x2xf32>
    %80 = vector.broadcast %74 : vector<118x1xf32> to vector<118x2xf32>
    %81 = vector.broadcast %75 : vector<1x2xf32> to vector<118x2xf32>
    %82 = arith.mulf %80, %81 : vector<118x2xf32>
    %83 = arith.addf %72, %82 : vector<118x2xf32>
    %c11_36 = arith.constant 11 : index
    %c0_37 = arith.constant 0 : index
    %84 = tpu.strided_load %arg13[%c11_36, %c0_37] {strides = array<i32: 8, 1>} : memref<952x1xf32, #tpu.memory_space<vmem>>, vector<118x1xf32>
    %c15 = arith.constant 15 : index
    %c0_38 = arith.constant 0 : index
    %85 = tpu.strided_load %arg13[%c15, %c0_38] {strides = array<i32: 8, 1>} : memref<952x1xf32, #tpu.memory_space<vmem>>, vector<118x1xf32>
    %c7_39 = arith.constant 7 : index
    %c0_40 = arith.constant 0 : index
    %86 = vector.load %arg2[%c7_39, %c0_40] : memref<8x2xf32, #tpu.memory_space<vmem>>, vector<1x2xf32>
    %87 = vector.broadcast %84 : vector<118x1xf32> to vector<118x2xf32>
    %88 = vector.broadcast %86 : vector<1x2xf32> to vector<118x2xf32>
    %89 = arith.mulf %87, %88 : vector<118x2xf32>
    %90 = arith.addf %79, %89 : vector<118x2xf32>
    %91 = vector.broadcast %85 : vector<118x1xf32> to vector<118x2xf32>
    %92 = vector.broadcast %86 : vector<1x2xf32> to vector<118x2xf32>
    %93 = arith.mulf %91, %92 : vector<118x2xf32>
    %94 = arith.addf %83, %93 : vector<118x2xf32>
    %c0_41 = arith.constant 0 : index
    %c0_42 = arith.constant 0 : index
    %95 = vector.load %arg3[%c0_41, %c0_42] : memref<1x2xf32, #tpu.memory_space<vmem>>, vector<1x2xf32>
    %96 = vector.broadcast %95 : vector<1x2xf32> to vector<118x2xf32>
    %97 = arith.addf %90, %96 : vector<118x2xf32>
    %cst_43 = arith.constant 0.000000e+00 : f32
    %98 = vector.broadcast %cst_43 : f32 to vector<118x2xf32>
    %99 = arith.maximumf %97, %98 : vector<118x2xf32>
    %100 = vector.broadcast %95 : vector<1x2xf32> to vector<118x2xf32>
    %101 = arith.addf %94, %100 : vector<118x2xf32>
    %cst_44 = arith.constant 0.000000e+00 : f32
    %102 = vector.broadcast %cst_44 : f32 to vector<118x2xf32>
    %103 = arith.maximumf %101, %102 : vector<118x2xf32>
    %104 = arith.maximumf %99, %103 : vector<118x2xf32>
    %cst_45 = arith.constant 0.000000e+00 : f32
    %105 = vector.broadcast %cst_45 : f32 to vector<128x2xf32>
    %c0_46 = arith.constant 0 : index
    %c0_47 = arith.constant 0 : index
    %106 = vector.load %arg14[%c0_46, %c0_47] : memref<128x2xf32, #tpu.memory_space<vmem>>, vector<128x2xf32>
    tpu.vector_store %arg14[%c0_46, %c0_47], %105 {strides = array<i32>} : memref<128x2xf32, #tpu.memory_space<vmem>>, vector<128x2xf32>,
    %c8_48 = arith.constant 8 : index
    %c0_49 = arith.constant 0 : index
    %107 = vector.load %arg14[%c8_48, %c0_49] : memref<128x2xf32, #tpu.memory_space<vmem>>, vector<118x2xf32>
    tpu.vector_store %arg14[%c8_48, %c0_49], %104 {strides = array<i32>} : memref<128x2xf32, #tpu.memory_space<vmem>>, vector<118x2xf32>,
    %cst_50 = arith.constant 0.000000e+00 : f32
    %108 = vector.broadcast %cst_50 : f32 to vector<30x3xf32>
    %cst_51 = arith.constant 0.000000e+00 : f32
    %109 = vector.broadcast %cst_51 : f32 to vector<30x3xf32>
    %c6_52 = arith.constant 6 : index
    %c0_53 = arith.constant 0 : index
    %110 = tpu.strided_load %arg14[%c6_52, %c0_53] {strides = array<i32: 4, 1>} : memref<128x2xf32, #tpu.memory_space<vmem>>, vector<30x2xf32>
    %c8_54 = arith.constant 8 : index
    %c0_55 = arith.constant 0 : index
    %111 = tpu.strided_load %arg14[%c8_54, %c0_55] {strides = array<i32: 4, 1>} : memref<128x2xf32, #tpu.memory_space<vmem>>, vector<30x2xf32>
    %c0_56 = arith.constant 0 : index
    %c0_57 = arith.constant 0 : index
    %112 = vector.load %arg4[%c0_56, %c0_57] : memref<8x3xf32, #tpu.memory_space<vmem>>, vector<1x3xf32>
    %113 = vector.extract_strided_slice %110 {offsets = [0, 0], sizes = [30, 1], strides = [1, 1]} : vector<30x2xf32> to vector<30x1xf32>
    %114 = vector.broadcast %113 : vector<30x1xf32> to vector<30x3xf32>
    %115 = vector.broadcast %112 : vector<1x3xf32> to vector<30x3xf32>
    %116 = arith.mulf %114, %115 : vector<30x3xf32>
    %117 = arith.addf %108, %116 : vector<30x3xf32>
    %118 = vector.extract_strided_slice %111 {offsets = [0, 0], sizes = [30, 1], strides = [1, 1]} : vector<30x2xf32> to vector<30x1xf32>
    %119 = vector.broadcast %118 : vector<30x1xf32> to vector<30x3xf32>
    %120 = vector.broadcast %112 : vector<1x3xf32> to vector<30x3xf32>
    %121 = arith.mulf %119, %120 : vector<30x3xf32>
    %122 = arith.addf %109, %121 : vector<30x3xf32>
    %c1_58 = arith.constant 1 : index
    %c0_59 = arith.constant 0 : index
    %123 = vector.load %arg4[%c1_58, %c0_59] : memref<8x3xf32, #tpu.memory_space<vmem>>, vector<1x3xf32>
    %124 = vector.extract_strided_slice %110 {offsets = [0, 1], sizes = [30, 1], strides = [1, 1]} : vector<30x2xf32> to vector<30x1xf32>
    %125 = vector.broadcast %124 : vector<30x1xf32> to vector<30x3xf32>
    %126 = vector.broadcast %123 : vector<1x3xf32> to vector<30x3xf32>
    %127 = arith.mulf %125, %126 : vector<30x3xf32>
    %128 = arith.addf %117, %127 : vector<30x3xf32>
    %129 = vector.extract_strided_slice %111 {offsets = [0, 1], sizes = [30, 1], strides = [1, 1]} : vector<30x2xf32> to vector<30x1xf32>
    %130 = vector.broadcast %129 : vector<30x1xf32> to vector<30x3xf32>
    %131 = vector.broadcast %123 : vector<1x3xf32> to vector<30x3xf32>
    %132 = arith.mulf %130, %131 : vector<30x3xf32>
    %133 = arith.addf %122, %132 : vector<30x3xf32>
    %c7_60 = arith.constant 7 : index
    %c0_61 = arith.constant 0 : index
    %134 = tpu.strided_load %arg14[%c7_60, %c0_61] {strides = array<i32: 4, 1>} : memref<128x2xf32, #tpu.memory_space<vmem>>, vector<30x2xf32>
    %c9_62 = arith.constant 9 : index
    %c0_63 = arith.constant 0 : index
    %135 = tpu.strided_load %arg14[%c9_62, %c0_63] {strides = array<i32: 4, 1>} : memref<128x2xf32, #tpu.memory_space<vmem>>, vector<30x2xf32>
    %c2_64 = arith.constant 2 : index
    %c0_65 = arith.constant 0 : index
    %136 = vector.load %arg4[%c2_64, %c0_65] : memref<8x3xf32, #tpu.memory_space<vmem>>, vector<1x3xf32>
    %137 = vector.extract_strided_slice %134 {offsets = [0, 0], sizes = [30, 1], strides = [1, 1]} : vector<30x2xf32> to vector<30x1xf32>
    %138 = vector.broadcast %137 : vector<30x1xf32> to vector<30x3xf32>
    %139 = vector.broadcast %136 : vector<1x3xf32> to vector<30x3xf32>
    %140 = arith.mulf %138, %139 : vector<30x3xf32>
    %141 = arith.addf %128, %140 : vector<30x3xf32>
    %142 = vector.extract_strided_slice %135 {offsets = [0, 0], sizes = [30, 1], strides = [1, 1]} : vector<30x2xf32> to vector<30x1xf32>
    %143 = vector.broadcast %142 : vector<30x1xf32> to vector<30x3xf32>
    %144 = vector.broadcast %136 : vector<1x3xf32> to vector<30x3xf32>
    %145 = arith.mulf %143, %144 : vector<30x3xf32>
    %146 = arith.addf %133, %145 : vector<30x3xf32>
    %c3_66 = arith.constant 3 : index
    %c0_67 = arith.constant 0 : index
    %147 = vector.load %arg4[%c3_66, %c0_67] : memref<8x3xf32, #tpu.memory_space<vmem>>, vector<1x3xf32>
    %148 = vector.extract_strided_slice %134 {offsets = [0, 1], sizes = [30, 1], strides = [1, 1]} : vector<30x2xf32> to vector<30x1xf32>
    %149 = vector.broadcast %148 : vector<30x1xf32> to vector<30x3xf32>
    %150 = vector.broadcast %147 : vector<1x3xf32> to vector<30x3xf32>
    %151 = arith.mulf %149, %150 : vector<30x3xf32>
    %152 = arith.addf %141, %151 : vector<30x3xf32>
    %153 = vector.extract_strided_slice %135 {offsets = [0, 1], sizes = [30, 1], strides = [1, 1]} : vector<30x2xf32> to vector<30x1xf32>
    %154 = vector.broadcast %153 : vector<30x1xf32> to vector<30x3xf32>
    %155 = vector.broadcast %147 : vector<1x3xf32> to vector<30x3xf32>
    %156 = arith.mulf %154, %155 : vector<30x3xf32>
    %157 = arith.addf %146, %156 : vector<30x3xf32>
    %c8_68 = arith.constant 8 : index
    %c0_69 = arith.constant 0 : index
    %158 = tpu.strided_load %arg14[%c8_68, %c0_69] {strides = array<i32: 4, 1>} : memref<128x2xf32, #tpu.memory_space<vmem>>, vector<30x2xf32>
    %c10_70 = arith.constant 10 : index
    %c0_71 = arith.constant 0 : index
    %159 = tpu.strided_load %arg14[%c10_70, %c0_71] {strides = array<i32: 4, 1>} : memref<128x2xf32, #tpu.memory_space<vmem>>, vector<30x2xf32>
    %c4_72 = arith.constant 4 : index
    %c0_73 = arith.constant 0 : index
    %160 = vector.load %arg4[%c4_72, %c0_73] : memref<8x3xf32, #tpu.memory_space<vmem>>, vector<1x3xf32>
    %161 = vector.extract_strided_slice %158 {offsets = [0, 0], sizes = [30, 1], strides = [1, 1]} : vector<30x2xf32> to vector<30x1xf32>
    %162 = vector.broadcast %161 : vector<30x1xf32> to vector<30x3xf32>
    %163 = vector.broadcast %160 : vector<1x3xf32> to vector<30x3xf32>
    %164 = arith.mulf %162, %163 : vector<30x3xf32>
    %165 = arith.addf %152, %164 : vector<30x3xf32>
    %166 = vector.extract_strided_slice %159 {offsets = [0, 0], sizes = [30, 1], strides = [1, 1]} : vector<30x2xf32> to vector<30x1xf32>
    %167 = vector.broadcast %166 : vector<30x1xf32> to vector<30x3xf32>
    %168 = vector.broadcast %160 : vector<1x3xf32> to vector<30x3xf32>
    %169 = arith.mulf %167, %168 : vector<30x3xf32>
    %170 = arith.addf %157, %169 : vector<30x3xf32>
    %c5_74 = arith.constant 5 : index
    %c0_75 = arith.constant 0 : index
    %171 = vector.load %arg4[%c5_74, %c0_75] : memref<8x3xf32, #tpu.memory_space<vmem>>, vector<1x3xf32>
    %172 = vector.extract_strided_slice %158 {offsets = [0, 1], sizes = [30, 1], strides = [1, 1]} : vector<30x2xf32> to vector<30x1xf32>
    %173 = vector.broadcast %172 : vector<30x1xf32> to vector<30x3xf32>
    %174 = vector.broadcast %171 : vector<1x3xf32> to vector<30x3xf32>
    %175 = arith.mulf %173, %174 : vector<30x3xf32>
    %176 = arith.addf %165, %175 : vector<30x3xf32>
    %177 = vector.extract_strided_slice %159 {offsets = [0, 1], sizes = [30, 1], strides = [1, 1]} : vector<30x2xf32> to vector<30x1xf32>
    %178 = vector.broadcast %177 : vector<30x1xf32> to vector<30x3xf32>
    %179 = vector.broadcast %171 : vector<1x3xf32> to vector<30x3xf32>
    %180 = arith.mulf %178, %179 : vector<30x3xf32>
    %181 = arith.addf %170, %180 : vector<30x3xf32>
    %c9_76 = arith.constant 9 : index
    %c0_77 = arith.constant 0 : index
    %182 = tpu.strided_load %arg14[%c9_76, %c0_77] {strides = array<i32: 4, 1>} : memref<128x2xf32, #tpu.memory_space<vmem>>, vector<30x2xf32>
    %c11_78 = arith.constant 11 : index
    %c0_79 = arith.constant 0 : index
    %183 = tpu.strided_load %arg14[%c11_78, %c0_79] {strides = array<i32: 4, 1>} : memref<128x2xf32, #tpu.memory_space<vmem>>, vector<30x2xf32>
    %c6_80 = arith.constant 6 : index
    %c0_81 = arith.constant 0 : index
    %184 = vector.load %arg4[%c6_80, %c0_81] : memref<8x3xf32, #tpu.memory_space<vmem>>, vector<1x3xf32>
    %185 = vector.extract_strided_slice %182 {offsets = [0, 0], sizes = [30, 1], strides = [1, 1]} : vector<30x2xf32> to vector<30x1xf32>
    %186 = vector.broadcast %185 : vector<30x1xf32> to vector<30x3xf32>
    %187 = vector.broadcast %184 : vector<1x3xf32> to vector<30x3xf32>
    %188 = arith.mulf %186, %187 : vector<30x3xf32>
    %189 = arith.addf %176, %188 : vector<30x3xf32>
    %190 = vector.extract_strided_slice %183 {offsets = [0, 0], sizes = [30, 1], strides = [1, 1]} : vector<30x2xf32> to vector<30x1xf32>
    %191 = vector.broadcast %190 : vector<30x1xf32> to vector<30x3xf32>
    %192 = vector.broadcast %184 : vector<1x3xf32> to vector<30x3xf32>
    %193 = arith.mulf %191, %192 : vector<30x3xf32>
    %194 = arith.addf %181, %193 : vector<30x3xf32>
    %c7_82 = arith.constant 7 : index
    %c0_83 = arith.constant 0 : index
    %195 = vector.load %arg4[%c7_82, %c0_83] : memref<8x3xf32, #tpu.memory_space<vmem>>, vector<1x3xf32>
    %196 = vector.extract_strided_slice %182 {offsets = [0, 1], sizes = [30, 1], strides = [1, 1]} : vector<30x2xf32> to vector<30x1xf32>
    %197 = vector.broadcast %196 : vector<30x1xf32> to vector<30x3xf32>
    %198 = vector.broadcast %195 : vector<1x3xf32> to vector<30x3xf32>
    %199 = arith.mulf %197, %198 : vector<30x3xf32>
    %200 = arith.addf %189, %199 : vector<30x3xf32>
    %201 = vector.extract_strided_slice %183 {offsets = [0, 1], sizes = [30, 1], strides = [1, 1]} : vector<30x2xf32> to vector<30x1xf32>
    %202 = vector.broadcast %201 : vector<30x1xf32> to vector<30x3xf32>
    %203 = vector.broadcast %195 : vector<1x3xf32> to vector<30x3xf32>
    %204 = arith.mulf %202, %203 : vector<30x3xf32>
    %205 = arith.addf %194, %204 : vector<30x3xf32>
    %c0_84 = arith.constant 0 : index
    %c0_85 = arith.constant 0 : index
    %206 = vector.load %arg5[%c0_84, %c0_85] : memref<1x3xf32, #tpu.memory_space<vmem>>, vector<1x3xf32>
    %207 = vector.broadcast %206 : vector<1x3xf32> to vector<30x3xf32>
    %208 = arith.addf %200, %207 : vector<30x3xf32>
    %cst_86 = arith.constant 0.000000e+00 : f32
    %209 = vector.broadcast %cst_86 : f32 to vector<30x3xf32>
    %210 = arith.maximumf %208, %209 : vector<30x3xf32>
    %211 = vector.broadcast %206 : vector<1x3xf32> to vector<30x3xf32>
    %212 = arith.addf %205, %211 : vector<30x3xf32>
    %cst_87 = arith.constant 0.000000e+00 : f32
    %213 = vector.broadcast %cst_87 : f32 to vector<30x3xf32>
    %214 = arith.maximumf %212, %213 : vector<30x3xf32>
    %215 = arith.maximumf %210, %214 : vector<30x3xf32>
    %cst_88 = arith.constant 0.000000e+00 : f32
    %216 = vector.broadcast %cst_88 : f32 to vector<40x3xf32>
    %c0_89 = arith.constant 0 : index
    %c0_90 = arith.constant 0 : index
    %217 = vector.load %arg15[%c0_89, %c0_90] : memref<40x3xf32, #tpu.memory_space<vmem>>, vector<40x3xf32>
    tpu.vector_store %arg15[%c0_89, %c0_90], %216 {strides = array<i32>} : memref<40x3xf32, #tpu.memory_space<vmem>>, vector<40x3xf32>,
    %c8_91 = arith.constant 8 : index
    %c0_92 = arith.constant 0 : index
    %218 = vector.load %arg15[%c8_91, %c0_92] : memref<40x3xf32, #tpu.memory_space<vmem>>, vector<30x3xf32>
    tpu.vector_store %arg15[%c8_91, %c0_92], %215 {strides = array<i32>} : memref<40x3xf32, #tpu.memory_space<vmem>>, vector<30x3xf32>,
    %cst_93 = arith.constant 0.000000e+00 : f32
    %219 = vector.broadcast %cst_93 : f32 to vector<8x4xf32>
    %cst_94 = arith.constant 0.000000e+00 : f32
    %220 = vector.broadcast %cst_94 : f32 to vector<8x4xf32>
    %c6_95 = arith.constant 6 : index
    %c0_96 = arith.constant 0 : index
    %221 = tpu.strided_load %arg15[%c6_95, %c0_96] {strides = array<i32: 4, 1>} : memref<40x3xf32, #tpu.memory_space<vmem>>, vector<8x3xf32>
    %c8_97 = arith.constant 8 : index
    %c0_98 = arith.constant 0 : index
    %222 = tpu.strided_load %arg15[%c8_97, %c0_98] {strides = array<i32: 4, 1>} : memref<40x3xf32, #tpu.memory_space<vmem>>, vector<8x3xf32>
    %c0_99 = arith.constant 0 : index
    %c0_100 = arith.constant 0 : index
    %223 = vector.load %arg6[%c0_99, %c0_100] : memref<12x4xf32, #tpu.memory_space<vmem>>, vector<1x4xf32>
    %224 = vector.extract_strided_slice %221 {offsets = [0, 0], sizes = [8, 1], strides = [1, 1]} : vector<8x3xf32> to vector<8x1xf32>
    %225 = vector.broadcast %224 : vector<8x1xf32> to vector<8x4xf32>
    %226 = vector.broadcast %223 : vector<1x4xf32> to vector<8x4xf32>
    %227 = arith.mulf %225, %226 : vector<8x4xf32>
    %228 = arith.addf %219, %227 : vector<8x4xf32>
    %229 = vector.extract_strided_slice %222 {offsets = [0, 0], sizes = [8, 1], strides = [1, 1]} : vector<8x3xf32> to vector<8x1xf32>
    %230 = vector.broadcast %229 : vector<8x1xf32> to vector<8x4xf32>
    %231 = vector.broadcast %223 : vector<1x4xf32> to vector<8x4xf32>
    %232 = arith.mulf %230, %231 : vector<8x4xf32>
    %233 = arith.addf %220, %232 : vector<8x4xf32>
    %c1_101 = arith.constant 1 : index
    %c0_102 = arith.constant 0 : index
    %234 = vector.load %arg6[%c1_101, %c0_102] : memref<12x4xf32, #tpu.memory_space<vmem>>, vector<1x4xf32>
    %235 = vector.extract_strided_slice %221 {offsets = [0, 1], sizes = [8, 1], strides = [1, 1]} : vector<8x3xf32> to vector<8x1xf32>
    %236 = vector.broadcast %235 : vector<8x1xf32> to vector<8x4xf32>
    %237 = vector.broadcast %234 : vector<1x4xf32> to vector<8x4xf32>
    %238 = arith.mulf %236, %237 : vector<8x4xf32>
    %239 = arith.addf %228, %238 : vector<8x4xf32>
    %240 = vector.extract_strided_slice %222 {offsets = [0, 1], sizes = [8, 1], strides = [1, 1]} : vector<8x3xf32> to vector<8x1xf32>
    %241 = vector.broadcast %240 : vector<8x1xf32> to vector<8x4xf32>
    %242 = vector.broadcast %234 : vector<1x4xf32> to vector<8x4xf32>
    %243 = arith.mulf %241, %242 : vector<8x4xf32>
    %244 = arith.addf %233, %243 : vector<8x4xf32>
    %c2_103 = arith.constant 2 : index
    %c0_104 = arith.constant 0 : index
    %245 = vector.load %arg6[%c2_103, %c0_104] : memref<12x4xf32, #tpu.memory_space<vmem>>, vector<1x4xf32>
    %246 = vector.extract_strided_slice %221 {offsets = [0, 2], sizes = [8, 1], strides = [1, 1]} : vector<8x3xf32> to vector<8x1xf32>
    %247 = vector.broadcast %246 : vector<8x1xf32> to vector<8x4xf32>
    %248 = vector.broadcast %245 : vector<1x4xf32> to vector<8x4xf32>
    %249 = arith.mulf %247, %248 : vector<8x4xf32>
    %250 = arith.addf %239, %249 : vector<8x4xf32>
    %251 = vector.extract_strided_slice %222 {offsets = [0, 2], sizes = [8, 1], strides = [1, 1]} : vector<8x3xf32> to vector<8x1xf32>
    %252 = vector.broadcast %251 : vector<8x1xf32> to vector<8x4xf32>
    %253 = vector.broadcast %245 : vector<1x4xf32> to vector<8x4xf32>
    %254 = arith.mulf %252, %253 : vector<8x4xf32>
    %255 = arith.addf %244, %254 : vector<8x4xf32>
    %c7_105 = arith.constant 7 : index
    %c0_106 = arith.constant 0 : index
    %256 = tpu.strided_load %arg15[%c7_105, %c0_106] {strides = array<i32: 4, 1>} : memref<40x3xf32, #tpu.memory_space<vmem>>, vector<8x3xf32>
    %c9_107 = arith.constant 9 : index
    %c0_108 = arith.constant 0 : index
    %257 = tpu.strided_load %arg15[%c9_107, %c0_108] {strides = array<i32: 4, 1>} : memref<40x3xf32, #tpu.memory_space<vmem>>, vector<8x3xf32>
    %c3_109 = arith.constant 3 : index
    %c0_110 = arith.constant 0 : index
    %258 = vector.load %arg6[%c3_109, %c0_110] : memref<12x4xf32, #tpu.memory_space<vmem>>, vector<1x4xf32>
    %259 = vector.extract_strided_slice %256 {offsets = [0, 0], sizes = [8, 1], strides = [1, 1]} : vector<8x3xf32> to vector<8x1xf32>
    %260 = vector.broadcast %259 : vector<8x1xf32> to vector<8x4xf32>
    %261 = vector.broadcast %258 : vector<1x4xf32> to vector<8x4xf32>
    %262 = arith.mulf %260, %261 : vector<8x4xf32>
    %263 = arith.addf %250, %262 : vector<8x4xf32>
    %264 = vector.extract_strided_slice %257 {offsets = [0, 0], sizes = [8, 1], strides = [1, 1]} : vector<8x3xf32> to vector<8x1xf32>
    %265 = vector.broadcast %264 : vector<8x1xf32> to vector<8x4xf32>
    %266 = vector.broadcast %258 : vector<1x4xf32> to vector<8x4xf32>
    %267 = arith.mulf %265, %266 : vector<8x4xf32>
    %268 = arith.addf %255, %267 : vector<8x4xf32>
    %c4_111 = arith.constant 4 : index
    %c0_112 = arith.constant 0 : index
    %269 = vector.load %arg6[%c4_111, %c0_112] : memref<12x4xf32, #tpu.memory_space<vmem>>, vector<1x4xf32>
    %270 = vector.extract_strided_slice %256 {offsets = [0, 1], sizes = [8, 1], strides = [1, 1]} : vector<8x3xf32> to vector<8x1xf32>
    %271 = vector.broadcast %270 : vector<8x1xf32> to vector<8x4xf32>
    %272 = vector.broadcast %269 : vector<1x4xf32> to vector<8x4xf32>
    %273 = arith.mulf %271, %272 : vector<8x4xf32>
    %274 = arith.addf %263, %273 : vector<8x4xf32>
    %275 = vector.extract_strided_slice %257 {offsets = [0, 1], sizes = [8, 1], strides = [1, 1]} : vector<8x3xf32> to vector<8x1xf32>
    %276 = vector.broadcast %275 : vector<8x1xf32> to vector<8x4xf32>
    %277 = vector.broadcast %269 : vector<1x4xf32> to vector<8x4xf32>
    %278 = arith.mulf %276, %277 : vector<8x4xf32>
    %279 = arith.addf %268, %278 : vector<8x4xf32>
    %c5_113 = arith.constant 5 : index
    %c0_114 = arith.constant 0 : index
    %280 = vector.load %arg6[%c5_113, %c0_114] : memref<12x4xf32, #tpu.memory_space<vmem>>, vector<1x4xf32>
    %281 = vector.extract_strided_slice %256 {offsets = [0, 2], sizes = [8, 1], strides = [1, 1]} : vector<8x3xf32> to vector<8x1xf32>
    %282 = vector.broadcast %281 : vector<8x1xf32> to vector<8x4xf32>
    %283 = vector.broadcast %280 : vector<1x4xf32> to vector<8x4xf32>
    %284 = arith.mulf %282, %283 : vector<8x4xf32>
    %285 = arith.addf %274, %284 : vector<8x4xf32>
    %286 = vector.extract_strided_slice %257 {offsets = [0, 2], sizes = [8, 1], strides = [1, 1]} : vector<8x3xf32> to vector<8x1xf32>
    %287 = vector.broadcast %286 : vector<8x1xf32> to vector<8x4xf32>
    %288 = vector.broadcast %280 : vector<1x4xf32> to vector<8x4xf32>
    %289 = arith.mulf %287, %288 : vector<8x4xf32>
    %290 = arith.addf %279, %289 : vector<8x4xf32>
    %c8_115 = arith.constant 8 : index
    %c0_116 = arith.constant 0 : index
    %291 = tpu.strided_load %arg15[%c8_115, %c0_116] {strides = array<i32: 4, 1>} : memref<40x3xf32, #tpu.memory_space<vmem>>, vector<8x3xf32>
    %c10_117 = arith.constant 10 : index
    %c0_118 = arith.constant 0 : index
    %292 = tpu.strided_load %arg15[%c10_117, %c0_118] {strides = array<i32: 4, 1>} : memref<40x3xf32, #tpu.memory_space<vmem>>, vector<8x3xf32>
    %c6_119 = arith.constant 6 : index
    %c0_120 = arith.constant 0 : index
    %293 = vector.load %arg6[%c6_119, %c0_120] : memref<12x4xf32, #tpu.memory_space<vmem>>, vector<1x4xf32>
    %294 = vector.extract_strided_slice %291 {offsets = [0, 0], sizes = [8, 1], strides = [1, 1]} : vector<8x3xf32> to vector<8x1xf32>
    %295 = vector.broadcast %294 : vector<8x1xf32> to vector<8x4xf32>
    %296 = vector.broadcast %293 : vector<1x4xf32> to vector<8x4xf32>
    %297 = arith.mulf %295, %296 : vector<8x4xf32>
    %298 = arith.addf %285, %297 : vector<8x4xf32>
    %299 = vector.extract_strided_slice %292 {offsets = [0, 0], sizes = [8, 1], strides = [1, 1]} : vector<8x3xf32> to vector<8x1xf32>
    %300 = vector.broadcast %299 : vector<8x1xf32> to vector<8x4xf32>
    %301 = vector.broadcast %293 : vector<1x4xf32> to vector<8x4xf32>
    %302 = arith.mulf %300, %301 : vector<8x4xf32>
    %303 = arith.addf %290, %302 : vector<8x4xf32>
    %c7_121 = arith.constant 7 : index
    %c0_122 = arith.constant 0 : index
    %304 = vector.load %arg6[%c7_121, %c0_122] : memref<12x4xf32, #tpu.memory_space<vmem>>, vector<1x4xf32>
    %305 = vector.extract_strided_slice %291 {offsets = [0, 1], sizes = [8, 1], strides = [1, 1]} : vector<8x3xf32> to vector<8x1xf32>
    %306 = vector.broadcast %305 : vector<8x1xf32> to vector<8x4xf32>
    %307 = vector.broadcast %304 : vector<1x4xf32> to vector<8x4xf32>
    %308 = arith.mulf %306, %307 : vector<8x4xf32>
    %309 = arith.addf %298, %308 : vector<8x4xf32>
    %310 = vector.extract_strided_slice %292 {offsets = [0, 1], sizes = [8, 1], strides = [1, 1]} : vector<8x3xf32> to vector<8x1xf32>
    %311 = vector.broadcast %310 : vector<8x1xf32> to vector<8x4xf32>
    %312 = vector.broadcast %304 : vector<1x4xf32> to vector<8x4xf32>
    %313 = arith.mulf %311, %312 : vector<8x4xf32>
    %314 = arith.addf %303, %313 : vector<8x4xf32>
    %c8_123 = arith.constant 8 : index
    %c0_124 = arith.constant 0 : index
    %315 = vector.load %arg6[%c8_123, %c0_124] : memref<12x4xf32, #tpu.memory_space<vmem>>, vector<1x4xf32>
    %316 = vector.extract_strided_slice %291 {offsets = [0, 2], sizes = [8, 1], strides = [1, 1]} : vector<8x3xf32> to vector<8x1xf32>
    %317 = vector.broadcast %316 : vector<8x1xf32> to vector<8x4xf32>
    %318 = vector.broadcast %315 : vector<1x4xf32> to vector<8x4xf32>
    %319 = arith.mulf %317, %318 : vector<8x4xf32>
    %320 = arith.addf %309, %319 : vector<8x4xf32>
    %321 = vector.extract_strided_slice %292 {offsets = [0, 2], sizes = [8, 1], strides = [1, 1]} : vector<8x3xf32> to vector<8x1xf32>
    %322 = vector.broadcast %321 : vector<8x1xf32> to vector<8x4xf32>
    %323 = vector.broadcast %315 : vector<1x4xf32> to vector<8x4xf32>
    %324 = arith.mulf %322, %323 : vector<8x4xf32>
    %325 = arith.addf %314, %324 : vector<8x4xf32>
    %c9_125 = arith.constant 9 : index
    %c0_126 = arith.constant 0 : index
    %326 = tpu.strided_load %arg15[%c9_125, %c0_126] {strides = array<i32: 4, 1>} : memref<40x3xf32, #tpu.memory_space<vmem>>, vector<8x3xf32>
    %c11_127 = arith.constant 11 : index
    %c0_128 = arith.constant 0 : index
    %327 = tpu.strided_load %arg15[%c11_127, %c0_128] {strides = array<i32: 4, 1>} : memref<40x3xf32, #tpu.memory_space<vmem>>, vector<8x3xf32>
    %c9_129 = arith.constant 9 : index
    %c0_130 = arith.constant 0 : index
    %328 = vector.load %arg6[%c9_129, %c0_130] : memref<12x4xf32, #tpu.memory_space<vmem>>, vector<1x4xf32>
    %329 = vector.extract_strided_slice %326 {offsets = [0, 0], sizes = [8, 1], strides = [1, 1]} : vector<8x3xf32> to vector<8x1xf32>
    %330 = vector.broadcast %329 : vector<8x1xf32> to vector<8x4xf32>
    %331 = vector.broadcast %328 : vector<1x4xf32> to vector<8x4xf32>
    %332 = arith.mulf %330, %331 : vector<8x4xf32>
    %333 = arith.addf %320, %332 : vector<8x4xf32>
    %334 = vector.extract_strided_slice %327 {offsets = [0, 0], sizes = [8, 1], strides = [1, 1]} : vector<8x3xf32> to vector<8x1xf32>
    %335 = vector.broadcast %334 : vector<8x1xf32> to vector<8x4xf32>
    %336 = vector.broadcast %328 : vector<1x4xf32> to vector<8x4xf32>
    %337 = arith.mulf %335, %336 : vector<8x4xf32>
    %338 = arith.addf %325, %337 : vector<8x4xf32>
    %c10_131 = arith.constant 10 : index
    %c0_132 = arith.constant 0 : index
    %339 = vector.load %arg6[%c10_131, %c0_132] : memref<12x4xf32, #tpu.memory_space<vmem>>, vector<1x4xf32>
    %340 = vector.extract_strided_slice %326 {offsets = [0, 1], sizes = [8, 1], strides = [1, 1]} : vector<8x3xf32> to vector<8x1xf32>
    %341 = vector.broadcast %340 : vector<8x1xf32> to vector<8x4xf32>
    %342 = vector.broadcast %339 : vector<1x4xf32> to vector<8x4xf32>
    %343 = arith.mulf %341, %342 : vector<8x4xf32>
    %344 = arith.addf %333, %343 : vector<8x4xf32>
    %345 = vector.extract_strided_slice %327 {offsets = [0, 1], sizes = [8, 1], strides = [1, 1]} : vector<8x3xf32> to vector<8x1xf32>
    %346 = vector.broadcast %345 : vector<8x1xf32> to vector<8x4xf32>
    %347 = vector.broadcast %339 : vector<1x4xf32> to vector<8x4xf32>
    %348 = arith.mulf %346, %347 : vector<8x4xf32>
    %349 = arith.addf %338, %348 : vector<8x4xf32>
    %c11_133 = arith.constant 11 : index
    %c0_134 = arith.constant 0 : index
    %350 = vector.load %arg6[%c11_133, %c0_134] : memref<12x4xf32, #tpu.memory_space<vmem>>, vector<1x4xf32>
    %351 = vector.extract_strided_slice %326 {offsets = [0, 2], sizes = [8, 1], strides = [1, 1]} : vector<8x3xf32> to vector<8x1xf32>
    %352 = vector.broadcast %351 : vector<8x1xf32> to vector<8x4xf32>
    %353 = vector.broadcast %350 : vector<1x4xf32> to vector<8x4xf32>
    %354 = arith.mulf %352, %353 : vector<8x4xf32>
    %355 = arith.addf %344, %354 : vector<8x4xf32>
    %356 = vector.extract_strided_slice %327 {offsets = [0, 2], sizes = [8, 1], strides = [1, 1]} : vector<8x3xf32> to vector<8x1xf32>
    %357 = vector.broadcast %356 : vector<8x1xf32> to vector<8x4xf32>
    %358 = vector.broadcast %350 : vector<1x4xf32> to vector<8x4xf32>
    %359 = arith.mulf %357, %358 : vector<8x4xf32>
    %360 = arith.addf %349, %359 : vector<8x4xf32>
    %c0_135 = arith.constant 0 : index
    %c0_136 = arith.constant 0 : index
    %361 = vector.load %arg7[%c0_135, %c0_136] : memref<1x4xf32, #tpu.memory_space<vmem>>, vector<1x4xf32>
    %362 = vector.broadcast %361 : vector<1x4xf32> to vector<8x4xf32>
    %363 = arith.addf %355, %362 : vector<8x4xf32>
    %cst_137 = arith.constant 0.000000e+00 : f32
    %364 = vector.broadcast %cst_137 : f32 to vector<8x4xf32>
    %365 = arith.maximumf %363, %364 : vector<8x4xf32>
    %366 = vector.broadcast %361 : vector<1x4xf32> to vector<8x4xf32>
    %367 = arith.addf %360, %366 : vector<8x4xf32>
    %cst_138 = arith.constant 0.000000e+00 : f32
    %368 = vector.broadcast %cst_138 : f32 to vector<8x4xf32>
    %369 = arith.maximumf %367, %368 : vector<8x4xf32>
    %370 = arith.maximumf %365, %369 : vector<8x4xf32>
    %c0_139 = arith.constant 0 : index
    %c0_140 = arith.constant 0 : index
    %371 = vector.load %arg9[%c0_139, %c0_140] : memref<8x1xf32, #tpu.memory_space<vmem>>, vector<8x1xf32>
    %c0_141 = arith.constant 0 : index
    %c0_142 = arith.constant 0 : index
    %c0_143 = arith.constant 0 : index
    %372 = vector.load %arg8[%c0_141, %c0_142, %c0_143] : memref<4x8x8xf32, #tpu.memory_space<vmem>>, vector<1x8x8xf32>
    %373 = vector.shape_cast %372 : vector<1x8x8xf32> to vector<8x8xf32>
    %374 = vector.extract_strided_slice %370 {offsets = [0, 0], sizes = [8, 1], strides = [1, 1]} : vector<8x4xf32> to vector<8x1xf32>
    %cst_144 = arith.constant dense<0.000000e+00> : vector<8x1xf32>
    %375 = tpu.matmul %373, %374, %cst_144 {dimension_numbers = #tpu.dot_dimension_numbers<[1], [0], [0], [1], [0, 0, 1, 1], [], []>} : vector<8x8xf32>, vector<8x1xf32>, vector<8x1xf32> -> vector<8x1xf32>
    %376 = arith.addf %371, %375 : vector<8x1xf32>
    %c1_145 = arith.constant 1 : index
    %c0_146 = arith.constant 0 : index
    %c0_147 = arith.constant 0 : index
    %377 = vector.load %arg8[%c1_145, %c0_146, %c0_147] : memref<4x8x8xf32, #tpu.memory_space<vmem>>, vector<1x8x8xf32>
    %378 = vector.shape_cast %377 : vector<1x8x8xf32> to vector<8x8xf32>
    %379 = vector.extract_strided_slice %370 {offsets = [0, 1], sizes = [8, 1], strides = [1, 1]} : vector<8x4xf32> to vector<8x1xf32>
    %cst_148 = arith.constant dense<0.000000e+00> : vector<8x1xf32>
    %380 = tpu.matmul %378, %379, %cst_148 {dimension_numbers = #tpu.dot_dimension_numbers<[1], [0], [0], [1], [0, 0, 1, 1], [], []>} : vector<8x8xf32>, vector<8x1xf32>, vector<8x1xf32> -> vector<8x1xf32>
    %381 = arith.addf %376, %380 : vector<8x1xf32>
    %c2_149 = arith.constant 2 : index
    %c0_150 = arith.constant 0 : index
    %c0_151 = arith.constant 0 : index
    %382 = vector.load %arg8[%c2_149, %c0_150, %c0_151] : memref<4x8x8xf32, #tpu.memory_space<vmem>>, vector<1x8x8xf32>
    %383 = vector.shape_cast %382 : vector<1x8x8xf32> to vector<8x8xf32>
    %384 = vector.extract_strided_slice %370 {offsets = [0, 2], sizes = [8, 1], strides = [1, 1]} : vector<8x4xf32> to vector<8x1xf32>
    %cst_152 = arith.constant dense<0.000000e+00> : vector<8x1xf32>
    %385 = tpu.matmul %383, %384, %cst_152 {dimension_numbers = #tpu.dot_dimension_numbers<[1], [0], [0], [1], [0, 0, 1, 1], [], []>} : vector<8x8xf32>, vector<8x1xf32>, vector<8x1xf32> -> vector<8x1xf32>
    %386 = arith.addf %381, %385 : vector<8x1xf32>
    %c3_153 = arith.constant 3 : index
    %c0_154 = arith.constant 0 : index
    %c0_155 = arith.constant 0 : index
    %387 = vector.load %arg8[%c3_153, %c0_154, %c0_155] : memref<4x8x8xf32, #tpu.memory_space<vmem>>, vector<1x8x8xf32>
    %388 = vector.shape_cast %387 : vector<1x8x8xf32> to vector<8x8xf32>
    %389 = vector.extract_strided_slice %370 {offsets = [0, 3], sizes = [8, 1], strides = [1, 1]} : vector<8x4xf32> to vector<8x1xf32>
    %cst_156 = arith.constant dense<0.000000e+00> : vector<8x1xf32>
    %390 = tpu.matmul %388, %389, %cst_156 {dimension_numbers = #tpu.dot_dimension_numbers<[1], [0], [0], [1], [0, 0, 1, 1], [], []>} : vector<8x8xf32>, vector<8x1xf32>, vector<8x1xf32> -> vector<8x1xf32>
    %391 = arith.addf %386, %390 : vector<8x1xf32>
    %cst_157 = arith.constant 0.000000e+00 : f32
    %392 = vector.broadcast %cst_157 : f32 to vector<8x1xf32>
    %393 = arith.maximumf %391, %392 : vector<8x1xf32>
    %c0_158 = arith.constant 0 : index
    %c0_159 = arith.constant 0 : index
    %394 = vector.load %arg10[%c0_158, %c0_159] : memref<2x8xf32, #tpu.memory_space<vmem>>, vector<2x8xf32>
    %cst_160 = arith.constant dense<0.000000e+00> : vector<2x1xf32>
    %395 = tpu.matmul %394, %393, %cst_160 {dimension_numbers = #tpu.dot_dimension_numbers<[1], [0], [0], [1], [0, 0, 1, 1], [], []>} : vector<2x8xf32>, vector<8x1xf32>, vector<2x1xf32> -> vector<2x1xf32>
    %c0_161 = arith.constant 0 : index
    %c0_162 = arith.constant 0 : index
    %396 = vector.load %arg11[%c0_161, %c0_162] : memref<2x1xf32, #tpu.memory_space<vmem>>, vector<2x1xf32>
    %397 = arith.addf %395, %396 : vector<2x1xf32>
    %c0_163 = arith.constant 0 : index
    %c0_164 = arith.constant 0 : index
    %c0_165 = arith.constant 0 : index
    %398 = vector.load %arg12[%c0_163, %c0_164, %c0_165] : memref<1x2x1xf32, #tpu.memory_space<vmem>>, vector<1x2x1xf32>
    %399 = vector.shape_cast %398 : vector<1x2x1xf32> to vector<2x1xf32>
    %400 = vector.shape_cast %397 : vector<2x1xf32> to vector<1x2x1xf32>
    tpu.vector_store %arg12[%c0_163, %c0_164, %c0_165], %400 {strides = array<i32>} : memref<1x2x1xf32, #tpu.memory_space<vmem>>, vector<1x2x1xf32>,
    return
  }
  func.func @transform_0(%arg0: i32) -> (i32, i32, i32) {
    %c0_i32 = arith.constant 0 : i32
    %c0_i32_0 = arith.constant 0 : i32
    %c0_i32_1 = arith.constant 0 : i32
    return %arg0, %c0_i32, %c0_i32_0 : i32, i32, i32
  }
  func.func @transform_1(%arg0: i32) -> (i32, i32) {
    %c0_i32 = arith.constant 0 : i32
    %c0_i32_0 = arith.constant 0 : i32
    %c0_i32_1 = arith.constant 0 : i32
    return %c0_i32, %c0_i32_0 : i32, i32
  }
  func.func @transform_2(%arg0: i32) -> (i32, i32) {
    %c0_i32 = arith.constant 0 : i32
    %c0_i32_0 = arith.constant 0 : i32
    %c0_i32_1 = arith.constant 0 : i32
    return %c0_i32, %c0_i32_0 : i32, i32
  }
  func.func @transform_3(%arg0: i32) -> (i32, i32) {
    %c0_i32 = arith.constant 0 : i32
    %c0_i32_0 = arith.constant 0 : i32
    %c0_i32_1 = arith.constant 0 : i32
    return %c0_i32, %c0_i32_0 : i32, i32
  }
  func.func @transform_4(%arg0: i32) -> (i32, i32) {
    %c0_i32 = arith.constant 0 : i32
    %c0_i32_0 = arith.constant 0 : i32
    %c0_i32_1 = arith.constant 0 : i32
    return %c0_i32, %c0_i32_0 : i32, i32
  }
  func.func @transform_5(%arg0: i32) -> (i32, i32) {
    %c0_i32 = arith.constant 0 : i32
    %c0_i32_0 = arith.constant 0 : i32
    %c0_i32_1 = arith.constant 0 : i32
    return %c0_i32, %c0_i32_0 : i32, i32
  }
  func.func @transform_6(%arg0: i32) -> (i32, i32) {
    %c0_i32 = arith.constant 0 : i32
    %c0_i32_0 = arith.constant 0 : i32
    %c0_i32_1 = arith.constant 0 : i32
    return %c0_i32, %c0_i32_0 : i32, i32
  }
  func.func @transform_7(%arg0: i32) -> (i32, i32, i32) {
    %c0_i32 = arith.constant 0 : i32
    %c0_i32_0 = arith.constant 0 : i32
    %c0_i32_1 = arith.constant 0 : i32
    %c0_i32_2 = arith.constant 0 : i32
    return %c0_i32, %c0_i32_0, %c0_i32_1 : i32, i32, i32
  }
  func.func @transform_8(%arg0: i32) -> (i32, i32) {
    %c0_i32 = arith.constant 0 : i32
    %c0_i32_0 = arith.constant 0 : i32
    %c0_i32_1 = arith.constant 0 : i32
    return %c0_i32, %c0_i32_0 : i32, i32
  }
  func.func @transform_9(%arg0: i32) -> (i32, i32) {
    %c0_i32 = arith.constant 0 : i32
    %c0_i32_0 = arith.constant 0 : i32
    %c0_i32_1 = arith.constant 0 : i32
    return %c0_i32, %c0_i32_0 : i32, i32
  }
  func.func @transform_10(%arg0: i32) -> (i32, i32) {
    %c0_i32 = arith.constant 0 : i32
    %c0_i32_0 = arith.constant 0 : i32
    %c0_i32_1 = arith.constant 0 : i32
    return %c0_i32, %c0_i32_0 : i32, i32
  }
  func.func @transform_11(%arg0: i32) -> (i32, i32, i32) {
    %c0_i32 = arith.constant 0 : i32
    %c0_i32_0 = arith.constant 0 : i32
    %c0_i32_1 = arith.constant 0 : i32
    return %arg0, %c0_i32, %c0_i32_0 : i32, i32, i32
  }
}

</mosaic_0001>

<llo_original>
// kernel: _lambda_.1
$region0: #{_lambda_.1}
  #allocation0 [shape = 'u32[]', space=smem, size = 0x4, offset = 0x4, fixed_abs, tag = 'smem constant byte address 0x4 - core index']
  #allocation1 [shape = 'u32[144,128]{1,0:T(1,128)}', space=vmem, size = 0x12000, scoped, tag = 'internal scratch']
  #allocation2 [shape = 'f32[952,1]{1,0:T(8,128)}', space=vmem, size = 0x77000, scoped, tag = 'scratch operand']
  #allocation3 [shape = 'f32[128,2]{1,0:T(8,128)}', space=vmem, size = 0x10000, scoped, tag = 'scratch operand']
  #allocation4 [shape = 'f32[40,3]{1,0:T(8,128)}', space=vmem, size = 0x5000, scoped, tag = 'scratch operand']
  %s0 = inlined_call_operand.vmem [shape: f32[2,940,1], index: 0, kind: input, shape index: {}]
  %s1 = inlined_call_operand.vmem [shape: f32[8,2], index: 1, kind: input, shape index: {}]
  %s2 = inlined_call_operand.vmem [shape: f32[1,2], index: 2, kind: input, shape index: {}]
  %s3 = inlined_call_operand.vmem [shape: f32[8,3], index: 3, kind: input, shape index: {}]
  %s4 = inlined_call_operand.vmem [shape: f32[1,3], index: 4, kind: input, shape index: {}]
  %s5 = inlined_call_operand.vmem [shape: f32[12,4], index: 5, kind: input, shape index: {}]
  %s6 = inlined_call_operand.vmem [shape: f32[1,4], index: 6, kind: input, shape index: {}]
  %s7 = inlined_call_operand.vmem [shape: f32[4,8,8], index: 7, kind: input, shape index: {}]
  %s8 = inlined_call_operand.vmem [shape: f32[8,1], index: 8, kind: input, shape index: {}]
  %s9 = inlined_call_operand.vmem [shape: f32[2,8], index: 9, kind: input, shape index: {}]
  %s10 = inlined_call_operand.vmem [shape: f32[2,1], index: 10, kind: input, shape index: {}]
  %s11 = inlined_call_operand.vmem [shape: f32[2,2,1], index: 11, kind: output, shape index: {}]
  %s12 = sld [smem:[#allocation0]]
  $region77: #{_lambda_.1} parent=0
    _
  %s14 = ssub.s32 1, %s12
  %s15 = scalar_select 0, %s14, %s12
  loop: start=0, step=1, limit=4
  $region2: #{_lambda_.1} parent=0 // loop_pre_header
    _
  $region3: #{_lambda_.1} parent=0 // loop_header
    %s17 = sphi 0, %s21
    %p18 = scmp.ge.s32.totalorder %s17, 4
    %s27 = sphi 0, %s29
    %s30 = sphi 0, %s27
    %s31 = sphi 0, %s30
    %s47 = sphi 0, %s31
    %s51 = sphi 0, %s51
    %s53 = sphi 0, %s51
    %s54 = sphi 0, %s53
    %s68 = sphi 0, %s54
    %s72 = sphi 0, %s72
    %s74 = sphi 0, %s72
    %s75 = sphi 0, %s74
    %s89 = sphi 0, %s75
    %s93 = sphi 0, %s93
    %s95 = sphi 0, %s93
    %s96 = sphi 0, %s95
    %s110 = sphi 0, %s96
    %s114 = sphi 0, %s114
    %s116 = sphi 0, %s114
    %s117 = sphi 0, %s116
    %s131 = sphi 0, %s117
    %s135 = sphi 0, %s135
    %s137 = sphi 0, %s135
    %s138 = sphi 0, %s137
    %s152 = sphi 0, %s138
    %s156 = sphi 0, %s156
    %s158 = sphi 0, %s156
    %s159 = sphi 0, %s158
    %s173 = sphi 0, %s159
    %s177 = sphi 0, %s177
    %s179 = sphi 0, %s177
    %s180 = sphi 0, %s179
    %s194 = sphi 0, %s180
    %s198 = sphi 0, %s198
    %s200 = sphi 0, %s198
    %s201 = sphi 0, %s200
    %s215 = sphi 0, %s201
    %s219 = sphi 0, %s219
    %s221 = sphi 0, %s219
    %s222 = sphi 0, %s221
    %s236 = sphi 0, %s222
    %s240 = sphi 0, %s240
    %s242 = sphi 0, %s240
    %s243 = sphi 0, %s242
    %s257 = sphi 0, %s243
    %s263 = sphi 0, %s265
    %s266 = sphi 0, %s263
    %s267 = sphi 0, %s266
    %s283 = sphi 0, %s267
  $region4: #{_lambda_.1} parent=0 // loop_header_branch
    %20 = sbr.rel (%p18) target = $region8
  $region5: #{_lambda_.1} parent=0 // loop_body
    %s22 = ssub.s32 %s17, 1
    %s23 = ssub.s32 %s17, 2
    %s24 = sadd.s32 %s17, 1
    %s25 = ssub.s32 %s17, %s24
    %p26 = scmp.eq.s32.totalorder %s25, 0
    %s28 = sadd.s32 %s27, 1
    %s29 = scalar_select %p26, %s27, %s28
    %p32 = pneg %p26
    %p33 = scmp.eq.s32.totalorder %s17, 1
    %p34 = por %p32, %p33
    %p35 = scmp.ne.s32.totalorder %s27, %s30
    %p36 = scmp.eq.s32.totalorder %s17, 0
    %p37 = por %p35, %p36
    %p38 = scmp.ne.s32.totalorder %s27, %s30
    %p39 = scmp.eq.s32.totalorder %s22, 1
    %p40 = por %p38, %p39
    %p41 = scmp.ne.s32.totalorder %s30, %s31
    %p42 = scmp.eq.s32.totalorder %s22, 0
    %p43 = por %p41, %p42
    %p44 = scmp.ne.s32.totalorder %s30, %s31
    %p45 = scmp.eq.s32.totalorder %s23, 1
    %p46 = por %p44, %p45
    %p48 = scmp.ne.s32.totalorder %s31, %s47
    %p49 = scmp.eq.s32.totalorder %s23, 0
    %p50 = por %p48, %p49
    %s52 = sadd.s32 %s51, 1
    %p55 = scmp.eq.s32.totalorder %s17, 1
    %p56 = scmp.ne.s32.totalorder %s51, %s53
    %p57 = scmp.eq.s32.totalorder %s17, 0
    %p58 = por %p56, %p57
    %p59 = scmp.ne.s32.totalorder %s51, %s53
    %p60 = scmp.eq.s32.totalorder %s22, 1
    %p61 = por %p59, %p60
    %p62 = scmp.ne.s32.totalorder %s53, %s54
    %p63 = scmp.eq.s32.totalorder %s22, 0
    %p64 = por %p62, %p63
    %p65 = scmp.ne.s32.totalorder %s53, %s54
    %p66 = scmp.eq.s32.totalorder %s23, 1
    %p67 = por %p65, %p66
    %p69 = scmp.ne.s32.totalorder %s54, %s68
    %p70 = scmp.eq.s32.totalorder %s23, 0
    %p71 = por %p69, %p70
    %s73 = sadd.s32 %s72, 1
    %p76 = scmp.eq.s32.totalorder %s17, 1
    %p77 = scmp.ne.s32.totalorder %s72, %s74
    %p78 = scmp.eq.s32.totalorder %s17, 0
    %p79 = por %p77, %p78
    %p80 = scmp.ne.s32.totalorder %s72, %s74
    %p81 = scmp.eq.s32.totalorder %s22, 1
    %p82 = por %p80, %p81
    %p83 = scmp.ne.s32.totalorder %s74, %s75
    %p84 = scmp.eq.s32.totalorder %s22, 0
    %p85 = por %p83, %p84
    %p86 = scmp.ne.s32.totalorder %s74, %s75
    %p87 = scmp.eq.s32.totalorder %s23, 1
    %p88 = por %p86, %p87
    %p90 = scmp.ne.s32.totalorder %s75, %s89
    %p91 = scmp.eq.s32.totalorder %s23, 0
    %p92 = por %p90, %p91
    %s94 = sadd.s32 %s93, 1
    %p97 = scmp.eq.s32.totalorder %s17, 1
    %p98 = scmp.ne.s32.totalorder %s93, %s95
    %p99 = scmp.eq.s32.totalorder %s17, 0
    %p100 = por %p98, %p99
    %p101 = scmp.ne.s32.totalorder %s93, %s95
    %p102 = scmp.eq.s32.totalorder %s22, 1
    %p103 = por %p101, %p102
    %p104 = scmp.ne.s32.totalorder %s95, %s96
    %p105 = scmp.eq.s32.totalorder %s22, 0
    %p106 = por %p104, %p105
    %p107 = scmp.ne.s32.totalorder %s95, %s96
    %p108 = scmp.eq.s32.totalorder %s23, 1
    %p109 = por %p107, %p108
    %p111 = scmp.ne.s32.totalorder %s96, %s110
    %p112 = scmp.eq.s32.totalorder %s23, 0
    %p113 = por %p111, %p112
    %s115 = sadd.s32 %s114, 1
    %p118 = scmp.eq.s32.totalorder %s17, 1
    %p119 = scmp.ne.s32.totalorder %s114, %s116
    %p120 = scmp.eq.s32.totalorder %s17, 0
    %p121 = por %p119, %p120
    %p122 = scmp.ne.s32.totalorder %s114, %s116
    %p123 = scmp.eq.s32.totalorder %s22, 1
    %p124 = por %p122, %p123
    %p125 = scmp.ne.s32.totalorder %s116, %s117
    %p126 = scmp.eq.s32.totalorder %s22, 0
    %p127 = por %p125, %p126
    %p128 = scmp.ne.s32.totalorder %s116, %s117
    %p129 = scmp.eq.s32.totalorder %s23, 1
    %p130 = por %p128, %p129
    %p132 = scmp.ne.s32.totalorder %s117, %s131
    %p133 = scmp.eq.s32.totalorder %s23, 0
    %p134 = por %p132, %p133
    %s136 = sadd.s32 %s135, 1
    %p139 = scmp.eq.s32.totalorder %s17, 1
    %p140 = scmp.ne.s32.totalorder %s135, %s137
    %p141 = scmp.eq.s32.totalorder %s17, 0
    %p142 = por %p140, %p141
    %p143 = scmp.ne.s32.totalorder %s135, %s137
    %p144 = scmp.eq.s32.totalorder %s22, 1
    %p145 = por %p143, %p144
    %p146 = scmp.ne.s32.totalorder %s137, %s138
    %p147 = scmp.eq.s32.totalorder %s22, 0
    %p148 = por %p146, %p147
    %p149 = scmp.ne.s32.totalorder %s137, %s138
    %p150 = scmp.eq.s32.totalorder %s23, 1
    %p151 = por %p149, %p150
    %p153 = scmp.ne.s32.totalorder %s138, %s152
    %p154 = scmp.eq.s32.totalorder %s23, 0
    %p155 = por %p153, %p154
    %s157 = sadd.s32 %s156, 1
    %p160 = scmp.eq.s32.totalorder %s17, 1
    %p161 = scmp.ne.s32.totalorder %s156, %s158
    %p162 = scmp.eq.s32.totalorder %s17, 0
    %p163 = por %p161, %p162
    %p164 = scmp.ne.s32.totalorder %s156, %s158
    %p165 = scmp.eq.s32.totalorder %s22, 1
    %p166 = por %p164, %p165
    %p167 = scmp.ne.s32.totalorder %s158, %s159
    %p168 = scmp.eq.s32.totalorder %s22, 0
    %p169 = por %p167, %p168
    %p170 = scmp.ne.s32.totalorder %s158, %s159
    %p171 = scmp.eq.s32.totalorder %s23, 1
    %p172 = por %p170, %p171
    %p174 = scmp.ne.s32.totalorder %s159, %s173
    %p175 = scmp.eq.s32.totalorder %s23, 0
    %p176 = por %p174, %p175
    %s178 = sadd.s32 %s177, 1
    %p181 = scmp.eq.s32.totalorder %s17, 1
    %p182 = scmp.ne.s32.totalorder %s177, %s179
    %p183 = scmp.eq.s32.totalorder %s17, 0
    %p184 = por %p182, %p183
    %p185 = scmp.ne.s32.totalorder %s177, %s179
    %p186 = scmp.eq.s32.totalorder %s22, 1
    %p187 = por %p185, %p186
    %p188 = scmp.ne.s32.totalorder %s179, %s180
    %p189 = scmp.eq.s32.totalorder %s22, 0
    %p190 = por %p188, %p189
    %p191 = scmp.ne.s32.totalorder %s179, %s180
    %p192 = scmp.eq.s32.totalorder %s23, 1
    %p193 = por %p191, %p192
    %p195 = scmp.ne.s32.totalorder %s180, %s194
    %p196 = scmp.eq.s32.totalorder %s23, 0
    %p197 = por %p195, %p196
    %s199 = sadd.s32 %s198, 1
    %p202 = scmp.eq.s32.totalorder %s17, 1
    %p203 = scmp.ne.s32.totalorder %s198, %s200
    %p204 = scmp.eq.s32.totalorder %s17, 0
    %p205 = por %p203, %p204
    %p206 = scmp.ne.s32.totalorder %s198, %s200
    %p207 = scmp.eq.s32.totalorder %s22, 1
    %p208 = por %p206, %p207
    %p209 = scmp.ne.s32.totalorder %s200, %s201
    %p210 = scmp.eq.s32.totalorder %s22, 0
    %p211 = por %p209, %p210
    %p212 = scmp.ne.s32.totalorder %s200, %s201
    %p213 = scmp.eq.s32.totalorder %s23, 1
    %p214 = por %p212, %p213
    %p216 = scmp.ne.s32.totalorder %s201, %s215
    %p217 = scmp.eq.s32.totalorder %s23, 0
    %p218 = por %p216, %p217
    %s220 = sadd.s32 %s219, 1
    %p223 = scmp.eq.s32.totalorder %s17, 1
    %p224 = scmp.ne.s32.totalorder %s219, %s221
    %p225 = scmp.eq.s32.totalorder %s17, 0
    %p226 = por %p224, %p225
    %p227 = scmp.ne.s32.totalorder %s219, %s221
    %p228 = scmp.eq.s32.totalorder %s22, 1
    %p229 = por %p227, %p228
    %p230 = scmp.ne.s32.totalorder %s221, %s222
    %p231 = scmp.eq.s32.totalorder %s22, 0
    %p232 = por %p230, %p231
    %p233 = scmp.ne.s32.totalorder %s221, %s222
    %p234 = scmp.eq.s32.totalorder %s23, 1
    %p235 = por %p233, %p234
    %p237 = scmp.ne.s32.totalorder %s222, %s236
    %p238 = scmp.eq.s32.totalorder %s23, 0
    %p239 = por %p237, %p238
    %s241 = sadd.s32 %s240, 1
    %p244 = scmp.eq.s32.totalorder %s17, 1
    %p245 = scmp.ne.s32.totalorder %s240, %s242
    %p246 = scmp.eq.s32.totalorder %s17, 0
    %p247 = por %p245, %p246
    %p248 = scmp.ne.s32.totalorder %s240, %s242
    %p249 = scmp.eq.s32.totalorder %s22, 1
    %p250 = por %p248, %p249
    %p251 = scmp.ne.s32.totalorder %s242, %s243
    %p252 = scmp.eq.s32.totalorder %s22, 0
    %p253 = por %p251, %p252
    %p254 = scmp.ne.s32.totalorder %s242, %s243
    %p255 = scmp.eq.s32.totalorder %s23, 1
    %p256 = por %p254, %p255
    %p258 = scmp.ne.s32.totalorder %s243, %s257
    %p259 = scmp.eq.s32.totalorder %s23, 0
    %p260 = por %p258, %p259
    %s261 = ssub.s32 %s17, %s24
    %p262 = scmp.eq.s32.totalorder %s261, 0
    %s264 = sadd.s32 %s263, 1
    %s265 = scalar_select %p262, %s263, %s264
    %p268 = pneg %p262
    %p269 = scmp.eq.s32.totalorder %s17, 1
    %p270 = por %p268, %p269
    %p271 = scmp.ne.s32.totalorder %s263, %s266
    %p272 = scmp.eq.s32.totalorder %s17, 0
    %p273 = por %p271, %p272
    %p274 = scmp.ne.s32.totalorder %s263, %s266
    %p275 = scmp.eq.s32.totalorder %s22, 1
    %p276 = por %p274, %p275
    %p277 = scmp.ne.s32.totalorder %s266, %s267
    %p278 = scmp.eq.s32.totalorder %s22, 0
    %p279 = por %p277, %p278
    %p280 = scmp.ne.s32.totalorder %s266, %s267
    %p281 = scmp.eq.s32.totalorder %s23, 1
    %p282 = por %p280, %p281
    %p284 = scmp.ne.s32.totalorder %s267, %s283
    %p285 = scmp.eq.s32.totalorder %s23, 0
    %p286 = por %p284, %p285
    %p287 = scmp.le.s32.totalorder 1, %s17
    %p288 = scmp.lt.s32.totalorder %s17, 3
    %p289 = pnand %p287, %p288
    %p290 = pneg %p289
    // Predicated region
    $region9: #{_lambda_.1} parent=5 // pred_check
      _
    $region10: #{_lambda_.1} parent=5 // pred_check_branch
      %292 = sbr.rel (%p289) target = $region12
    $region11: #{_lambda_.1} parent=5 // pred_region
      %s293 = ssub.s32 %s17, 1
      // Predicated region
      $region13: #{_lambda_.1} parent=11 // pred_check
        %p294 = pneg %p64
      $region14: #{_lambda_.1} parent=11 // pred_check_branch
        %296 = sbr.rel (%p294) target = $region16
      $region15: #{_lambda_.1} parent=11 // pred_region
        _
      $region16: #{_lambda_.1} parent=11 // pred_fallthru
        _
      // Predicated region
      $region17: #{_lambda_.1} parent=11 // pred_check
        %p297 = pneg %p85
      $region18: #{_lambda_.1} parent=11 // pred_check_branch
        %299 = sbr.rel (%p297) target = $region20
      $region19: #{_lambda_.1} parent=11 // pred_region
        _
      $region20: #{_lambda_.1} parent=11 // pred_fallthru
        _
      // Predicated region
      $region21: #{_lambda_.1} parent=11 // pred_check
        %p300 = pneg %p106
      $region22: #{_lambda_.1} parent=11 // pred_check_branch
        %302 = sbr.rel (%p300) target = $region24
      $region23: #{_lambda_.1} parent=11 // pred_region
        _
      $region24: #{_lambda_.1} parent=11 // pred_fallthru
        _
      // Predicated region
      $region25: #{_lambda_.1} parent=11 // pred_check
        %p303 = pneg %p127
      $region26: #{_lambda_.1} parent=11 // pred_check_branch
        %305 = sbr.rel (%p303) target = $region28
      $region27: #{_lambda_.1} parent=11 // pred_region
        _
      $region28: #{_lambda_.1} parent=11 // pred_fallthru
        _
      // Predicated region
      $region29: #{_lambda_.1} parent=11 // pred_check
        %p306 = pneg %p148
      $region30: #{_lambda_.1} parent=11 // pred_check_branch
        %308 = sbr.rel (%p306) target = $region32
      $region31: #{_lambda_.1} parent=11 // pred_region
        _
      $region32: #{_lambda_.1} parent=11 // pred_fallthru
        _
      // Predicated region
      $region33: #{_lambda_.1} parent=11 // pred_check
        %p309 = pneg %p169
      $region34: #{_lambda_.1} parent=11 // pred_check_branch
        %311 = sbr.rel (%p309) target = $region36
      $region35: #{_lambda_.1} parent=11 // pred_region
        _
      $region36: #{_lambda_.1} parent=11 // pred_fallthru
        _
      // Predicated region
      $region37: #{_lambda_.1} parent=11 // pred_check
        %p312 = pneg %p190
      $region38: #{_lambda_.1} parent=11 // pred_check_branch
        %314 = sbr.rel (%p312) target = $region40
      $region39: #{_lambda_.1} parent=11 // pred_region
        _
      $region40: #{_lambda_.1} parent=11 // pred_fallthru
        _
      // Predicated region
      $region41: #{_lambda_.1} parent=11 // pred_check
        %p315 = pneg %p211
      $region42: #{_lambda_.1} parent=11 // pred_check_branch
        %317 = sbr.rel (%p315) target = $region44
      $region43: #{_lambda_.1} parent=11 // pred_region
        _
      $region44: #{_lambda_.1} parent=11 // pred_fallthru
        _
      // Predicated region
      $region45: #{_lambda_.1} parent=11 // pred_check
        %p318 = pneg %p232
      $region46: #{_lambda_.1} parent=11 // pred_check_branch
        %320 = sbr.rel (%p318) target = $region48
      $region47: #{_lambda_.1} parent=11 // pred_region
        _
      $region48: #{_lambda_.1} parent=11 // pred_fallthru
        _
      // Predicated region
      $region49: #{_lambda_.1} parent=11 // pred_check
        %p321 = pneg %p253
      $region50: #{_lambda_.1} parent=11 // pred_check_branch
        %323 = sbr.rel (%p321) target = $region52
      $region51: #{_lambda_.1} parent=11 // pred_region
        _
      $region52: #{_lambda_.1} parent=11 // pred_fallthru
        _
    $region12: #{_lambda_.1} parent=5 // pred_fallthru
      _
    %p324 = scmp.lt.s32.totalorder %s17, 2
    // Predicated region
    $region53: #{_lambda_.1} parent=5 // pred_check
      %p325 = pneg %p324
    $region54: #{_lambda_.1} parent=5 // pred_check_branch
      %327 = sbr.rel (%p325) target = $region56
    $region55: #{_lambda_.1} parent=5 // pred_region
      // Predicated region
      $region57: #{_lambda_.1} parent=55 // pred_check
        %p328 = pneg %p37
      $region58: #{_lambda_.1} parent=55 // pred_check_branch
        %330 = sbr.rel (%p328) target = $region60
      $region59: #{_lambda_.1} parent=55 // pred_region
        %p331 = scmp.lt.s32.totalorder %s17, 1
        %s332 = scalar_select %p331, %s17, 1
        %s333 = smul.addr %s332, 118
        %s334 = smul.addr %s333, 8
        %s335 = scalar_lea.vmem %s0, %s334
      $region60: #{_lambda_.1} parent=55 // pred_fallthru
        _
    $region56: #{_lambda_.1} parent=5 // pred_fallthru
      _
    %p336 = scmp.le.s32.totalorder 1, %s17
    %p337 = scmp.lt.s32.totalorder %s17, 3
    %p338 = pnand %p336, %p337
    %p339 = pneg %p338
    // Predicated region
    $region61: #{_lambda_.1} parent=5 // pred_check
      _
    $region62: #{_lambda_.1} parent=5 // pred_check_branch
      %341 = sbr.rel (%p338) target = $region64
    $region63: #{_lambda_.1} parent=5 // pred_region
      %s342 = ssub.s32 %s17, 1
      %p343 = scmp.lt.s32.totalorder %s22, 1
      %s344 = scalar_select %p343, %s22, 1
      %s345 = smul.addr %s344, 118
      %s346 = smul.addr %s345, 8
      %s347 = scalar_lea.vmem %s0, %s346
      %p348 = pneg %p43
      %p349 = pneg %p40
      %p350 = pneg %p64
      %p351 = pneg %p61
      %p352 = pneg %p85
      %p353 = pneg %p82
      %p354 = pneg %p106
      %p355 = pneg %p103
      %p356 = pneg %p127
      %p357 = pneg %p124
      %p358 = pneg %p148
      %p359 = pneg %p145
      %p360 = pneg %p169
      %p361 = pneg %p166
      %p362 = pneg %p190
      %p363 = pneg %p187
      %p364 = pneg %p211
      %p365 = pneg %p208
      %p366 = pneg %p232
      %p367 = pneg %p229
      %p368 = pneg %p253
      %p369 = pneg %p250
      %p370 = pneg %p279
      %p371 = pneg %p276
      %p372 = scmp.lt.s32.totalorder %s22, 1
      %s373 = scalar_select %p372, %s22, 1
      %s374 = smul.addr %s373, 2
      %s375 = scalar_lea.vmem %s11, %s374
      %p376 = scmp.lt.s32.totalorder %s22, 1
      %s377 = scalar_select %p376, %s22, 1
      %s378 = smul.addr %s377, 118
      %s379 = smul.addr %s378, 8
      %s380 = scalar_lea.vmem %s0, %s379
      %p381 = scmp.lt.s32.totalorder %s22, 1
      %s382 = scalar_select %p381, %s22, 1
      %s383 = smul.addr %s382, 2
      %s384 = scalar_lea.vmem %s11, %s383
      %v385 = vld [vmem:[%s380] sm:$0xff]
      %v386 = vld [vmem:[%s380 + $0x8] sm:$0xff]
      %v387 = vld [vmem:[%s380 + $0x10] sm:$0xff]
      %v388 = vld [vmem:[%s380 + $0x18] sm:$0xff]
      %v389 = vld [vmem:[%s380 + $0x20] sm:$0xff]
      %v390 = vld [vmem:[%s380 + $0x28] sm:$0xff]
      %v391 = vld [vmem:[%s380 + $0x30] sm:$0xff]
      %v392 = vld [vmem:[%s380 + $0x38] sm:$0xff]
      %v393 = vld [vmem:[%s380 + $0x40] sm:$0xff]
      %v394 = vld [vmem:[%s380 + $0x48] sm:$0xff]
      %v395 = vld [vmem:[%s380 + $0x50] sm:$0xff]
      %v396 = vld [vmem:[%s380 + $0x58] sm:$0xff]
      %v397 = vld [vmem:[%s380 + $0x60] sm:$0xff]
      %v398 = vld [vmem:[%s380 + $0x68] sm:$0xff]
      %v399 = vld [vmem:[%s380 + $0x70] sm:$0xff]
      %v400 = vld [vmem:[%s380 + $0x78] sm:$0xff]
      %v401 = vld [vmem:[%s380 + $0x80] sm:$0xff]
      %v402 = vld [vmem:[%s380 + $0x88] sm:$0xff]
      %v403 = vld [vmem:[%s380 + $0x90] sm:$0xff]
      %v404 = vld [vmem:[%s380 + $0x98] sm:$0xff]
      %v405 = vld [vmem:[%s380 + $0xa0] sm:$0xff]
      %v406 = vld [vmem:[%s380 + $0xa8] sm:$0xff]
      %v407 = vld [vmem:[%s380 + $0xb0] sm:$0xff]
      %v408 = vld [vmem:[%s380 + $0xb8] sm:$0xff]
      %v409 = vld [vmem:[%s380 + $0xc0] sm:$0xff]
      %v410 = vld [vmem:[%s380 + $0xc8] sm:$0xff]
      %v411 = vld [vmem:[%s380 + $0xd0] sm:$0xff]
      %v412 = vld [vmem:[%s380 + $0xd8] sm:$0xff]
      %v413 = vld [vmem:[%s380 + $0xe0] sm:$0xff]
      %v414 = vld [vmem:[%s380 + $0xe8] sm:$0xff]
      %v415 = vld [vmem:[%s380 + $0xf0] sm:$0xff]
      %v416 = vld [vmem:[%s380 + $0xf8] sm:$0xff]
      %v417 = vld [vmem:[%s380 + $0x100] sm:$0xff]
      %v418 = vld [vmem:[%s380 + $0x108] sm:$0xff]
      %v419 = vld [vmem:[%s380 + $0x110] sm:$0xff]
      %v420 = vld [vmem:[%s380 + $0x118] sm:$0xff]
      %v421 = vld [vmem:[%s380 + $0x120] sm:$0xff]
      %v422 = vld [vmem:[%s380 + $0x128] sm:$0xff]
      %v423 = vld [vmem:[%s380 + $0x130] sm:$0xff]
      %v424 = vld [vmem:[%s380 + $0x138] sm:$0xff]
      %v425 = vld [vmem:[%s380 + $0x140] sm:$0xff]
      %v426 = vld [vmem:[%s380 + $0x148] sm:$0xff]
      %v427 = vld [vmem:[%s380 + $0x150] sm:$0xff]
      %v428 = vld [vmem:[%s380 + $0x158] sm:$0xff]
      %v429 = vld [vmem:[%s380 + $0x160] sm:$0xff]
      %v430 = vld [vmem:[%s380 + $0x168] sm:$0xff]
      %v431 = vld [vmem:[%s380 + $0x170] sm:$0xff]
      %v432 = vld [vmem:[%s380 + $0x178] sm:$0xff]
      %v433 = vld [vmem:[%s380 + $0x180] sm:$0xff]
      %v434 = vld [vmem:[%s380 + $0x188] sm:$0xff]
      %v435 = vld [vmem:[%s380 + $0x190] sm:$0xff]
      %v436 = vld [vmem:[%s380 + $0x198] sm:$0xff]
      %v437 = vld [vmem:[%s380 + $0x1a0] sm:$0xff]
      %v438 = vld [vmem:[%s380 + $0x1a8] sm:$0xff]
      %v439 = vld [vmem:[%s380 + $0x1b0] sm:$0xff]
      %v440 = vld [vmem:[%s380 + $0x1b8] sm:$0xff]
      %v441 = vld [vmem:[%s380 + $0x1c0] sm:$0xff]
      %v442 = vld [vmem:[%s380 + $0x1c8] sm:$0xff]
      %v443 = vld [vmem:[%s380 + $0x1d0] sm:$0xff]
      %v444 = vld [vmem:[%s380 + $0x1d8] sm:$0xff]
      %v445 = vld [vmem:[%s380 + $0x1e0] sm:$0xff]
      %v446 = vld [vmem:[%s380 + $0x1e8] sm:$0xff]
      %v447 = vld [vmem:[%s380 + $0x1f0] sm:$0xff]
      %v448 = vld [vmem:[%s380 + $0x1f8] sm:$0xff]
      %v449 = vld [vmem:[%s380 + $0x200] sm:$0xff]
      %v450 = vld [vmem:[%s380 + $0x208] sm:$0xff]
      %v451 = vld [vmem:[%s380 + $0x210] sm:$0xff]
      %v452 = vld [vmem:[%s380 + $0x218] sm:$0xff]
      %v453 = vld [vmem:[%s380 + $0x220] sm:$0xff]
      %v454 = vld [vmem:[%s380 + $0x228] sm:$0xff]
      %v455 = vld [vmem:[%s380 + $0x230] sm:$0xff]
      %v456 = vld [vmem:[%s380 + $0x238] sm:$0xff]
      %v457 = vld [vmem:[%s380 + $0x240] sm:$0xff]
      %v458 = vld [vmem:[%s380 + $0x248] sm:$0xff]
      %v459 = vld [vmem:[%s380 + $0x250] sm:$0xff]
      %v460 = vld [vmem:[%s380 + $0x258] sm:$0xff]
      %v461 = vld [vmem:[%s380 + $0x260] sm:$0xff]
      %v462 = vld [vmem:[%s380 + $0x268] sm:$0xff]
      %v463 = vld [vmem:[%s380 + $0x270] sm:$0xff]
      %v464 = vld [vmem:[%s380 + $0x278] sm:$0xff]
      %v465 = vld [vmem:[%s380 + $0x280] sm:$0xff]
      %v466 = vld [vmem:[%s380 + $0x288] sm:$0xff]
      %v467 = vld [vmem:[%s380 + $0x290] sm:$0xff]
      %v468 = vld [vmem:[%s380 + $0x298] sm:$0xff]
      %v469 = vld [vmem:[%s380 + $0x2a0] sm:$0xff]
      %v470 = vld [vmem:[%s380 + $0x2a8] sm:$0xff]
      %v471 = vld [vmem:[%s380 + $0x2b0] sm:$0xff]
      %v472 = vld [vmem:[%s380 + $0x2b8] sm:$0xff]
      %v473 = vld [vmem:[%s380 + $0x2c0] sm:$0xff]
      %v474 = vld [vmem:[%s380 + $0x2c8] sm:$0xff]
      %v475 = vld [vmem:[%s380 + $0x2d0] sm:$0xff]
      %v476 = vld [vmem:[%s380 + $0x2d8] sm:$0xff]
      %v477 = vld [vmem:[%s380 + $0x2e0] sm:$0xff]
      %v478 = vld [vmem:[%s380 + $0x2e8] sm:$0xff]
      %v479 = vld [vmem:[%s380 + $0x2f0] sm:$0xff]
      %v480 = vld [vmem:[%s380 + $0x2f8] sm:$0xff]
      %v481 = vld [vmem:[%s380 + $0x300] sm:$0xff]
      %v482 = vld [vmem:[%s380 + $0x308] sm:$0xff]
      %v483 = vld [vmem:[%s380 + $0x310] sm:$0xff]
      %v484 = vld [vmem:[%s380 + $0x318] sm:$0xff]
      %v485 = vld [vmem:[%s380 + $0x320] sm:$0xff]
      %v486 = vld [vmem:[%s380 + $0x328] sm:$0xff]
      %v487 = vld [vmem:[%s380 + $0x330] sm:$0xff]
      %v488 = vld [vmem:[%s380 + $0x338] sm:$0xff]
      %v489 = vld [vmem:[%s380 + $0x340] sm:$0xff]
      %v490 = vld [vmem:[%s380 + $0x348] sm:$0xff]
      %v491 = vld [vmem:[%s380 + $0x350] sm:$0xff]
      %v492 = vld [vmem:[%s380 + $0x358] sm:$0xff]
      %v493 = vld [vmem:[%s380 + $0x360] sm:$0xff]
      %v494 = vld [vmem:[%s380 + $0x368] sm:$0xff]
      %v495 = vld [vmem:[%s380 + $0x370] sm:$0xff]
      %v496 = vld [vmem:[%s380 + $0x378] sm:$0xff]
      %v497 = vld [vmem:[%s380 + $0x380] sm:$0xff]
      %v498 = vld [vmem:[%s380 + $0x388] sm:$0xff]
      %v499 = vld [vmem:[%s380 + $0x390] sm:$0xff]
      %v500 = vld [vmem:[%s380 + $0x398] sm:$0xff]
      %v501 = vld [vmem:[%s380 + $0x3a0] sm:$0xff]
      %v502 = vld [vmem:[%s380 + $0x3a8] sm:$0xf]
      %vm503 = vcmask 7168
      %504 = vst.msk [vmem:[#allocation2] sm:$0xff] %vm503, 0.0
      %505 = vst.msk [vmem:[#allocation2 + $0x8] sm:$0xff] %vm503, 0.0
      %506 = vst.msk [vmem:[#allocation2 + $0x10] sm:$0xff] %vm503, 0.0
      %507 = vst.msk [vmem:[#allocation2 + $0x18] sm:$0xff] %vm503, 0.0
      %508 = vst.msk [vmem:[#allocation2 + $0x20] sm:$0xff] %vm503, 0.0
      %509 = vst.msk [vmem:[#allocation2 + $0x28] sm:$0xff] %vm503, 0.0
      %510 = vst.msk [vmem:[#allocation2 + $0x30] sm:$0xff] %vm503, 0.0
      %511 = vst.msk [vmem:[#allocation2 + $0x38] sm:$0xff] %vm503, 0.0
      %512 = vst.msk [vmem:[#allocation2 + $0x40] sm:$0xff] %vm503, 0.0
      %513 = vst.msk [vmem:[#allocation2 + $0x48] sm:$0xff] %vm503, 0.0
      %514 = vst.msk [vmem:[#allocation2 + $0x50] sm:$0xff] %vm503, 0.0
      %515 = vst.msk [vmem:[#allocation2 + $0x58] sm:$0xff] %vm503, 0.0
      %516 = vst.msk [vmem:[#allocation2 + $0x60] sm:$0xff] %vm503, 0.0
      %517 = vst.msk [vmem:[#allocation2 + $0x68] sm:$0xff] %vm503, 0.0
      %518 = vst.msk [vmem:[#allocation2 + $0x70] sm:$0xff] %vm503, 0.0
      %519 = vst.msk [vmem:[#allocation2 + $0x78] sm:$0xff] %vm503, 0.0
      %520 = vst.msk [vmem:[#allocation2 + $0x80] sm:$0xff] %vm503, 0.0
      %521 = vst.msk [vmem:[#allocation2 + $0x88] sm:$0xff] %vm503, 0.0
      %522 = vst.msk [vmem:[#allocation2 + $0x90] sm:$0xff] %vm503, 0.0
      %523 = vst.msk [vmem:[#allocation2 + $0x98] sm:$0xff] %vm503, 0.0
      %524 = vst.msk [vmem:[#allocation2 + $0xa0] sm:$0xff] %vm503, 0.0
      %525 = vst.msk [vmem:[#allocation2 + $0xa8] sm:$0xff] %vm503, 0.0
      %526 = vst.msk [vmem:[#allocation2 + $0xb0] sm:$0xff] %vm503, 0.0
      %527 = vst.msk [vmem:[#allocation2 + $0xb8] sm:$0xff] %vm503, 0.0
      %528 = vst.msk [vmem:[#allocation2 + $0xc0] sm:$0xff] %vm503, 0.0
      %529 = vst.msk [vmem:[#allocation2 + $0xc8] sm:$0xff] %vm503, 0.0
      %530 = vst.msk [vmem:[#allocation2 + $0xd0] sm:$0xff] %vm503, 0.0
      %531 = vst.msk [vmem:[#allocation2 + $0xd8] sm:$0xff] %vm503, 0.0
      %532 = vst.msk [vmem:[#allocation2 + $0xe0] sm:$0xff] %vm503, 0.0
      %533 = vst.msk [vmem:[#allocation2 + $0xe8] sm:$0xff] %vm503, 0.0
      %534 = vst.msk [vmem:[#allocation2 + $0xf0] sm:$0xff] %vm503, 0.0
      %535 = vst.msk [vmem:[#allocation2 + $0xf8] sm:$0xff] %vm503, 0.0
      %536 = vst.msk [vmem:[#allocation2 + $0x100] sm:$0xff] %vm503, 0.0
      %537 = vst.msk [vmem:[#allocation2 + $0x108] sm:$0xff] %vm503, 0.0
      %538 = vst.msk [vmem:[#allocation2 + $0x110] sm:$0xff] %vm503, 0.0
      %539 = vst.msk [vmem:[#allocation2 + $0x118] sm:$0xff] %vm503, 0.0
      %540 = vst.msk [vmem:[#allocation2 + $0x120] sm:$0xff] %vm503, 0.0
      %541 = vst.msk [vmem:[#allocation2 + $0x128] sm:$0xff] %vm503, 0.0
      %542 = vst.msk [vmem:[#allocation2 + $0x130] sm:$0xff] %vm503, 0.0
      %543 = vst.msk [vmem:[#allocation2 + $0x138] sm:$0xff] %vm503, 0.0
      %544 = vst.msk [vmem:[#allocation2 + $0x140] sm:$0xff] %vm503, 0.0
      %545 = vst.msk [vmem:[#allocation2 + $0x148] sm:$0xff] %vm503, 0.0
      %546 = vst.msk [vmem:[#allocation2 + $0x150] sm:$0xff] %vm503, 0.0
      %547 = vst.msk [vmem:[#allocation2 + $0x158] sm:$0xff] %vm503, 0.0
      %548 = vst.msk [vmem:[#allocation2 + $0x160] sm:$0xff] %vm503, 0.0
      %549 = vst.msk [vmem:[#allocation2 + $0x168] sm:$0xff] %vm503, 0.0
      %550 = vst.msk [vmem:[#allocation2 + $0x170] sm:$0xff] %vm503, 0.0
      %551 = vst.msk [vmem:[#allocation2 + $0x178] sm:$0xff] %vm503, 0.0
      %552 = vst.msk [vmem:[#allocation2 + $0x180] sm:$0xff] %vm503, 0.0
      %553 = vst.msk [vmem:[#allocation2 + $0x188] sm:$0xff] %vm503, 0.0
      %554 = vst.msk [vmem:[#allocation2 + $0x190] sm:$0xff] %vm503, 0.0
      %555 = vst.msk [vmem:[#allocation2 + $0x198] sm:$0xff] %vm503, 0.0
      %556 = vst.msk [vmem:[#allocation2 + $0x1a0] sm:$0xff] %vm503, 0.0
      %557 = vst.msk [vmem:[#allocation2 + $0x1a8] sm:$0xff] %vm503, 0.0
      %558 = vst.msk [vmem:[#allocation2 + $0x1b0] sm:$0xff] %vm503, 0.0
      %559 = vst.msk [vmem:[#allocation2 + $0x1b8] sm:$0xff] %vm503, 0.0
      %560 = vst.msk [vmem:[#allocation2 + $0x1c0] sm:$0xff] %vm503, 0.0
      %561 = vst.msk [vmem:[#allocation2 + $0x1c8] sm:$0xff] %vm503, 0.0
      %562 = vst.msk [vmem:[#allocation2 + $0x1d0] sm:$0xff] %vm503, 0.0
      %563 = vst.msk [vmem:[#allocation2 + $0x1d8] sm:$0xff] %vm503, 0.0
      %564 = vst.msk [vmem:[#allocation2 + $0x1e0] sm:$0xff] %vm503, 0.0
      %565 = vst.msk [vmem:[#allocation2 + $0x1e8] sm:$0xff] %vm503, 0.0
      %566 = vst.msk [vmem:[#allocation2 + $0x1f0] sm:$0xff] %vm503, 0.0
      %567 = vst.msk [vmem:[#allocation2 + $0x1f8] sm:$0xff] %vm503, 0.0
      %568 = vst.msk [vmem:[#allocation2 + $0x200] sm:$0xff] %vm503, 0.0
      %569 = vst.msk [vmem:[#allocation2 + $0x208] sm:$0xff] %vm503, 0.0
      %570 = vst.msk [vmem:[#allocation2 + $0x210] sm:$0xff] %vm503, 0.0
      %571 = vst.msk [vmem:[#allocation2 + $0x218] sm:$0xff] %vm503, 0.0
      %572 = vst.msk [vmem:[#allocation2 + $0x220] sm:$0xff] %vm503, 0.0
      %573 = vst.msk [vmem:[#allocation2 + $0x228] sm:$0xff] %vm503, 0.0
      %574 = vst.msk [vmem:[#allocation2 + $0x230] sm:$0xff] %vm503, 0.0
      %575 = vst.msk [vmem:[#allocation2 + $0x238] sm:$0xff] %vm503, 0.0
      %576 = vst.msk [vmem:[#allocation2 + $0x240] sm:$0xff] %vm503, 0.0
      %577 = vst.msk [vmem:[#allocation2 + $0x248] sm:$0xff] %vm503, 0.0
      %578 = vst.msk [vmem:[#allocation2 + $0x250] sm:$0xff] %vm503, 0.0
      %579 = vst.msk [vmem:[#allocation2 + $0x258] sm:$0xff] %vm503, 0.0
      %580 = vst.msk [vmem:[#allocation2 + $0x260] sm:$0xff] %vm503, 0.0
      %581 = vst.msk [vmem:[#allocation2 + $0x268] sm:$0xff] %vm503, 0.0
      %582 = vst.msk [vmem:[#allocation2 + $0x270] sm:$0xff] %vm503, 0.0
      %583 = vst.msk [vmem:[#allocation2 + $0x278] sm:$0xff] %vm503, 0.0
      %584 = vst.msk [vmem:[#allocation2 + $0x280] sm:$0xff] %vm503, 0.0
      %585 = vst.msk [vmem:[#allocation2 + $0x288] sm:$0xff] %vm503, 0.0
      %586 = vst.msk [vmem:[#allocation2 + $0x290] sm:$0xff] %vm503, 0.0
      %587 = vst.msk [vmem:[#allocation2 + $0x298] sm:$0xff] %vm503, 0.0
      %588 = vst.msk [vmem:[#allocation2 + $0x2a0] sm:$0xff] %vm503, 0.0
      %589 = vst.msk [vmem:[#allocation2 + $0x2a8] sm:$0xff] %vm503, 0.0
      %590 = vst.msk [vmem:[#allocation2 + $0x2b0] sm:$0xff] %vm503, 0.0
      %591 = vst.msk [vmem:[#allocation2 + $0x2b8] sm:$0xff] %vm503, 0.0
      %592 = vst.msk [vmem:[#allocation2 + $0x2c0] sm:$0xff] %vm503, 0.0
      %593 = vst.msk [vmem:[#allocation2 + $0x2c8] sm:$0xff] %vm503, 0.0
      %594 = vst.msk [vmem:[#allocation2 + $0x2d0] sm:$0xff] %vm503, 0.0
      %595 = vst.msk [vmem:[#allocation2 + $0x2d8] sm:$0xff] %vm503, 0.0
      %596 = vst.msk [vmem:[#allocation2 + $0x2e0] sm:$0xff] %vm503, 0.0
      %597 = vst.msk [vmem:[#allocation2 + $0x2e8] sm:$0xff] %vm503, 0.0
      %598 = vst.msk [vmem:[#allocation2 + $0x2f0] sm:$0xff] %vm503, 0.0
      %599 = vst.msk [vmem:[#allocation2 + $0x2f8] sm:$0xff] %vm503, 0.0
      %600 = vst.msk [vmem:[#allocation2 + $0x300] sm:$0xff] %vm503, 0.0
      %601 = vst.msk [vmem:[#allocation2 + $0x308] sm:$0xff] %vm503, 0.0
      %602 = vst.msk [vmem:[#allocation2 + $0x310] sm:$0xff] %vm503, 0.0
      %603 = vst.msk [vmem:[#allocation2 + $0x318] sm:$0xff] %vm503, 0.0
      %604 = vst.msk [vmem:[#allocation2 + $0x320] sm:$0xff] %vm503, 0.0
      %605 = vst.msk [vmem:[#allocation2 + $0x328] sm:$0xff] %vm503, 0.0
      %606 = vst.msk [vmem:[#allocation2 + $0x330] sm:$0xff] %vm503, 0.0
      %607 = vst.msk [vmem:[#allocation2 + $0x338] sm:$0xff] %vm503, 0.0
      %608 = vst.msk [vmem:[#allocation2 + $0x340] sm:$0xff] %vm503, 0.0
      %609 = vst.msk [vmem:[#allocation2 + $0x348] sm:$0xff] %vm503, 0.0
      %610 = vst.msk [vmem:[#allocation2 + $0x350] sm:$0xff] %vm503, 0.0
      %611 = vst.msk [vmem:[#allocation2 + $0x358] sm:$0xff] %vm503, 0.0
      %612 = vst.msk [vmem:[#allocation2 + $0x360] sm:$0xff] %vm503, 0.0
      %613 = vst.msk [vmem:[#allocation2 + $0x368] sm:$0xff] %vm503, 0.0
      %614 = vst.msk [vmem:[#allocation2 + $0x370] sm:$0xff] %vm503, 0.0
      %615 = vst.msk [vmem:[#allocation2 + $0x378] sm:$0xff] %vm503, 0.0
      %616 = vst.msk [vmem:[#allocation2 + $0x380] sm:$0xff] %vm503, 0.0
      %617 = vst.msk [vmem:[#allocation2 + $0x388] sm:$0xff] %vm503, 0.0
      %618 = vst.msk [vmem:[#allocation2 + $0x390] sm:$0xff] %vm503, 0.0
      %619 = vst.msk [vmem:[#allocation2 + $0x398] sm:$0xff] %vm503, 0.0
      %620 = vst.msk [vmem:[#allocation2 + $0x3a0] sm:$0xff] %vm503, 0.0
      %621 = vst.msk [vmem:[#allocation2 + $0x3a8] sm:$0xff] %vm503, 0.0
      %622 = vst.msk [vmem:[#allocation2 + $0x3b0] sm:$0xff] %vm503, 0.0
      %623 = vst.msk [vmem:[#allocation2 + $0x8] sm:$0xff] %vm503, %v385
      %624 = vst.msk [vmem:[#allocation2 + $0x10] sm:$0xff] %vm503, %v386
      %625 = vst.msk [vmem:[#allocation2 + $0x18] sm:$0xff] %vm503, %v387
      %626 = vst.msk [vmem:[#allocation2 + $0x20] sm:$0xff] %vm503, %v388
      %627 = vst.msk [vmem:[#allocation2 + $0x28] sm:$0xff] %vm503, %v389
      %628 = vst.msk [vmem:[#allocation2 + $0x30] sm:$0xff] %vm503, %v390
      %629 = vst.msk [vmem:[#allocation2 + $0x38] sm:$0xff] %vm503, %v391
      %630 = vst.msk [vmem:[#allocation2 + $0x40] sm:$0xff] %vm503, %v392
      %631 = vst.msk [vmem:[#allocation2 + $0x48] sm:$0xff] %vm503, %v393
      %632 = vst.msk [vmem:[#allocation2 + $0x50] sm:$0xff] %vm503, %v394
      %633 = vst.msk [vmem:[#allocation2 + $0x58] sm:$0xff] %vm503, %v395
      %634 = vst.msk [vmem:[#allocation2 + $0x60] sm:$0xff] %vm503, %v396
      %635 = vst.msk [vmem:[#allocation2 + $0x68] sm:$0xff] %vm503, %v397
      %636 = vst.msk [vmem:[#allocation2 + $0x70] sm:$0xff] %vm503, %v398
      %637 = vst.msk [vmem:[#allocation2 + $0x78] sm:$0xff] %vm503, %v399
      %638 = vst.msk [vmem:[#allocation2 + $0x80] sm:$0xff] %vm503, %v400
      %639 = vst.msk [vmem:[#allocation2 + $0x88] sm:$0xff] %vm503, %v401
      %640 = vst.msk [vmem:[#allocation2 + $0x90] sm:$0xff] %vm503, %v402
      %641 = vst.msk [vmem:[#allocation2 + $0x98] sm:$0xff] %vm503, %v403
      %642 = vst.msk [vmem:[#allocation2 + $0xa0] sm:$0xff] %vm503, %v404
      %643 = vst.msk [vmem:[#allocation2 + $0xa8] sm:$0xff] %vm503, %v405
      %644 = vst.msk [vmem:[#allocation2 + $0xb0] sm:$0xff] %vm503, %v406
      %645 = vst.msk [vmem:[#allocation2 + $0xb8] sm:$0xff] %vm503, %v407
      %646 = vst.msk [vmem:[#allocation2 + $0xc0] sm:$0xff] %vm503, %v408
      %647 = vst.msk [vmem:[#allocation2 + $0xc8] sm:$0xff] %vm503, %v409
      %648 = vst.msk [vmem:[#allocation2 + $0xd0] sm:$0xff] %vm503, %v410
      %649 = vst.msk [vmem:[#allocation2 + $0xd8] sm:$0xff] %vm503, %v411
      %650 = vst.msk [vmem:[#allocation2 + $0xe0] sm:$0xff] %vm503, %v412
      %651 = vst.msk [vmem:[#allocation2 + $0xe8] sm:$0xff] %vm503, %v413
      %652 = vst.msk [vmem:[#allocation2 + $0xf0] sm:$0xff] %vm503, %v414
      %653 = vst.msk [vmem:[#allocation2 + $0xf8] sm:$0xff] %vm503, %v415
      %654 = vst.msk [vmem:[#allocation2 + $0x100] sm:$0xff] %vm503, %v416
      %655 = vst.msk [vmem:[#allocation2 + $0x108] sm:$0xff] %vm503, %v417
      %656 = vst.msk [vmem:[#allocation2 + $0x110] sm:$0xff] %vm503, %v418
      %657 = vst.msk [vmem:[#allocation2 + $0x118] sm:$0xff] %vm503, %v419
      %658 = vst.msk [vmem:[#allocation2 + $0x120] sm:$0xff] %vm503, %v420
      %659 = vst.msk [vmem:[#allocation2 + $0x128] sm:$0xff] %vm503, %v421
      %660 = vst.msk [vmem:[#allocation2 + $0x130] sm:$0xff] %vm503, %v422
      %661 = vst.msk [vmem:[#allocation2 + $0x138] sm:$0xff] %vm503, %v423
      %662 = vst.msk [vmem:[#allocation2 + $0x140] sm:$0xff] %vm503, %v424
      %663 = vst.msk [vmem:[#allocation2 + $0x148] sm:$0xff] %vm503, %v425
      %664 = vst.msk [vmem:[#allocation2 + $0x150] sm:$0xff] %vm503, %v426
      %665 = vst.msk [vmem:[#allocation2 + $0x158] sm:$0xff] %vm503, %v427
      %666 = vst.msk [vmem:[#allocation2 + $0x160] sm:$0xff] %vm503, %v428
      %667 = vst.msk [vmem:[#allocation2 + $0x168] sm:$0xff] %vm503, %v429
      %668 = vst.msk [vmem:[#allocation2 + $0x170] sm:$0xff] %vm503, %v430
      %669 = vst.msk [vmem:[#allocation2 + $0x178] sm:$0xff] %vm503, %v431
      %670 = vst.msk [vmem:[#allocation2 + $0x180] sm:$0xff] %vm503, %v432
      %671 = vst.msk [vmem:[#allocation2 + $0x188] sm:$0xff] %vm503, %v433
      %672 = vst.msk [vmem:[#allocation2 + $0x190] sm:$0xff] %vm503, %v434
      %673 = vst.msk [vmem:[#allocation2 + $0x198] sm:$0xff] %vm503, %v435
      %674 = vst.msk [vmem:[#allocation2 + $0x1a0] sm:$0xff] %vm503, %v436
      %675 = vst.msk [vmem:[#allocation2 + $0x1a8] sm:$0xff] %vm503, %v437
      %676 = vst.msk [vmem:[#allocation2 + $0x1b0] sm:$0xff] %vm503, %v438
      %677 = vst.msk [vmem:[#allocation2 + $0x1b8] sm:$0xff] %vm503, %v439
      %678 = vst.msk [vmem:[#allocation2 + $0x1c0] sm:$0xff] %vm503, %v440
      %679 = vst.msk [vmem:[#allocation2 + $0x1c8] sm:$0xff] %vm503, %v441
      %680 = vst.msk [vmem:[#allocation2 + $0x1d0] sm:$0xff] %vm503, %v442
      %681 = vst.msk [vmem:[#allocation2 + $0x1d8] sm:$0xff] %vm503, %v443
      %682 = vst.msk [vmem:[#allocation2 + $0x1e0] sm:$0xff] %vm503, %v444
      %683 = vst.msk [vmem:[#allocation2 + $0x1e8] sm:$0xff] %vm503, %v445
      %684 = vst.msk [vmem:[#allocation2 + $0x1f0] sm:$0xff] %vm503, %v446
      %685 = vst.msk [vmem:[#allocation2 + $0x1f8] sm:$0xff] %vm503, %v447
      %686 = vst.msk [vmem:[#allocation2 + $0x200] sm:$0xff] %vm503, %v448
      %687 = vst.msk [vmem:[#allocation2 + $0x208] sm:$0xff] %vm503, %v449
      %688 = vst.msk [vmem:[#allocation2 + $0x210] sm:$0xff] %vm503, %v450
      %689 = vst.msk [vmem:[#allocation2 + $0x218] sm:$0xff] %vm503, %v451
      %690 = vst.msk [vmem:[#allocation2 + $0x220] sm:$0xff] %vm503, %v452
      %691 = vst.msk [vmem:[#allocation2 + $0x228] sm:$0xff] %vm503, %v453
      %692 = vst.msk [vmem:[#allocation2 + $0x230] sm:$0xff] %vm503, %v454
      %693 = vst.msk [vmem:[#allocation2 + $0x238] sm:$0xff] %vm503, %v455
      %694 = vst.msk [vmem:[#allocation2 + $0x240] sm:$0xff] %vm503, %v456
      %695 = vst.msk [vmem:[#allocation2 + $0x248] sm:$0xff] %vm503, %v457
      %696 = vst.msk [vmem:[#allocation2 + $0x250] sm:$0xff] %vm503, %v458
      %697 = vst.msk [vmem:[#allocation2 + $0x258] sm:$0xff] %vm503, %v459
      %698 = vst.msk [vmem:[#allocation2 + $0x260] sm:$0xff] %vm503, %v460
      %699 = vst.msk [vmem:[#allocation2 + $0x268] sm:$0xff] %vm503, %v461
      %700 = vst.msk [vmem:[#allocation2 + $0x270] sm:$0xff] %vm503, %v462
      %701 = vst.msk [vmem:[#allocation2 + $0x278] sm:$0xff] %vm503, %v463
      %702 = vst.msk [vmem:[#allocation2 + $0x280] sm:$0xff] %vm503, %v464
      %703 = vst.msk [vmem:[#allocation2 + $0x288] sm:$0xff] %vm503, %v465
      %704 = vst.msk [vmem:[#allocation2 + $0x290] sm:$0xff] %vm503, %v466
      %705 = vst.msk [vmem:[#allocation2 + $0x298] sm:$0xff] %vm503, %v467
      %706 = vst.msk [vmem:[#allocation2 + $0x2a0] sm:$0xff] %vm503, %v468
      %707 = vst.msk [vmem:[#allocation2 + $0x2a8] sm:$0xff] %vm503, %v469
      %708 = vst.msk [vmem:[#allocation2 + $0x2b0] sm:$0xff] %vm503, %v470
      %709 = vst.msk [vmem:[#allocation2 + $0x2b8] sm:$0xff] %vm503, %v471
      %710 = vst.msk [vmem:[#allocation2 + $0x2c0] sm:$0xff] %vm503, %v472
      %711 = vst.msk [vmem:[#allocation2 + $0x2c8] sm:$0xff] %vm503, %v473
      %712 = vst.msk [vmem:[#allocation2 + $0x2d0] sm:$0xff] %vm503, %v474
      %713 = vst.msk [vmem:[#allocation2 + $0x2d8] sm:$0xff] %vm503, %v475
      %714 = vst.msk [vmem:[#allocation2 + $0x2e0] sm:$0xff] %vm503, %v476
      %715 = vst.msk [vmem:[#allocation2 + $0x2e8] sm:$0xff] %vm503, %v477
      %716 = vst.msk [vmem:[#allocation2 + $0x2f0] sm:$0xff] %vm503, %v478
      %717 = vst.msk [vmem:[#allocation2 + $0x2f8] sm:$0xff] %vm503, %v479
      %718 = vst.msk [vmem:[#allocation2 + $0x300] sm:$0xff] %vm503, %v480
      %719 = vst.msk [vmem:[#allocation2 + $0x308] sm:$0xff] %vm503, %v481
      %720 = vst.msk [vmem:[#allocation2 + $0x310] sm:$0xff] %vm503, %v482
      %721 = vst.msk [vmem:[#allocation2 + $0x318] sm:$0xff] %vm503, %v483
      %722 = vst.msk [vmem:[#allocation2 + $0x320] sm:$0xff] %vm503, %v484
      %723 = vst.msk [vmem:[#allocation2 + $0x328] sm:$0xff] %vm503, %v485
      %724 = vst.msk [vmem:[#allocation2 + $0x330] sm:$0xff] %vm503, %v486
      %725 = vst.msk [vmem:[#allocation2 + $0x338] sm:$0xff] %vm503, %v487
      %726 = vst.msk [vmem:[#allocation2 + $0x340] sm:$0xff] %vm503, %v488
      %727 = vst.msk [vmem:[#allocation2 + $0x348] sm:$0xff] %vm503, %v489
      %728 = vst.msk [vmem:[#allocation2 + $0x350] sm:$0xff] %vm503, %v490
      %729 = vst.msk [vmem:[#allocation2 + $0x358] sm:$0xff] %vm503, %v491
      %730 = vst.msk [vmem:[#allocation2 + $0x360] sm:$0xff] %vm503, %v492
      %731 = vst.msk [vmem:[#allocation2 + $0x368] sm:$0xff] %vm503, %v493
      %732 = vst.msk [vmem:[#allocation2 + $0x370] sm:$0xff] %vm503, %v494
      %733 = vst.msk [vmem:[#allocation2 + $0x378] sm:$0xff] %vm503, %v495
      %734 = vst.msk [vmem:[#allocation2 + $0x380] sm:$0xff] %vm503, %v496
      %735 = vst.msk [vmem:[#allocation2 + $0x388] sm:$0xff] %vm503, %v497
      %736 = vst.msk [vmem:[#allocation2 + $0x390] sm:$0xff] %vm503, %v498
      %737 = vst.msk [vmem:[#allocation2 + $0x398] sm:$0xff] %vm503, %v499
      %738 = vst.msk [vmem:[#allocation2 + $0x3a0] sm:$0xff] %vm503, %v500
      %739 = vst.msk [vmem:[#allocation2 + $0x3a8] sm:$0xff] %vm503, %v501
      %vm740 = vcmask 3072
      %741 = vst.msk [vmem:[#allocation2 + $0x3b0] sm:$0xf] %vm740, %v502
      %s742 = scalar_lea.vmem [#allocation2], 4
      %v743 = vld [vmem:[%s742] ss:$8 sm:$0xf]
      %v744 = vld [vmem:[%s742] ss:$8 sm:$0xf0]
      %v745 = vor.u32 %v743, %v744
      %s746 = scalar_lea.vmem [#allocation2], 68
      %v747 = vld [vmem:[%s746] ss:$8 sm:$0xf]
      %v748 = vld [vmem:[%s746] ss:$8 sm:$0xf0]
      %v749 = vor.u32 %v747, %v748
      %s750 = scalar_lea.vmem [#allocation2], 132
      %v751 = vld [vmem:[%s750] ss:$8 sm:$0xf]
      %v752 = vld [vmem:[%s750] ss:$8 sm:$0xf0]
      %v753 = vor.u32 %v751, %v752
      %s754 = scalar_lea.vmem [#allocation2], 196
      %v755 = vld [vmem:[%s754] ss:$8 sm:$0xf]
      %v756 = vld [vmem:[%s754] ss:$8 sm:$0xf0]
      %v757 = vor.u32 %v755, %v756
      %s758 = scalar_lea.vmem [#allocation2], 260
      %v759 = vld [vmem:[%s758] ss:$8 sm:$0xf]
      %v760 = vld [vmem:[%s758] ss:$8 sm:$0xf0]
      %v761 = vor.u32 %v759, %v760
      %s762 = scalar_lea.vmem [#allocation2], 324
      %v763 = vld [vmem:[%s762] ss:$8 sm:$0xf]
      %v764 = vld [vmem:[%s762] ss:$8 sm:$0xf0]
      %v765 = vor.u32 %v763, %v764
      %s766 = scalar_lea.vmem [#allocation2], 388
      %v767 = vld [vmem:[%s766] ss:$8 sm:$0xf]
      %v768 = vld [vmem:[%s766] ss:$8 sm:$0xf0]
      %v769 = vor.u32 %v767, %v768
      %s770 = scalar_lea.vmem [#allocation2], 452
      %v771 = vld [vmem:[%s770] ss:$8 sm:$0xf]
      %v772 = vld [vmem:[%s770] ss:$8 sm:$0xf0]
      %v773 = vor.u32 %v771, %v772
      %s774 = scalar_lea.vmem [#allocation2], 516
      %v775 = vld [vmem:[%s774] ss:$8 sm:$0xf]
      %v776 = vld [vmem:[%s774] ss:$8 sm:$0xf0]
      %v777 = vor.u32 %v775, %v776
      %s778 = scalar_lea.vmem [#allocation2], 580
      %v779 = vld [vmem:[%s778] ss:$8 sm:$0xf]
      %v780 = vld [vmem:[%s778] ss:$8 sm:$0xf0]
      %v781 = vor.u32 %v779, %v780
      %s782 = scalar_lea.vmem [#allocation2], 644
      %v783 = vld [vmem:[%s782] ss:$8 sm:$0xf]
      %v784 = vld [vmem:[%s782] ss:$8 sm:$0xf0]
      %v785 = vor.u32 %v783, %v784
      %s786 = scalar_lea.vmem [#allocation2], 708
      %v787 = vld [vmem:[%s786] ss:$8 sm:$0xf]
      %v788 = vld [vmem:[%s786] ss:$8 sm:$0xf0]
      %v789 = vor.u32 %v787, %v788
      %s790 = scalar_lea.vmem [#allocation2], 772
      %v791 = vld [vmem:[%s790] ss:$8 sm:$0xf]
      %v792 = vld [vmem:[%s790] ss:$8 sm:$0xf0]
      %v793 = vor.u32 %v791, %v792
      %s794 = scalar_lea.vmem [#allocation2], 836
      %v795 = vld [vmem:[%s794] ss:$8 sm:$0xf]
      %v796 = vld [vmem:[%s794] ss:$8 sm:$0xf0]
      %v797 = vor.u32 %v795, %v796
      %s798 = scalar_lea.vmem [#allocation2], 900
      %v799 = vld [vmem:[%s798] ss:$8 sm:$0xf]
      %v800 = vld [vmem:[%s798] ss:$8 sm:$0x30]
      %v801 = vor.u32 %v799, %v800
      %s802 = scalar_lea.vmem [#allocation2], 8
      %v803 = vld [vmem:[%s802] ss:$8 sm:$0xf]
      %v804 = vld [vmem:[%s802] ss:$8 sm:$0xf0]
      %v805 = vor.u32 %v803, %v804
      %s806 = scalar_lea.vmem [#allocation2], 72
      %v807 = vld [vmem:[%s806] ss:$8 sm:$0xf]
      %v808 = vld [vmem:[%s806] ss:$8 sm:$0xf0]
      %v809 = vor.u32 %v807, %v808
      %s810 = scalar_lea.vmem [#allocation2], 136
      %v811 = vld [vmem:[%s810] ss:$8 sm:$0xf]
      %v812 = vld [vmem:[%s810] ss:$8 sm:$0xf0]
      %v813 = vor.u32 %v811, %v812
      %s814 = scalar_lea.vmem [#allocation2], 200
      %v815 = vld [vmem:[%s814] ss:$8 sm:$0xf]
      %v816 = vld [vmem:[%s814] ss:$8 sm:$0xf0]
      %v817 = vor.u32 %v815, %v816
      %s818 = scalar_lea.vmem [#allocation2], 264
      %v819 = vld [vmem:[%s818] ss:$8 sm:$0xf]
      %v820 = vld [vmem:[%s818] ss:$8 sm:$0xf0]
      %v821 = vor.u32 %v819, %v820
      %s822 = scalar_lea.vmem [#allocation2], 328
      %v823 = vld [vmem:[%s822] ss:$8 sm:$0xf]
      %v824 = vld [vmem:[%s822] ss:$8 sm:$0xf0]
      %v825 = vor.u32 %v823, %v824
      %s826 = scalar_lea.vmem [#allocation2], 392
      %v827 = vld [vmem:[%s826] ss:$8 sm:$0xf]
      %v828 = vld [vmem:[%s826] ss:$8 sm:$0xf0]
      %v829 = vor.u32 %v827, %v828
      %s830 = scalar_lea.vmem [#allocation2], 456
      %v831 = vld [vmem:[%s830] ss:$8 sm:$0xf]
      %v832 = vld [vmem:[%s830] ss:$8 sm:$0xf0]
      %v833 = vor.u32 %v831, %v832
      %s834 = scalar_lea.vmem [#allocation2], 520
      %v835 = vld [vmem:[%s834] ss:$8 sm:$0xf]
      %v836 = vld [vmem:[%s834] ss:$8 sm:$0xf0]
      %v837 = vor.u32 %v835, %v836
      %s838 = scalar_lea.vmem [#allocation2], 584
      %v839 = vld [vmem:[%s838] ss:$8 sm:$0xf]
      %v840 = vld [vmem:[%s838] ss:$8 sm:$0xf0]
      %v841 = vor.u32 %v839, %v840
      %s842 = scalar_lea.vmem [#allocation2], 648
      %v843 = vld [vmem:[%s842] ss:$8 sm:$0xf]
      %v844 = vld [vmem:[%s842] ss:$8 sm:$0xf0]
      %v845 = vor.u32 %v843, %v844
      %s846 = scalar_lea.vmem [#allocation2], 712
      %v847 = vld [vmem:[%s846] ss:$8 sm:$0xf]
      %v848 = vld [vmem:[%s846] ss:$8 sm:$0xf0]
      %v849 = vor.u32 %v847, %v848
      %s850 = scalar_lea.vmem [#allocation2], 776
      %v851 = vld [vmem:[%s850] ss:$8 sm:$0xf]
      %v852 = vld [vmem:[%s850] ss:$8 sm:$0xf0]
      %v853 = vor.u32 %v851, %v852
      %s854 = scalar_lea.vmem [#allocation2], 840
      %v855 = vld [vmem:[%s854] ss:$8 sm:$0xf]
      %v856 = vld [vmem:[%s854] ss:$8 sm:$0xf0]
      %v857 = vor.u32 %v855, %v856
      %s858 = scalar_lea.vmem [#allocation2], 904
      %v859 = vld [vmem:[%s858] ss:$8 sm:$0xf]
      %v860 = vld [vmem:[%s858] ss:$8 sm:$0x30]
      %v861 = vor.u32 %v859, %v860
      %v862 = vld [vmem:[%s1] sm:$0x1]
      %864 = vset.pattern.permute.xlu0 0
      %865 = vperm.xlu0 %864, %v745
      %v866 = vpop.permute.xlu0 %865
      %869 = vset.pattern.permute.xlu0 0
      %870 = vperm.xlu0 %869, %v749
      %v871 = vpop.permute.xlu0 %870
      %874 = vset.pattern.permute.xlu0 0
      %875 = vperm.xlu0 %874, %v753
      %v876 = vpop.permute.xlu0 %875
      %879 = vset.pattern.permute.xlu0 0
      %880 = vperm.xlu0 %879, %v757
      %v881 = vpop.permute.xlu0 %880
      %884 = vset.pattern.permute.xlu0 0
      %885 = vperm.xlu0 %884, %v761
      %v886 = vpop.permute.xlu0 %885
      %889 = vset.pattern.permute.xlu0 0
      %890 = vperm.xlu0 %889, %v765
      %v891 = vpop.permute.xlu0 %890
      %894 = vset.pattern.permute.xlu0 0
      %895 = vperm.xlu0 %894, %v769
      %v896 = vpop.permute.xlu0 %895
      %899 = vset.pattern.permute.xlu0 0
      %900 = vperm.xlu0 %899, %v773
      %v901 = vpop.permute.xlu0 %900
      %904 = vset.pattern.permute.xlu0 0
      %905 = vperm.xlu0 %904, %v777
      %v906 = vpop.permute.xlu0 %905
      %909 = vset.pattern.permute.xlu0 0
      %910 = vperm.xlu0 %909, %v781
      %v911 = vpop.permute.xlu0 %910
      %914 = vset.pattern.permute.xlu0 0
      %915 = vperm.xlu0 %914, %v785
      %v916 = vpop.permute.xlu0 %915
      %919 = vset.pattern.permute.xlu0 0
      %920 = vperm.xlu0 %919, %v789
      %v921 = vpop.permute.xlu0 %920
      %924 = vset.pattern.permute.xlu0 0
      %925 = vperm.xlu0 %924, %v793
      %v926 = vpop.permute.xlu0 %925
      %929 = vset.pattern.permute.xlu0 0
      %930 = vperm.xlu0 %929, %v797
      %v931 = vpop.permute.xlu0 %930
      %934 = vset.pattern.permute.xlu0 0
      %935 = vperm.xlu0 %934, %v801
      %v936 = vpop.permute.xlu0 %935
      %v938 = vlaneseq
      %v939 = vshrl.u32 %v938, 7
      %v940 = vsub.s32 0, %v939
      %v941 = vrot.slane %v862, %v940
      %v942 = vmul.f32 %v866, %v941
      %v943 = vmul.f32 %v871, %v941
      %v944 = vmul.f32 %v876, %v941
      %v945 = vmul.f32 %v881, %v941
      %v946 = vmul.f32 %v886, %v941
      %v947 = vmul.f32 %v891, %v941
      %v948 = vmul.f32 %v896, %v941
      %v949 = vmul.f32 %v901, %v941
      %v950 = vmul.f32 %v906, %v941
      %v951 = vmul.f32 %v911, %v941
      %v952 = vmul.f32 %v916, %v941
      %v953 = vmul.f32 %v921, %v941
      %v954 = vmul.f32 %v926, %v941
      %v955 = vmul.f32 %v931, %v941
      %v956 = vmul.f32 %v936, %v941
      %v957 = vadd.f32 %v942, 0.0
      %v958 = vadd.f32 %v943, 0.0
      %v959 = vadd.f32 %v944, 0.0
      %v960 = vadd.f32 %v945, 0.0
      %v961 = vadd.f32 %v946, 0.0
      %v962 = vadd.f32 %v947, 0.0
      %v963 = vadd.f32 %v948, 0.0
      %v964 = vadd.f32 %v949, 0.0
      %v965 = vadd.f32 %v950, 0.0
      %v966 = vadd.f32 %v951, 0.0
      %v967 = vadd.f32 %v952, 0.0
      %v968 = vadd.f32 %v953, 0.0
      %v969 = vadd.f32 %v954, 0.0
      %v970 = vadd.f32 %v955, 0.0
      %v971 = vadd.f32 %v956, 0.0
      %973 = vset.pattern.permute.xlu0 0
      %974 = vperm.xlu0 %973, %v805
      %v975 = vpop.permute.xlu0 %974
      %978 = vset.pattern.permute.xlu0 0
      %979 = vperm.xlu0 %978, %v809
      %v980 = vpop.permute.xlu0 %979
      %983 = vset.pattern.permute.xlu0 0
      %984 = vperm.xlu0 %983, %v813
      %v985 = vpop.permute.xlu0 %984
      %988 = vset.pattern.permute.xlu0 0
      %989 = vperm.xlu0 %988, %v817
      %v990 = vpop.permute.xlu0 %989
      %993 = vset.pattern.permute.xlu0 0
      %994 = vperm.xlu0 %993, %v821
      %v995 = vpop.permute.xlu0 %994
      %998 = vset.pattern.permute.xlu0 0
      %999 = vperm.xlu0 %998, %v825
      %v1000 = vpop.permute.xlu0 %999
      %1003 = vset.pattern.permute.xlu0 0
      %1004 = vperm.xlu0 %1003, %v829
      %v1005 = vpop.permute.xlu0 %1004
      %1008 = vset.pattern.permute.xlu0 0
      %1009 = vperm.xlu0 %1008, %v833
      %v1010 = vpop.permute.xlu0 %1009
      %1013 = vset.pattern.permute.xlu0 0
      %1014 = vperm.xlu0 %1013, %v837
      %v1015 = vpop.permute.xlu0 %1014
      %1018 = vset.pattern.permute.xlu0 0
      %1019 = vperm.xlu0 %1018, %v841
      %v1020 = vpop.permute.xlu0 %1019
      %1023 = vset.pattern.permute.xlu0 0
      %1024 = vperm.xlu0 %1023, %v845
      %v1025 = vpop.permute.xlu0 %1024
      %1028 = vset.pattern.permute.xlu0 0
      %1029 = vperm.xlu0 %1028, %v849
      %v1030 = vpop.permute.xlu0 %1029
      %1033 = vset.pattern.permute.xlu0 0
      %1034 = vperm.xlu0 %1033, %v853
      %v1035 = vpop.permute.xlu0 %1034
      %1038 = vset.pattern.permute.xlu0 0
      %1039 = vperm.xlu0 %1038, %v857
      %v1040 = vpop.permute.xlu0 %1039
      %1043 = vset.pattern.permute.xlu0 0
      %1044 = vperm.xlu0 %1043, %v861
      %v1045 = vpop.permute.xlu0 %1044
      %v1047 = vmul.f32 %v975, %v941
      %v1048 = vmul.f32 %v980, %v941
      %v1049 = vmul.f32 %v985, %v941
      %v1050 = vmul.f32 %v990, %v941
      %v1051 = vmul.f32 %v995, %v941
      %v1052 = vmul.f32 %v1000, %v941
      %v1053 = vmul.f32 %v1005, %v941
      %v1054 = vmul.f32 %v1010, %v941
      %v1055 = vmul.f32 %v1015, %v941
      %v1056 = vmul.f32 %v1020, %v941
      %v1057 = vmul.f32 %v1025, %v941
      %v1058 = vmul.f32 %v1030, %v941
      %v1059 = vmul.f32 %v1035, %v941
      %v1060 = vmul.f32 %v1040, %v941
      %v1061 = vmul.f32 %v1045, %v941
      %v1062 = vadd.f32 %v1047, 0.0
      %v1063 = vadd.f32 %v1048, 0.0
      %v1064 = vadd.f32 %v1049, 0.0
      %v1065 = vadd.f32 %v1050, 0.0
      %v1066 = vadd.f32 %v1051, 0.0
      %v1067 = vadd.f32 %v1052, 0.0
      %v1068 = vadd.f32 %v1053, 0.0
      %v1069 = vadd.f32 %v1054, 0.0
      %v1070 = vadd.f32 %v1055, 0.0
      %v1071 = vadd.f32 %v1056, 0.0
      %v1072 = vadd.f32 %v1057, 0.0
      %v1073 = vadd.f32 %v1058, 0.0
      %v1074 = vadd.f32 %v1059, 0.0
      %v1075 = vadd.f32 %v1060, 0.0
      %v1076 = vadd.f32 %v1061, 0.0
      %s1077 = scalar_lea.vmem [#allocation2], 5
      %v1078 = vld [vmem:[%s1077] ss:$8 sm:$0xf]
      %v1079 = vld [vmem:[%s1077] ss:$8 sm:$0xf0]
      %v1080 = vor.u32 %v1078, %v1079
      %s1081 = scalar_lea.vmem [#allocation2], 69
      %v1082 = vld [vmem:[%s1081] ss:$8 sm:$0xf]
      %v1083 = vld [vmem:[%s1081] ss:$8 sm:$0xf0]
      %v1084 = vor.u32 %v1082, %v1083
      %s1085 = scalar_lea.vmem [#allocation2], 133
      %v1086 = vld [vmem:[%s1085] ss:$8 sm:$0xf]
      %v1087 = vld [vmem:[%s1085] ss:$8 sm:$0xf0]
      %v1088 = vor.u32 %v1086, %v1087
      %s1089 = scalar_lea.vmem [#allocation2], 197
      %v1090 = vld [vmem:[%s1089] ss:$8 sm:$0xf]
      %v1091 = vld [vmem:[%s1089] ss:$8 sm:$0xf0]
      %v1092 = vor.u32 %v1090, %v1091
      %s1093 = scalar_lea.vmem [#allocation2], 261
      %v1094 = vld [vmem:[%s1093] ss:$8 sm:$0xf]
      %v1095 = vld [vmem:[%s1093] ss:$8 sm:$0xf0]
      %v1096 = vor.u32 %v1094, %v1095
      %s1097 = scalar_lea.vmem [#allocation2], 325
      %v1098 = vld [vmem:[%s1097] ss:$8 sm:$0xf]
      %v1099 = vld [vmem:[%s1097] ss:$8 sm:$0xf0]
      %v1100 = vor.u32 %v1098, %v1099
      %s1101 = scalar_lea.vmem [#allocation2], 389
      %v1102 = vld [vmem:[%s1101] ss:$8 sm:$0xf]
      %v1103 = vld [vmem:[%s1101] ss:$8 sm:$0xf0]
      %v1104 = vor.u32 %v1102, %v1103
      %s1105 = scalar_lea.vmem [#allocation2], 453
      %v1106 = vld [vmem:[%s1105] ss:$8 sm:$0xf]
      %v1107 = vld [vmem:[%s1105] ss:$8 sm:$0xf0]
      %v1108 = vor.u32 %v1106, %v1107
      %s1109 = scalar_lea.vmem [#allocation2], 517
      %v1110 = vld [vmem:[%s1109] ss:$8 sm:$0xf]
      %v1111 = vld [vmem:[%s1109] ss:$8 sm:$0xf0]
      %v1112 = vor.u32 %v1110, %v1111
      %s1113 = scalar_lea.vmem [#allocation2], 581
      %v1114 = vld [vmem:[%s1113] ss:$8 sm:$0xf]
      %v1115 = vld [vmem:[%s1113] ss:$8 sm:$0xf0]
      %v1116 = vor.u32 %v1114, %v1115
      %s1117 = scalar_lea.vmem [#allocation2], 645
      %v1118 = vld [vmem:[%s1117] ss:$8 sm:$0xf]
      %v1119 = vld [vmem:[%s1117] ss:$8 sm:$0xf0]
      %v1120 = vor.u32 %v1118, %v1119
      %s1121 = scalar_lea.vmem [#allocation2], 709
      %v1122 = vld [vmem:[%s1121] ss:$8 sm:$0xf]
      %v1123 = vld [vmem:[%s1121] ss:$8 sm:$0xf0]
      %v1124 = vor.u32 %v1122, %v1123
      %s1125 = scalar_lea.vmem [#allocation2], 773
      %v1126 = vld [vmem:[%s1125] ss:$8 sm:$0xf]
      %v1127 = vld [vmem:[%s1125] ss:$8 sm:$0xf0]
      %v1128 = vor.u32 %v1126, %v1127
      %s1129 = scalar_lea.vmem [#allocation2], 837
      %v1130 = vld [vmem:[%s1129] ss:$8 sm:$0xf]
      %v1131 = vld [vmem:[%s1129] ss:$8 sm:$0xf0]
      %v1132 = vor.u32 %v1130, %v1131
      %s1133 = scalar_lea.vmem [#allocation2], 901
      %v1134 = vld [vmem:[%s1133] ss:$8 sm:$0xf]
      %v1135 = vld [vmem:[%s1133] ss:$8 sm:$0x30]
      %v1136 = vor.u32 %v1134, %v1135
      %s1137 = scalar_lea.vmem [#allocation2], 9
      %v1138 = vld [vmem:[%s1137] ss:$8 sm:$0xf]
      %v1139 = vld [vmem:[%s1137] ss:$8 sm:$0xf0]
      %v1140 = vor.u32 %v1138, %v1139
      %s1141 = scalar_lea.vmem [#allocation2], 73
      %v1142 = vld [vmem:[%s1141] ss:$8 sm:$0xf]
      %v1143 = vld [vmem:[%s1141] ss:$8 sm:$0xf0]
      %v1144 = vor.u32 %v1142, %v1143
      %s1145 = scalar_lea.vmem [#allocation2], 137
      %v1146 = vld [vmem:[%s1145] ss:$8 sm:$0xf]
      %v1147 = vld [vmem:[%s1145] ss:$8 sm:$0xf0]
      %v1148 = vor.u32 %v1146, %v1147
      %s1149 = scalar_lea.vmem [#allocation2], 201
      %v1150 = vld [vmem:[%s1149] ss:$8 sm:$0xf]
      %v1151 = vld [vmem:[%s1149] ss:$8 sm:$0xf0]
      %v1152 = vor.u32 %v1150, %v1151
      %s1153 = scalar_lea.vmem [#allocation2], 265
      %v1154 = vld [vmem:[%s1153] ss:$8 sm:$0xf]
      %v1155 = vld [vmem:[%s1153] ss:$8 sm:$0xf0]
      %v1156 = vor.u32 %v1154, %v1155
      %s1157 = scalar_lea.vmem [#allocation2], 329
      %v1158 = vld [vmem:[%s1157] ss:$8 sm:$0xf]
      %v1159 = vld [vmem:[%s1157] ss:$8 sm:$0xf0]
      %v1160 = vor.u32 %v1158, %v1159
      %s1161 = scalar_lea.vmem [#allocation2], 393
      %v1162 = vld [vmem:[%s1161] ss:$8 sm:$0xf]
      %v1163 = vld [vmem:[%s1161] ss:$8 sm:$0xf0]
      %v1164 = vor.u32 %v1162, %v1163
      %s1165 = scalar_lea.vmem [#allocation2], 457
      %v1166 = vld [vmem:[%s1165] ss:$8 sm:$0xf]
      %v1167 = vld [vmem:[%s1165] ss:$8 sm:$0xf0]
      %v1168 = vor.u32 %v1166, %v1167
      %s1169 = scalar_lea.vmem [#allocation2], 521
      %v1170 = vld [vmem:[%s1169] ss:$8 sm:$0xf]
      %v1171 = vld [vmem:[%s1169] ss:$8 sm:$0xf0]
      %v1172 = vor.u32 %v1170, %v1171
      %s1173 = scalar_lea.vmem [#allocation2], 585
      %v1174 = vld [vmem:[%s1173] ss:$8 sm:$0xf]
      %v1175 = vld [vmem:[%s1173] ss:$8 sm:$0xf0]
      %v1176 = vor.u32 %v1174, %v1175
      %s1177 = scalar_lea.vmem [#allocation2], 649
      %v1178 = vld [vmem:[%s1177] ss:$8 sm:$0xf]
      %v1179 = vld [vmem:[%s1177] ss:$8 sm:$0xf0]
      %v1180 = vor.u32 %v1178, %v1179
      %s1181 = scalar_lea.vmem [#allocation2], 713
      %v1182 = vld [vmem:[%s1181] ss:$8 sm:$0xf]
      %v1183 = vld [vmem:[%s1181] ss:$8 sm:$0xf0]
      %v1184 = vor.u32 %v1182, %v1183
      %s1185 = scalar_lea.vmem [#allocation2], 777
      %v1186 = vld [vmem:[%s1185] ss:$8 sm:$0xf]
      %v1187 = vld [vmem:[%s1185] ss:$8 sm:$0xf0]
      %v1188 = vor.u32 %v1186, %v1187
      %s1189 = scalar_lea.vmem [#allocation2], 841
      %v1190 = vld [vmem:[%s1189] ss:$8 sm:$0xf]
      %v1191 = vld [vmem:[%s1189] ss:$8 sm:$0xf0]
      %v1192 = vor.u32 %v1190, %v1191
      %s1193 = scalar_lea.vmem [#allocation2], 905
      %v1194 = vld [vmem:[%s1193] ss:$8 sm:$0xf]
      %v1195 = vld [vmem:[%s1193] ss:$8 sm:$0x30]
      %v1196 = vor.u32 %v1194, %v1195
      %v1197 = vld [vmem:[%s1 + $0x1] sm:$0x1]
      %1199 = vset.pattern.permute.xlu0 0
      %1200 = vperm.xlu0 %1199, %v1080
      %v1201 = vpop.permute.xlu0 %1200
      %1204 = vset.pattern.permute.xlu0 0
      %1205 = vperm.xlu0 %1204, %v1084
      %v1206 = vpop.permute.xlu0 %1205
      %1209 = vset.pattern.permute.xlu0 0
      %1210 = vperm.xlu0 %1209, %v1088
      %v1211 = vpop.permute.xlu0 %1210
      %1214 = vset.pattern.permute.xlu0 0
      %1215 = vperm.xlu0 %1214, %v1092
      %v1216 = vpop.permute.xlu0 %1215
      %1219 = vset.pattern.permute.xlu0 0
      %1220 = vperm.xlu0 %1219, %v1096
      %v1221 = vpop.permute.xlu0 %1220
      %1224 = vset.pattern.permute.xlu0 0
      %1225 = vperm.xlu0 %1224, %v1100
      %v1226 = vpop.permute.xlu0 %1225
      %1229 = vset.pattern.permute.xlu0 0
      %1230 = vperm.xlu0 %1229, %v1104
      %v1231 = vpop.permute.xlu0 %1230
      %1234 = vset.pattern.permute.xlu0 0
      %1235 = vperm.xlu0 %1234, %v1108
      %v1236 = vpop.permute.xlu0 %1235
      %1239 = vset.pattern.permute.xlu0 0
      %1240 = vperm.xlu0 %1239, %v1112
      %v1241 = vpop.permute.xlu0 %1240
      %1244 = vset.pattern.permute.xlu0 0
      %1245 = vperm.xlu0 %1244, %v1116
      %v1246 = vpop.permute.xlu0 %1245
      %1249 = vset.pattern.permute.xlu0 0
      %1250 = vperm.xlu0 %1249, %v1120
      %v1251 = vpop.permute.xlu0 %1250
      %1254 = vset.pattern.permute.xlu0 0
      %1255 = vperm.xlu0 %1254, %v1124
      %v1256 = vpop.permute.xlu0 %1255
      %1259 = vset.pattern.permute.xlu0 0
      %1260 = vperm.xlu0 %1259, %v1128
      %v1261 = vpop.permute.xlu0 %1260
      %1264 = vset.pattern.permute.xlu0 0
      %1265 = vperm.xlu0 %1264, %v1132
      %v1266 = vpop.permute.xlu0 %1265
      %1269 = vset.pattern.permute.xlu0 0
      %1270 = vperm.xlu0 %1269, %v1136
      %v1271 = vpop.permute.xlu0 %1270
      %v1273 = vlaneseq
      %v1274 = vshrl.u32 %v1273, 7
      %v1275 = vsub.s32 0, %v1274
      %v1276 = vrot.slane %v1197, %v1275
      %v1277 = vmul.f32 %v1201, %v1276
      %v1278 = vmul.f32 %v1206, %v1276
      %v1279 = vmul.f32 %v1211, %v1276
      %v1280 = vmul.f32 %v1216, %v1276
      %v1281 = vmul.f32 %v1221, %v1276
      %v1282 = vmul.f32 %v1226, %v1276
      %v1283 = vmul.f32 %v1231, %v1276
      %v1284 = vmul.f32 %v1236, %v1276
      %v1285 = vmul.f32 %v1241, %v1276
      %v1286 = vmul.f32 %v1246, %v1276
      %v1287 = vmul.f32 %v1251, %v1276
      %v1288 = vmul.f32 %v1256, %v1276
      %v1289 = vmul.f32 %v1261, %v1276
      %v1290 = vmul.f32 %v1266, %v1276
      %v1291 = vmul.f32 %v1271, %v1276
      %v1292 = vadd.f32 %v957, %v1277
      %v1293 = vadd.f32 %v958, %v1278
      %v1294 = vadd.f32 %v959, %v1279
      %v1295 = vadd.f32 %v960, %v1280
      %v1296 = vadd.f32 %v961, %v1281
      %v1297 = vadd.f32 %v962, %v1282
      %v1298 = vadd.f32 %v963, %v1283
      %v1299 = vadd.f32 %v964, %v1284
      %v1300 = vadd.f32 %v965, %v1285
      %v1301 = vadd.f32 %v966, %v1286
      %v1302 = vadd.f32 %v967, %v1287
      %v1303 = vadd.f32 %v968, %v1288
      %v1304 = vadd.f32 %v969, %v1289
      %v1305 = vadd.f32 %v970, %v1290
      %v1306 = vadd.f32 %v971, %v1291
      %1308 = vset.pattern.permute.xlu0 0
      %1309 = vperm.xlu0 %1308, %v1140
      %v1310 = vpop.permute.xlu0 %1309
      %1313 = vset.pattern.permute.xlu0 0
      %1314 = vperm.xlu0 %1313, %v1144
      %v1315 = vpop.permute.xlu0 %1314
      %1318 = vset.pattern.permute.xlu0 0
      %1319 = vperm.xlu0 %1318, %v1148
      %v1320 = vpop.permute.xlu0 %1319
      %1323 = vset.pattern.permute.xlu0 0
      %1324 = vperm.xlu0 %1323, %v1152
      %v1325 = vpop.permute.xlu0 %1324
      %1328 = vset.pattern.permute.xlu0 0
      %1329 = vperm.xlu0 %1328, %v1156
      %v1330 = vpop.permute.xlu0 %1329
      %1333 = vset.pattern.permute.xlu0 0
      %1334 = vperm.xlu0 %1333, %v1160
      %v1335 = vpop.permute.xlu0 %1334
      %1338 = vset.pattern.permute.xlu0 0
      %1339 = vperm.xlu0 %1338, %v1164
      %v1340 = vpop.permute.xlu0 %1339
      %1343 = vset.pattern.permute.xlu0 0
      %1344 = vperm.xlu0 %1343, %v1168
      %v1345 = vpop.permute.xlu0 %1344
      %1348 = vset.pattern.permute.xlu0 0
      %1349 = vperm.xlu0 %1348, %v1172
      %v1350 = vpop.permute.xlu0 %1349
      %1353 = vset.pattern.permute.xlu0 0
      %1354 = vperm.xlu0 %1353, %v1176
      %v1355 = vpop.permute.xlu0 %1354
      %1358 = vset.pattern.permute.xlu0 0
      %1359 = vperm.xlu0 %1358, %v1180
      %v1360 = vpop.permute.xlu0 %1359
      %1363 = vset.pattern.permute.xlu0 0
      %1364 = vperm.xlu0 %1363, %v1184
      %v1365 = vpop.permute.xlu0 %1364
      %1368 = vset.pattern.permute.xlu0 0
      %1369 = vperm.xlu0 %1368, %v1188
      %v1370 = vpop.permute.xlu0 %1369
      %1373 = vset.pattern.permute.xlu0 0
      %1374 = vperm.xlu0 %1373, %v1192
      %v1375 = vpop.permute.xlu0 %1374
      %1378 = vset.pattern.permute.xlu0 0
      %1379 = vperm.xlu0 %1378, %v1196
      %v1380 = vpop.permute.xlu0 %1379
      %v1382 = vmul.f32 %v1310, %v1276
      %v1383 = vmul.f32 %v1315, %v1276
      %v1384 = vmul.f32 %v1320, %v1276
      %v1385 = vmul.f32 %v1325, %v1276
      %v1386 = vmul.f32 %v1330, %v1276
      %v1387 = vmul.f32 %v1335, %v1276
      %v1388 = vmul.f32 %v1340, %v1276
      %v1389 = vmul.f32 %v1345, %v1276
      %v1390 = vmul.f32 %v1350, %v1276
      %v1391 = vmul.f32 %v1355, %v1276
      %v1392 = vmul.f32 %v1360, %v1276
      %v1393 = vmul.f32 %v1365, %v1276
      %v1394 = vmul.f32 %v1370, %v1276
      %v1395 = vmul.f32 %v1375, %v1276
      %v1396 = vmul.f32 %v1380, %v1276
      %v1397 = vadd.f32 %v1062, %v1382
      %v1398 = vadd.f32 %v1063, %v1383
      %v1399 = vadd.f32 %v1064, %v1384
      %v1400 = vadd.f32 %v1065, %v1385
      %v1401 = vadd.f32 %v1066, %v1386
      %v1402 = vadd.f32 %v1067, %v1387
      %v1403 = vadd.f32 %v1068, %v1388
      %v1404 = vadd.f32 %v1069, %v1389
      %v1405 = vadd.f32 %v1070, %v1390
      %v1406 = vadd.f32 %v1071, %v1391
      %v1407 = vadd.f32 %v1072, %v1392
      %v1408 = vadd.f32 %v1073, %v1393
      %v1409 = vadd.f32 %v1074, %v1394
      %v1410 = vadd.f32 %v1075, %v1395
      %v1411 = vadd.f32 %v1076, %v1396
      %s1412 = scalar_lea.vmem [#allocation2], 6
      %v1413 = vld [vmem:[%s1412] ss:$8 sm:$0xf]
      %v1414 = vld [vmem:[%s1412] ss:$8 sm:$0xf0]
      %v1415 = vor.u32 %v1413, %v1414
      %s1416 = scalar_lea.vmem [#allocation2], 70
      %v1417 = vld [vmem:[%s1416] ss:$8 sm:$0xf]
      %v1418 = vld [vmem:[%s1416] ss:$8 sm:$0xf0]
      %v1419 = vor.u32 %v1417, %v1418
      %s1420 = scalar_lea.vmem [#allocation2], 134
      %v1421 = vld [vmem:[%s1420] ss:$8 sm:$0xf]
      %v1422 = vld [vmem:[%s1420] ss:$8 sm:$0xf0]
      %v1423 = vor.u32 %v1421, %v1422
      %s1424 = scalar_lea.vmem [#allocation2], 198
      %v1425 = vld [vmem:[%s1424] ss:$8 sm:$0xf]
      %v1426 = vld [vmem:[%s1424] ss:$8 sm:$0xf0]
      %v1427 = vor.u32 %v1425, %v1426
      %s1428 = scalar_lea.vmem [#allocation2], 262
      %v1429 = vld [vmem:[%s1428] ss:$8 sm:$0xf]
      %v1430 = vld [vmem:[%s1428] ss:$8 sm:$0xf0]
      %v1431 = vor.u32 %v1429, %v1430
      %s1432 = scalar_lea.vmem [#allocation2], 326
      %v1433 = vld [vmem:[%s1432] ss:$8 sm:$0xf]
      %v1434 = vld [vmem:[%s1432] ss:$8 sm:$0xf0]
      %v1435 = vor.u32 %v1433, %v1434
      %s1436 = scalar_lea.vmem [#allocation2], 390
      %v1437 = vld [vmem:[%s1436] ss:$8 sm:$0xf]
      %v1438 = vld [vmem:[%s1436] ss:$8 sm:$0xf0]
      %v1439 = vor.u32 %v1437, %v1438
      %s1440 = scalar_lea.vmem [#allocation2], 454
      %v1441 = vld [vmem:[%s1440] ss:$8 sm:$0xf]
      %v1442 = vld [vmem:[%s1440] ss:$8 sm:$0xf0]
      %v1443 = vor.u32 %v1441, %v1442
      %s1444 = scalar_lea.vmem [#allocation2], 518
      %v1445 = vld [vmem:[%s1444] ss:$8 sm:$0xf]
      %v1446 = vld [vmem:[%s1444] ss:$8 sm:$0xf0]
      %v1447 = vor.u32 %v1445, %v1446
      %s1448 = scalar_lea.vmem [#allocation2], 582
      %v1449 = vld [vmem:[%s1448] ss:$8 sm:$0xf]
      %v1450 = vld [vmem:[%s1448] ss:$8 sm:$0xf0]
      %v1451 = vor.u32 %v1449, %v1450
      %s1452 = scalar_lea.vmem [#allocation2], 646
      %v1453 = vld [vmem:[%s1452] ss:$8 sm:$0xf]
      %v1454 = vld [vmem:[%s1452] ss:$8 sm:$0xf0]
      %v1455 = vor.u32 %v1453, %v1454
      %s1456 = scalar_lea.vmem [#allocation2], 710
      %v1457 = vld [vmem:[%s1456] ss:$8 sm:$0xf]
      %v1458 = vld [vmem:[%s1456] ss:$8 sm:$0xf0]
      %v1459 = vor.u32 %v1457, %v1458
      %s1460 = scalar_lea.vmem [#allocation2], 774
      %v1461 = vld [vmem:[%s1460] ss:$8 sm:$0xf]
      %v1462 = vld [vmem:[%s1460] ss:$8 sm:$0xf0]
      %v1463 = vor.u32 %v1461, %v1462
      %s1464 = scalar_lea.vmem [#allocation2], 838
      %v1465 = vld [vmem:[%s1464] ss:$8 sm:$0xf]
      %v1466 = vld [vmem:[%s1464] ss:$8 sm:$0xf0]
      %v1467 = vor.u32 %v1465, %v1466
      %s1468 = scalar_lea.vmem [#allocation2], 902
      %v1469 = vld [vmem:[%s1468] ss:$8 sm:$0xf]
      %v1470 = vld [vmem:[%s1468] ss:$8 sm:$0x30]
      %v1471 = vor.u32 %v1469, %v1470
      %s1472 = scalar_lea.vmem [#allocation2], 10
      %v1473 = vld [vmem:[%s1472] ss:$8 sm:$0xf]
      %v1474 = vld [vmem:[%s1472] ss:$8 sm:$0xf0]
      %v1475 = vor.u32 %v1473, %v1474
      %s1476 = scalar_lea.vmem [#allocation2], 74
      %v1477 = vld [vmem:[%s1476] ss:$8 sm:$0xf]
      %v1478 = vld [vmem:[%s1476] ss:$8 sm:$0xf0]
      %v1479 = vor.u32 %v1477, %v1478
      %s1480 = scalar_lea.vmem [#allocation2], 138
      %v1481 = vld [vmem:[%s1480] ss:$8 sm:$0xf]
      %v1482 = vld [vmem:[%s1480] ss:$8 sm:$0xf0]
      %v1483 = vor.u32 %v1481, %v1482
      %s1484 = scalar_lea.vmem [#allocation2], 202
      %v1485 = vld [vmem:[%s1484] ss:$8 sm:$0xf]
      %v1486 = vld [vmem:[%s1484] ss:$8 sm:$0xf0]
      %v1487 = vor.u32 %v1485, %v1486
      %s1488 = scalar_lea.vmem [#allocation2], 266
      %v1489 = vld [vmem:[%s1488] ss:$8 sm:$0xf]
      %v1490 = vld [vmem:[%s1488] ss:$8 sm:$0xf0]
      %v1491 = vor.u32 %v1489, %v1490
      %s1492 = scalar_lea.vmem [#allocation2], 330
      %v1493 = vld [vmem:[%s1492] ss:$8 sm:$0xf]
      %v1494 = vld [vmem:[%s1492] ss:$8 sm:$0xf0]
      %v1495 = vor.u32 %v1493, %v1494
      %s1496 = scalar_lea.vmem [#allocation2], 394
      %v1497 = vld [vmem:[%s1496] ss:$8 sm:$0xf]
      %v1498 = vld [vmem:[%s1496] ss:$8 sm:$0xf0]
      %v1499 = vor.u32 %v1497, %v1498
      %s1500 = scalar_lea.vmem [#allocation2], 458
      %v1501 = vld [vmem:[%s1500] ss:$8 sm:$0xf]
      %v1502 = vld [vmem:[%s1500] ss:$8 sm:$0xf0]
      %v1503 = vor.u32 %v1501, %v1502
      %s1504 = scalar_lea.vmem [#allocation2], 522
      %v1505 = vld [vmem:[%s1504] ss:$8 sm:$0xf]
      %v1506 = vld [vmem:[%s1504] ss:$8 sm:$0xf0]
      %v1507 = vor.u32 %v1505, %v1506
      %s1508 = scalar_lea.vmem [#allocation2], 586
      %v1509 = vld [vmem:[%s1508] ss:$8 sm:$0xf]
      %v1510 = vld [vmem:[%s1508] ss:$8 sm:$0xf0]
      %v1511 = vor.u32 %v1509, %v1510
      %s1512 = scalar_lea.vmem [#allocation2], 650
      %v1513 = vld [vmem:[%s1512] ss:$8 sm:$0xf]
      %v1514 = vld [vmem:[%s1512] ss:$8 sm:$0xf0]
      %v1515 = vor.u32 %v1513, %v1514
      %s1516 = scalar_lea.vmem [#allocation2], 714
      %v1517 = vld [vmem:[%s1516] ss:$8 sm:$0xf]
      %v1518 = vld [vmem:[%s1516] ss:$8 sm:$0xf0]
      %v1519 = vor.u32 %v1517, %v1518
      %s1520 = scalar_lea.vmem [#allocation2], 778
      %v1521 = vld [vmem:[%s1520] ss:$8 sm:$0xf]
      %v1522 = vld [vmem:[%s1520] ss:$8 sm:$0xf0]
      %v1523 = vor.u32 %v1521, %v1522
      %s1524 = scalar_lea.vmem [#allocation2], 842
      %v1525 = vld [vmem:[%s1524] ss:$8 sm:$0xf]
      %v1526 = vld [vmem:[%s1524] ss:$8 sm:$0xf0]
      %v1527 = vor.u32 %v1525, %v1526
      %s1528 = scalar_lea.vmem [#allocation2], 906
      %v1529 = vld [vmem:[%s1528] ss:$8 sm:$0xf]
      %v1530 = vld [vmem:[%s1528] ss:$8 sm:$0x30]
      %v1531 = vor.u32 %v1529, %v1530
      %v1532 = vld [vmem:[%s1 + $0x2] sm:$0x1]
      %1534 = vset.pattern.permute.xlu0 0
      %1535 = vperm.xlu0 %1534, %v1415
      %v1536 = vpop.permute.xlu0 %1535
      %1539 = vset.pattern.permute.xlu0 0
      %1540 = vperm.xlu0 %1539, %v1419
      %v1541 = vpop.permute.xlu0 %1540
      %1544 = vset.pattern.permute.xlu0 0
      %1545 = vperm.xlu0 %1544, %v1423
      %v1546 = vpop.permute.xlu0 %1545
      %1549 = vset.pattern.permute.xlu0 0
      %1550 = vperm.xlu0 %1549, %v1427
      %v1551 = vpop.permute.xlu0 %1550
      %1554 = vset.pattern.permute.xlu0 0
      %1555 = vperm.xlu0 %1554, %v1431
      %v1556 = vpop.permute.xlu0 %1555
      %1559 = vset.pattern.permute.xlu0 0
      %1560 = vperm.xlu0 %1559, %v1435
      %v1561 = vpop.permute.xlu0 %1560
      %1564 = vset.pattern.permute.xlu0 0
      %1565 = vperm.xlu0 %1564, %v1439
      %v1566 = vpop.permute.xlu0 %1565
      %1569 = vset.pattern.permute.xlu0 0
      %1570 = vperm.xlu0 %1569, %v1443
      %v1571 = vpop.permute.xlu0 %1570
      %1574 = vset.pattern.permute.xlu0 0
      %1575 = vperm.xlu0 %1574, %v1447
      %v1576 = vpop.permute.xlu0 %1575
      %1579 = vset.pattern.permute.xlu0 0
      %1580 = vperm.xlu0 %1579, %v1451
      %v1581 = vpop.permute.xlu0 %1580
      %1584 = vset.pattern.permute.xlu0 0
      %1585 = vperm.xlu0 %1584, %v1455
      %v1586 = vpop.permute.xlu0 %1585
      %1589 = vset.pattern.permute.xlu0 0
      %1590 = vperm.xlu0 %1589, %v1459
      %v1591 = vpop.permute.xlu0 %1590
      %1594 = vset.pattern.permute.xlu0 0
      %1595 = vperm.xlu0 %1594, %v1463
      %v1596 = vpop.permute.xlu0 %1595
      %1599 = vset.pattern.permute.xlu0 0
      %1600 = vperm.xlu0 %1599, %v1467
      %v1601 = vpop.permute.xlu0 %1600
      %1604 = vset.pattern.permute.xlu0 0
      %1605 = vperm.xlu0 %1604, %v1471
      %v1606 = vpop.permute.xlu0 %1605
      %v1608 = vlaneseq
      %v1609 = vshrl.u32 %v1608, 7
      %v1610 = vsub.s32 0, %v1609
      %v1611 = vrot.slane %v1532, %v1610
      %v1612 = vmul.f32 %v1536, %v1611
      %v1613 = vmul.f32 %v1541, %v1611
      %v1614 = vmul.f32 %v1546, %v1611
      %v1615 = vmul.f32 %v1551, %v1611
      %v1616 = vmul.f32 %v1556, %v1611
      %v1617 = vmul.f32 %v1561, %v1611
      %v1618 = vmul.f32 %v1566, %v1611
      %v1619 = vmul.f32 %v1571, %v1611
      %v1620 = vmul.f32 %v1576, %v1611
      %v1621 = vmul.f32 %v1581, %v1611
      %v1622 = vmul.f32 %v1586, %v1611
      %v1623 = vmul.f32 %v1591, %v1611
      %v1624 = vmul.f32 %v1596, %v1611
      %v1625 = vmul.f32 %v1601, %v1611
      %v1626 = vmul.f32 %v1606, %v1611
      %v1627 = vadd.f32 %v1292, %v1612
      %v1628 = vadd.f32 %v1293, %v1613
      %v1629 = vadd.f32 %v1294, %v1614
      %v1630 = vadd.f32 %v1295, %v1615
      %v1631 = vadd.f32 %v1296, %v1616
      %v1632 = vadd.f32 %v1297, %v1617
      %v1633 = vadd.f32 %v1298, %v1618
      %v1634 = vadd.f32 %v1299, %v1619
      %v1635 = vadd.f32 %v1300, %v1620
      %v1636 = vadd.f32 %v1301, %v1621
      %v1637 = vadd.f32 %v1302, %v1622
      %v1638 = vadd.f32 %v1303, %v1623
      %v1639 = vadd.f32 %v1304, %v1624
      %v1640 = vadd.f32 %v1305, %v1625
      %v1641 = vadd.f32 %v1306, %v1626
      %1643 = vset.pattern.permute.xlu0 0
      %1644 = vperm.xlu0 %1643, %v1475
      %v1645 = vpop.permute.xlu0 %1644
      %1648 = vset.pattern.permute.xlu0 0
      %1649 = vperm.xlu0 %1648, %v1479
      %v1650 = vpop.permute.xlu0 %1649
      %1653 = vset.pattern.permute.xlu0 0
      %1654 = vperm.xlu0 %1653, %v1483
      %v1655 = vpop.permute.xlu0 %1654
      %1658 = vset.pattern.permute.xlu0 0
      %1659 = vperm.xlu0 %1658, %v1487
      %v1660 = vpop.permute.xlu0 %1659
      %1663 = vset.pattern.permute.xlu0 0
      %1664 = vperm.xlu0 %1663, %v1491
      %v1665 = vpop.permute.xlu0 %1664
      %1668 = vset.pattern.permute.xlu0 0
      %1669 = vperm.xlu0 %1668, %v1495
      %v1670 = vpop.permute.xlu0 %1669
      %1673 = vset.pattern.permute.xlu0 0
      %1674 = vperm.xlu0 %1673, %v1499
      %v1675 = vpop.permute.xlu0 %1674
      %1678 = vset.pattern.permute.xlu0 0
      %1679 = vperm.xlu0 %1678, %v1503
      %v1680 = vpop.permute.xlu0 %1679
      %1683 = vset.pattern.permute.xlu0 0
      %1684 = vperm.xlu0 %1683, %v1507
      %v1685 = vpop.permute.xlu0 %1684
      %1688 = vset.pattern.permute.xlu0 0
      %1689 = vperm.xlu0 %1688, %v1511
      %v1690 = vpop.permute.xlu0 %1689
      %1693 = vset.pattern.permute.xlu0 0
      %1694 = vperm.xlu0 %1693, %v1515
      %v1695 = vpop.permute.xlu0 %1694
      %1698 = vset.pattern.permute.xlu0 0
      %1699 = vperm.xlu0 %1698, %v1519
      %v1700 = vpop.permute.xlu0 %1699
      %1703 = vset.pattern.permute.xlu0 0
      %1704 = vperm.xlu0 %1703, %v1523
      %v1705 = vpop.permute.xlu0 %1704
      %1708 = vset.pattern.permute.xlu0 0
      %1709 = vperm.xlu0 %1708, %v1527
      %v1710 = vpop.permute.xlu0 %1709
      %1713 = vset.pattern.permute.xlu0 0
      %1714 = vperm.xlu0 %1713, %v1531
      %v1715 = vpop.permute.xlu0 %1714
      %v1717 = vmul.f32 %v1645, %v1611
      %v1718 = vmul.f32 %v1650, %v1611
      %v1719 = vmul.f32 %v1655, %v1611
      %v1720 = vmul.f32 %v1660, %v1611
      %v1721 = vmul.f32 %v1665, %v1611
      %v1722 = vmul.f32 %v1670, %v1611
      %v1723 = vmul.f32 %v1675, %v1611
      %v1724 = vmul.f32 %v1680, %v1611
      %v1725 = vmul.f32 %v1685, %v1611
      %v1726 = vmul.f32 %v1690, %v1611
      %v1727 = vmul.f32 %v1695, %v1611
      %v1728 = vmul.f32 %v1700, %v1611
      %v1729 = vmul.f32 %v1705, %v1611
      %v1730 = vmul.f32 %v1710, %v1611
      %v1731 = vmul.f32 %v1715, %v1611
      %v1732 = vadd.f32 %v1397, %v1717
      %v1733 = vadd.f32 %v1398, %v1718
      %v1734 = vadd.f32 %v1399, %v1719
      %v1735 = vadd.f32 %v1400, %v1720
      %v1736 = vadd.f32 %v1401, %v1721
      %v1737 = vadd.f32 %v1402, %v1722
      %v1738 = vadd.f32 %v1403, %v1723
      %v1739 = vadd.f32 %v1404, %v1724
      %v1740 = vadd.f32 %v1405, %v1725
      %v1741 = vadd.f32 %v1406, %v1726
      %v1742 = vadd.f32 %v1407, %v1727
      %v1743 = vadd.f32 %v1408, %v1728
      %v1744 = vadd.f32 %v1409, %v1729
      %v1745 = vadd.f32 %v1410, %v1730
      %v1746 = vadd.f32 %v1411, %v1731
      %s1747 = scalar_lea.vmem [#allocation2], 7
      %v1748 = vld [vmem:[%s1747] ss:$8 sm:$0xf]
      %v1749 = vld [vmem:[%s1747] ss:$8 sm:$0xf0]
      %v1750 = vor.u32 %v1748, %v1749
      %s1751 = scalar_lea.vmem [#allocation2], 71
      %v1752 = vld [vmem:[%s1751] ss:$8 sm:$0xf]
      %v1753 = vld [vmem:[%s1751] ss:$8 sm:$0xf0]
      %v1754 = vor.u32 %v1752, %v1753
      %s1755 = scalar_lea.vmem [#allocation2], 135
      %v1756 = vld [vmem:[%s1755] ss:$8 sm:$0xf]
      %v1757 = vld [vmem:[%s1755] ss:$8 sm:$0xf0]
      %v1758 = vor.u32 %v1756, %v1757
      %s1759 = scalar_lea.vmem [#allocation2], 199
      %v1760 = vld [vmem:[%s1759] ss:$8 sm:$0xf]
      %v1761 = vld [vmem:[%s1759] ss:$8 sm:$0xf0]
      %v1762 = vor.u32 %v1760, %v1761
      %s1763 = scalar_lea.vmem [#allocation2], 263
      %v1764 = vld [vmem:[%s1763] ss:$8 sm:$0xf]
      %v1765 = vld [vmem:[%s1763] ss:$8 sm:$0xf0]
      %v1766 = vor.u32 %v1764, %v1765
      %s1767 = scalar_lea.vmem [#allocation2], 327
      %v1768 = vld [vmem:[%s1767] ss:$8 sm:$0xf]
      %v1769 = vld [vmem:[%s1767] ss:$8 sm:$0xf0]
      %v1770 = vor.u32 %v1768, %v1769
      %s1771 = scalar_lea.vmem [#allocation2], 391
      %v1772 = vld [vmem:[%s1771] ss:$8 sm:$0xf]
      %v1773 = vld [vmem:[%s1771] ss:$8 sm:$0xf0]
      %v1774 = vor.u32 %v1772, %v1773
      %s1775 = scalar_lea.vmem [#allocation2], 455
      %v1776 = vld [vmem:[%s1775] ss:$8 sm:$0xf]
      %v1777 = vld [vmem:[%s1775] ss:$8 sm:$0xf0]
      %v1778 = vor.u32 %v1776, %v1777
      %s1779 = scalar_lea.vmem [#allocation2], 519
      %v1780 = vld [vmem:[%s1779] ss:$8 sm:$0xf]
      %v1781 = vld [vmem:[%s1779] ss:$8 sm:$0xf0]
      %v1782 = vor.u32 %v1780, %v1781
      %s1783 = scalar_lea.vmem [#allocation2], 583
      %v1784 = vld [vmem:[%s1783] ss:$8 sm:$0xf]
      %v1785 = vld [vmem:[%s1783] ss:$8 sm:$0xf0]
      %v1786 = vor.u32 %v1784, %v1785
      %s1787 = scalar_lea.vmem [#allocation2], 647
      %v1788 = vld [vmem:[%s1787] ss:$8 sm:$0xf]
      %v1789 = vld [vmem:[%s1787] ss:$8 sm:$0xf0]
      %v1790 = vor.u32 %v1788, %v1789
      %s1791 = scalar_lea.vmem [#allocation2], 711
      %v1792 = vld [vmem:[%s1791] ss:$8 sm:$0xf]
      %v1793 = vld [vmem:[%s1791] ss:$8 sm:$0xf0]
      %v1794 = vor.u32 %v1792, %v1793
      %s1795 = scalar_lea.vmem [#allocation2], 775
      %v1796 = vld [vmem:[%s1795] ss:$8 sm:$0xf]
      %v1797 = vld [vmem:[%s1795] ss:$8 sm:$0xf0]
      %v1798 = vor.u32 %v1796, %v1797
      %s1799 = scalar_lea.vmem [#allocation2], 839
      %v1800 = vld [vmem:[%s1799] ss:$8 sm:$0xf]
      %v1801 = vld [vmem:[%s1799] ss:$8 sm:$0xf0]
      %v1802 = vor.u32 %v1800, %v1801
      %s1803 = scalar_lea.vmem [#allocation2], 903
      %v1804 = vld [vmem:[%s1803] ss:$8 sm:$0xf]
      %v1805 = vld [vmem:[%s1803] ss:$8 sm:$0x30]
      %v1806 = vor.u32 %v1804, %v1805
      %s1807 = scalar_lea.vmem [#allocation2], 11
      %v1808 = vld [vmem:[%s1807] ss:$8 sm:$0xf]
      %v1809 = vld [vmem:[%s1807] ss:$8 sm:$0xf0]
      %v1810 = vor.u32 %v1808, %v1809
      %s1811 = scalar_lea.vmem [#allocation2], 75
      %v1812 = vld [vmem:[%s1811] ss:$8 sm:$0xf]
      %v1813 = vld [vmem:[%s1811] ss:$8 sm:$0xf0]
      %v1814 = vor.u32 %v1812, %v1813
      %s1815 = scalar_lea.vmem [#allocation2], 139
      %v1816 = vld [vmem:[%s1815] ss:$8 sm:$0xf]
      %v1817 = vld [vmem:[%s1815] ss:$8 sm:$0xf0]
      %v1818 = vor.u32 %v1816, %v1817
      %s1819 = scalar_lea.vmem [#allocation2], 203
      %v1820 = vld [vmem:[%s1819] ss:$8 sm:$0xf]
      %v1821 = vld [vmem:[%s1819] ss:$8 sm:$0xf0]
      %v1822 = vor.u32 %v1820, %v1821
      %s1823 = scalar_lea.vmem [#allocation2], 267
      %v1824 = vld [vmem:[%s1823] ss:$8 sm:$0xf]
      %v1825 = vld [vmem:[%s1823] ss:$8 sm:$0xf0]
      %v1826 = vor.u32 %v1824, %v1825
      %s1827 = scalar_lea.vmem [#allocation2], 331
      %v1828 = vld [vmem:[%s1827] ss:$8 sm:$0xf]
      %v1829 = vld [vmem:[%s1827] ss:$8 sm:$0xf0]
      %v1830 = vor.u32 %v1828, %v1829
      %s1831 = scalar_lea.vmem [#allocation2], 395
      %v1832 = vld [vmem:[%s1831] ss:$8 sm:$0xf]
      %v1833 = vld [vmem:[%s1831] ss:$8 sm:$0xf0]
      %v1834 = vor.u32 %v1832, %v1833
      %s1835 = scalar_lea.vmem [#allocation2], 459
      %v1836 = vld [vmem:[%s1835] ss:$8 sm:$0xf]
      %v1837 = vld [vmem:[%s1835] ss:$8 sm:$0xf0]
      %v1838 = vor.u32 %v1836, %v1837
      %s1839 = scalar_lea.vmem [#allocation2], 523
      %v1840 = vld [vmem:[%s1839] ss:$8 sm:$0xf]
      %v1841 = vld [vmem:[%s1839] ss:$8 sm:$0xf0]
      %v1842 = vor.u32 %v1840, %v1841
      %s1843 = scalar_lea.vmem [#allocation2], 587
      %v1844 = vld [vmem:[%s1843] ss:$8 sm:$0xf]
      %v1845 = vld [vmem:[%s1843] ss:$8 sm:$0xf0]
      %v1846 = vor.u32 %v1844, %v1845
      %s1847 = scalar_lea.vmem [#allocation2], 651
      %v1848 = vld [vmem:[%s1847] ss:$8 sm:$0xf]
      %v1849 = vld [vmem:[%s1847] ss:$8 sm:$0xf0]
      %v1850 = vor.u32 %v1848, %v1849
      %s1851 = scalar_lea.vmem [#allocation2], 715
      %v1852 = vld [vmem:[%s1851] ss:$8 sm:$0xf]
      %v1853 = vld [vmem:[%s1851] ss:$8 sm:$0xf0]
      %v1854 = vor.u32 %v1852, %v1853
      %s1855 = scalar_lea.vmem [#allocation2], 779
      %v1856 = vld [vmem:[%s1855] ss:$8 sm:$0xf]
      %v1857 = vld [vmem:[%s1855] ss:$8 sm:$0xf0]
      %v1858 = vor.u32 %v1856, %v1857
      %s1859 = scalar_lea.vmem [#allocation2], 843
      %v1860 = vld [vmem:[%s1859] ss:$8 sm:$0xf]
      %v1861 = vld [vmem:[%s1859] ss:$8 sm:$0xf0]
      %v1862 = vor.u32 %v1860, %v1861
      %s1863 = scalar_lea.vmem [#allocation2], 907
      %v1864 = vld [vmem:[%s1863] ss:$8 sm:$0xf]
      %v1865 = vld [vmem:[%s1863] ss:$8 sm:$0x30]
      %v1866 = vor.u32 %v1864, %v1865
      %v1867 = vld [vmem:[%s1 + $0x3] sm:$0x1]
      %1869 = vset.pattern.permute.xlu0 0
      %1870 = vperm.xlu0 %1869, %v1750
      %v1871 = vpop.permute.xlu0 %1870
      %1874 = vset.pattern.permute.xlu0 0
      %1875 = vperm.xlu0 %1874, %v1754
      %v1876 = vpop.permute.xlu0 %1875
      %1879 = vset.pattern.permute.xlu0 0
      %1880 = vperm.xlu0 %1879, %v1758
      %v1881 = vpop.permute.xlu0 %1880
      %1884 = vset.pattern.permute.xlu0 0
      %1885 = vperm.xlu0 %1884, %v1762
      %v1886 = vpop.permute.xlu0 %1885
      %1889 = vset.pattern.permute.xlu0 0
      %1890 = vperm.xlu0 %1889, %v1766
      %v1891 = vpop.permute.xlu0 %1890
      %1894 = vset.pattern.permute.xlu0 0
      %1895 = vperm.xlu0 %1894, %v1770
      %v1896 = vpop.permute.xlu0 %1895
      %1899 = vset.pattern.permute.xlu0 0
      %1900 = vperm.xlu0 %1899, %v1774
      %v1901 = vpop.permute.xlu0 %1900
      %1904 = vset.pattern.permute.xlu0 0
      %1905 = vperm.xlu0 %1904, %v1778
      %v1906 = vpop.permute.xlu0 %1905
      %1909 = vset.pattern.permute.xlu0 0
      %1910 = vperm.xlu0 %1909, %v1782
      %v1911 = vpop.permute.xlu0 %1910
      %1914 = vset.pattern.permute.xlu0 0
      %1915 = vperm.xlu0 %1914, %v1786
      %v1916 = vpop.permute.xlu0 %1915
      %1919 = vset.pattern.permute.xlu0 0
      %1920 = vperm.xlu0 %1919, %v1790
      %v1921 = vpop.permute.xlu0 %1920
      %1924 = vset.pattern.permute.xlu0 0
      %1925 = vperm.xlu0 %1924, %v1794
      %v1926 = vpop.permute.xlu0 %1925
      %1929 = vset.pattern.permute.xlu0 0
      %1930 = vperm.xlu0 %1929, %v1798
      %v1931 = vpop.permute.xlu0 %1930
      %1934 = vset.pattern.permute.xlu0 0
      %1935 = vperm.xlu0 %1934, %v1802
      %v1936 = vpop.permute.xlu0 %1935
      %1939 = vset.pattern.permute.xlu0 0
      %1940 = vperm.xlu0 %1939, %v1806
      %v1941 = vpop.permute.xlu0 %1940
      %v1943 = vlaneseq
      %v1944 = vshrl.u32 %v1943, 7
      %v1945 = vsub.s32 0, %v1944
      %v1946 = vrot.slane %v1867, %v1945
      %v1947 = vmul.f32 %v1871, %v1946
      %v1948 = vmul.f32 %v1876, %v1946
      %v1949 = vmul.f32 %v1881, %v1946
      %v1950 = vmul.f32 %v1886, %v1946
      %v1951 = vmul.f32 %v1891, %v1946
      %v1952 = vmul.f32 %v1896, %v1946
      %v1953 = vmul.f32 %v1901, %v1946
      %v1954 = vmul.f32 %v1906, %v1946
      %v1955 = vmul.f32 %v1911, %v1946
      %v1956 = vmul.f32 %v1916, %v1946
      %v1957 = vmul.f32 %v1921, %v1946
      %v1958 = vmul.f32 %v1926, %v1946
      %v1959 = vmul.f32 %v1931, %v1946
      %v1960 = vmul.f32 %v1936, %v1946
      %v1961 = vmul.f32 %v1941, %v1946
      %v1962 = vadd.f32 %v1627, %v1947
      %v1963 = vadd.f32 %v1628, %v1948
      %v1964 = vadd.f32 %v1629, %v1949
      %v1965 = vadd.f32 %v1630, %v1950
      %v1966 = vadd.f32 %v1631, %v1951
      %v1967 = vadd.f32 %v1632, %v1952
      %v1968 = vadd.f32 %v1633, %v1953
      %v1969 = vadd.f32 %v1634, %v1954
      %v1970 = vadd.f32 %v1635, %v1955
      %v1971 = vadd.f32 %v1636, %v1956
      %v1972 = vadd.f32 %v1637, %v1957
      %v1973 = vadd.f32 %v1638, %v1958
      %v1974 = vadd.f32 %v1639, %v1959
      %v1975 = vadd.f32 %v1640, %v1960
      %v1976 = vadd.f32 %v1641, %v1961
      %1978 = vset.pattern.permute.xlu0 0
      %1979 = vperm.xlu0 %1978, %v1810
      %v1980 = vpop.permute.xlu0 %1979
      %1983 = vset.pattern.permute.xlu0 0
      %1984 = vperm.xlu0 %1983, %v1814
      %v1985 = vpop.permute.xlu0 %1984
      %1988 = vset.pattern.permute.xlu0 0
      %1989 = vperm.xlu0 %1988, %v1818
      %v1990 = vpop.permute.xlu0 %1989
      %1993 = vset.pattern.permute.xlu0 0
      %1994 = vperm.xlu0 %1993, %v1822
      %v1995 = vpop.permute.xlu0 %1994
      %1998 = vset.pattern.permute.xlu0 0
      %1999 = vperm.xlu0 %1998, %v1826
      %v2000 = vpop.permute.xlu0 %1999
      %2003 = vset.pattern.permute.xlu0 0
      %2004 = vperm.xlu0 %2003, %v1830
      %v2005 = vpop.permute.xlu0 %2004
      %2008 = vset.pattern.permute.xlu0 0
      %2009 = vperm.xlu0 %2008, %v1834
      %v2010 = vpop.permute.xlu0 %2009
      %2013 = vset.pattern.permute.xlu0 0
      %2014 = vperm.xlu0 %2013, %v1838
      %v2015 = vpop.permute.xlu0 %2014
      %2018 = vset.pattern.permute.xlu0 0
      %2019 = vperm.xlu0 %2018, %v1842
      %v2020 = vpop.permute.xlu0 %2019
      %2023 = vset.pattern.permute.xlu0 0
      %2024 = vperm.xlu0 %2023, %v1846
      %v2025 = vpop.permute.xlu0 %2024
      %2028 = vset.pattern.permute.xlu0 0
      %2029 = vperm.xlu0 %2028, %v1850
      %v2030 = vpop.permute.xlu0 %2029
      %2033 = vset.pattern.permute.xlu0 0
      %2034 = vperm.xlu0 %2033, %v1854
      %v2035 = vpop.permute.xlu0 %2034
      %2038 = vset.pattern.permute.xlu0 0
      %2039 = vperm.xlu0 %2038, %v1858
      %v2040 = vpop.permute.xlu0 %2039
      %2043 = vset.pattern.permute.xlu0 0
      %2044 = vperm.xlu0 %2043, %v1862
      %v2045 = vpop.permute.xlu0 %2044
      %2048 = vset.pattern.permute.xlu0 0
      %2049 = vperm.xlu0 %2048, %v1866
      %v2050 = vpop.permute.xlu0 %2049
      %v2052 = vmul.f32 %v1980, %v1946
      %v2053 = vmul.f32 %v1985, %v1946
      %v2054 = vmul.f32 %v1990, %v1946
      %v2055 = vmul.f32 %v1995, %v1946
      %v2056 = vmul.f32 %v2000, %v1946
      %v2057 = vmul.f32 %v2005, %v1946
      %v2058 = vmul.f32 %v2010, %v1946
      %v2059 = vmul.f32 %v2015, %v1946
      %v2060 = vmul.f32 %v2020, %v1946
      %v2061 = vmul.f32 %v2025, %v1946
      %v2062 = vmul.f32 %v2030, %v1946
      %v2063 = vmul.f32 %v2035, %v1946
      %v2064 = vmul.f32 %v2040, %v1946
      %v2065 = vmul.f32 %v2045, %v1946
      %v2066 = vmul.f32 %v2050, %v1946
      %v2067 = vadd.f32 %v1732, %v2052
      %v2068 = vadd.f32 %v1733, %v2053
      %v2069 = vadd.f32 %v1734, %v2054
      %v2070 = vadd.f32 %v1735, %v2055
      %v2071 = vadd.f32 %v1736, %v2056
      %v2072 = vadd.f32 %v1737, %v2057
      %v2073 = vadd.f32 %v1738, %v2058
      %v2074 = vadd.f32 %v1739, %v2059
      %v2075 = vadd.f32 %v1740, %v2060
      %v2076 = vadd.f32 %v1741, %v2061
      %v2077 = vadd.f32 %v1742, %v2062
      %v2078 = vadd.f32 %v1743, %v2063
      %v2079 = vadd.f32 %v1744, %v2064
      %v2080 = vadd.f32 %v1745, %v2065
      %v2081 = vadd.f32 %v1746, %v2066
      %s2082 = scalar_lea.vmem [#allocation2], 12
      %v2083 = vld [vmem:[%s2082] ss:$8 sm:$0xf]
      %v2084 = vld [vmem:[%s2082] ss:$8 sm:$0xf0]
      %v2085 = vor.u32 %v2083, %v2084
      %s2086 = scalar_lea.vmem [#allocation2], 76
      %v2087 = vld [vmem:[%s2086] ss:$8 sm:$0xf]
      %v2088 = vld [vmem:[%s2086] ss:$8 sm:$0xf0]
      %v2089 = vor.u32 %v2087, %v2088
      %s2090 = scalar_lea.vmem [#allocation2], 140
      %v2091 = vld [vmem:[%s2090] ss:$8 sm:$0xf]
      %v2092 = vld [vmem:[%s2090] ss:$8 sm:$0xf0]
      %v2093 = vor.u32 %v2091, %v2092
      %s2094 = scalar_lea.vmem [#allocation2], 204
      %v2095 = vld [vmem:[%s2094] ss:$8 sm:$0xf]
      %v2096 = vld [vmem:[%s2094] ss:$8 sm:$0xf0]
      %v2097 = vor.u32 %v2095, %v2096
      %s2098 = scalar_lea.vmem [#allocation2], 268
      %v2099 = vld [vmem:[%s2098] ss:$8 sm:$0xf]
      %v2100 = vld [vmem:[%s2098] ss:$8 sm:$0xf0]
      %v2101 = vor.u32 %v2099, %v2100
      %s2102 = scalar_lea.vmem [#allocation2], 332
      %v2103 = vld [vmem:[%s2102] ss:$8 sm:$0xf]
      %v2104 = vld [vmem:[%s2102] ss:$8 sm:$0xf0]
      %v2105 = vor.u32 %v2103, %v2104
      %s2106 = scalar_lea.vmem [#allocation2], 396
      %v2107 = vld [vmem:[%s2106] ss:$8 sm:$0xf]
      %v2108 = vld [vmem:[%s2106] ss:$8 sm:$0xf0]
      %v2109 = vor.u32 %v2107, %v2108
      %s2110 = scalar_lea.vmem [#allocation2], 460
      %v2111 = vld [vmem:[%s2110] ss:$8 sm:$0xf]
      %v2112 = vld [vmem:[%s2110] ss:$8 sm:$0xf0]
      %v2113 = vor.u32 %v2111, %v2112
      %s2114 = scalar_lea.vmem [#allocation2], 524
      %v2115 = vld [vmem:[%s2114] ss:$8 sm:$0xf]
      %v2116 = vld [vmem:[%s2114] ss:$8 sm:$0xf0]
      %v2117 = vor.u32 %v2115, %v2116
      %s2118 = scalar_lea.vmem [#allocation2], 588
      %v2119 = vld [vmem:[%s2118] ss:$8 sm:$0xf]
      %v2120 = vld [vmem:[%s2118] ss:$8 sm:$0xf0]
      %v2121 = vor.u32 %v2119, %v2120
      %s2122 = scalar_lea.vmem [#allocation2], 652
      %v2123 = vld [vmem:[%s2122] ss:$8 sm:$0xf]
      %v2124 = vld [vmem:[%s2122] ss:$8 sm:$0xf0]
      %v2125 = vor.u32 %v2123, %v2124
      %s2126 = scalar_lea.vmem [#allocation2], 716
      %v2127 = vld [vmem:[%s2126] ss:$8 sm:$0xf]
      %v2128 = vld [vmem:[%s2126] ss:$8 sm:$0xf0]
      %v2129 = vor.u32 %v2127, %v2128
      %s2130 = scalar_lea.vmem [#allocation2], 780
      %v2131 = vld [vmem:[%s2130] ss:$8 sm:$0xf]
      %v2132 = vld [vmem:[%s2130] ss:$8 sm:$0xf0]
      %v2133 = vor.u32 %v2131, %v2132
      %s2134 = scalar_lea.vmem [#allocation2], 844
      %v2135 = vld [vmem:[%s2134] ss:$8 sm:$0xf]
      %v2136 = vld [vmem:[%s2134] ss:$8 sm:$0xf0]
      %v2137 = vor.u32 %v2135, %v2136
      %s2138 = scalar_lea.vmem [#allocation2], 908
      %v2139 = vld [vmem:[%s2138] ss:$8 sm:$0xf]
      %v2140 = vld [vmem:[%s2138] ss:$8 sm:$0x30]
      %v2141 = vor.u32 %v2139, %v2140
      %v2142 = vld [vmem:[%s1 + $0x4] sm:$0x1]
      %v2143 = vlaneseq
      %v2144 = vshrl.u32 %v2143, 7
      %v2145 = vsub.s32 0, %v2144
      %v2146 = vrot.slane %v2142, %v2145
      %v2147 = vmul.f32 %v975, %v2146
      %v2148 = vmul.f32 %v980, %v2146
      %v2149 = vmul.f32 %v985, %v2146
      %v2150 = vmul.f32 %v990, %v2146
      %v2151 = vmul.f32 %v995, %v2146
      %v2152 = vmul.f32 %v1000, %v2146
      %v2153 = vmul.f32 %v1005, %v2146
      %v2154 = vmul.f32 %v1010, %v2146
      %v2155 = vmul.f32 %v1015, %v2146
      %v2156 = vmul.f32 %v1020, %v2146
      %v2157 = vmul.f32 %v1025, %v2146
      %v2158 = vmul.f32 %v1030, %v2146
      %v2159 = vmul.f32 %v1035, %v2146
      %v2160 = vmul.f32 %v1040, %v2146
      %v2161 = vmul.f32 %v1045, %v2146
      %v2162 = vadd.f32 %v1962, %v2147
      %v2163 = vadd.f32 %v1963, %v2148
      %v2164 = vadd.f32 %v1964, %v2149
      %v2165 = vadd.f32 %v1965, %v2150
      %v2166 = vadd.f32 %v1966, %v2151
      %v2167 = vadd.f32 %v1967, %v2152
      %v2168 = vadd.f32 %v1968, %v2153
      %v2169 = vadd.f32 %v1969, %v2154
      %v2170 = vadd.f32 %v1970, %v2155
      %v2171 = vadd.f32 %v1971, %v2156
      %v2172 = vadd.f32 %v1972, %v2157
      %v2173 = vadd.f32 %v1973, %v2158
      %v2174 = vadd.f32 %v1974, %v2159
      %v2175 = vadd.f32 %v1975, %v2160
      %v2176 = vadd.f32 %v1976, %v2161
      %2178 = vset.pattern.permute.xlu0 0
      %2179 = vperm.xlu0 %2178, %v2085
      %v2180 = vpop.permute.xlu0 %2179
      %2183 = vset.pattern.permute.xlu0 0
      %2184 = vperm.xlu0 %2183, %v2089
      %v2185 = vpop.permute.xlu0 %2184
      %2188 = vset.pattern.permute.xlu0 0
      %2189 = vperm.xlu0 %2188, %v2093
      %v2190 = vpop.permute.xlu0 %2189
      %2193 = vset.pattern.permute.xlu0 0
      %2194 = vperm.xlu0 %2193, %v2097
      %v2195 = vpop.permute.xlu0 %2194
      %2198 = vset.pattern.permute.xlu0 0
      %2199 = vperm.xlu0 %2198, %v2101
      %v2200 = vpop.permute.xlu0 %2199
      %2203 = vset.pattern.permute.xlu0 0
      %2204 = vperm.xlu0 %2203, %v2105
      %v2205 = vpop.permute.xlu0 %2204
      %2208 = vset.pattern.permute.xlu0 0
      %2209 = vperm.xlu0 %2208, %v2109
      %v2210 = vpop.permute.xlu0 %2209
      %2213 = vset.pattern.permute.xlu0 0
      %2214 = vperm.xlu0 %2213, %v2113
      %v2215 = vpop.permute.xlu0 %2214
      %2218 = vset.pattern.permute.xlu0 0
      %2219 = vperm.xlu0 %2218, %v2117
      %v2220 = vpop.permute.xlu0 %2219
      %2223 = vset.pattern.permute.xlu0 0
      %2224 = vperm.xlu0 %2223, %v2121
      %v2225 = vpop.permute.xlu0 %2224
      %2228 = vset.pattern.permute.xlu0 0
      %2229 = vperm.xlu0 %2228, %v2125
      %v2230 = vpop.permute.xlu0 %2229
      %2233 = vset.pattern.permute.xlu0 0
      %2234 = vperm.xlu0 %2233, %v2129
      %v2235 = vpop.permute.xlu0 %2234
      %2238 = vset.pattern.permute.xlu0 0
      %2239 = vperm.xlu0 %2238, %v2133
      %v2240 = vpop.permute.xlu0 %2239
      %2243 = vset.pattern.permute.xlu0 0
      %2244 = vperm.xlu0 %2243, %v2137
      %v2245 = vpop.permute.xlu0 %2244
      %2248 = vset.pattern.permute.xlu0 0
      %2249 = vperm.xlu0 %2248, %v2141
      %v2250 = vpop.permute.xlu0 %2249
      %v2252 = vmul.f32 %v2180, %v2146
      %v2253 = vmul.f32 %v2185, %v2146
      %v2254 = vmul.f32 %v2190, %v2146
      %v2255 = vmul.f32 %v2195, %v2146
      %v2256 = vmul.f32 %v2200, %v2146
      %v2257 = vmul.f32 %v2205, %v2146
      %v2258 = vmul.f32 %v2210, %v2146
      %v2259 = vmul.f32 %v2215, %v2146
      %v2260 = vmul.f32 %v2220, %v2146
      %v2261 = vmul.f32 %v2225, %v2146
      %v2262 = vmul.f32 %v2230, %v2146
      %v2263 = vmul.f32 %v2235, %v2146
      %v2264 = vmul.f32 %v2240, %v2146
      %v2265 = vmul.f32 %v2245, %v2146
      %v2266 = vmul.f32 %v2250, %v2146
      %v2267 = vadd.f32 %v2067, %v2252
      %v2268 = vadd.f32 %v2068, %v2253
      %v2269 = vadd.f32 %v2069, %v2254
      %v2270 = vadd.f32 %v2070, %v2255
      %v2271 = vadd.f32 %v2071, %v2256
      %v2272 = vadd.f32 %v2072, %v2257
      %v2273 = vadd.f32 %v2073, %v2258
      %v2274 = vadd.f32 %v2074, %v2259
      %v2275 = vadd.f32 %v2075, %v2260
      %v2276 = vadd.f32 %v2076, %v2261
      %v2277 = vadd.f32 %v2077, %v2262
      %v2278 = vadd.f32 %v2078, %v2263
      %v2279 = vadd.f32 %v2079, %v2264
      %v2280 = vadd.f32 %v2080, %v2265
      %v2281 = vadd.f32 %v2081, %v2266
      %s2282 = scalar_lea.vmem [#allocation2], 13
      %v2283 = vld [vmem:[%s2282] ss:$8 sm:$0xf]
      %v2284 = vld [vmem:[%s2282] ss:$8 sm:$0xf0]
      %v2285 = vor.u32 %v2283, %v2284
      %s2286 = scalar_lea.vmem [#allocation2], 77
      %v2287 = vld [vmem:[%s2286] ss:$8 sm:$0xf]
      %v2288 = vld [vmem:[%s2286] ss:$8 sm:$0xf0]
      %v2289 = vor.u32 %v2287, %v2288
      %s2290 = scalar_lea.vmem [#allocation2], 141
      %v2291 = vld [vmem:[%s2290] ss:$8 sm:$0xf]
      %v2292 = vld [vmem:[%s2290] ss:$8 sm:$0xf0]
      %v2293 = vor.u32 %v2291, %v2292
      %s2294 = scalar_lea.vmem [#allocation2], 205
      %v2295 = vld [vmem:[%s2294] ss:$8 sm:$0xf]
      %v2296 = vld [vmem:[%s2294] ss:$8 sm:$0xf0]
      %v2297 = vor.u32 %v2295, %v2296
      %s2298 = scalar_lea.vmem [#allocation2], 269
      %v2299 = vld [vmem:[%s2298] ss:$8 sm:$0xf]
      %v2300 = vld [vmem:[%s2298] ss:$8 sm:$0xf0]
      %v2301 = vor.u32 %v2299, %v2300
      %s2302 = scalar_lea.vmem [#allocation2], 333
      %v2303 = vld [vmem:[%s2302] ss:$8 sm:$0xf]
      %v2304 = vld [vmem:[%s2302] ss:$8 sm:$0xf0]
      %v2305 = vor.u32 %v2303, %v2304
      %s2306 = scalar_lea.vmem [#allocation2], 397
      %v2307 = vld [vmem:[%s2306] ss:$8 sm:$0xf]
      %v2308 = vld [vmem:[%s2306] ss:$8 sm:$0xf0]
      %v2309 = vor.u32 %v2307, %v2308
      %s2310 = scalar_lea.vmem [#allocation2], 461
      %v2311 = vld [vmem:[%s2310] ss:$8 sm:$0xf]
      %v2312 = vld [vmem:[%s2310] ss:$8 sm:$0xf0]
      %v2313 = vor.u32 %v2311, %v2312
      %s2314 = scalar_lea.vmem [#allocation2], 525
      %v2315 = vld [vmem:[%s2314] ss:$8 sm:$0xf]
      %v2316 = vld [vmem:[%s2314] ss:$8 sm:$0xf0]
      %v2317 = vor.u32 %v2315, %v2316
      %s2318 = scalar_lea.vmem [#allocation2], 589
      %v2319 = vld [vmem:[%s2318] ss:$8 sm:$0xf]
      %v2320 = vld [vmem:[%s2318] ss:$8 sm:$0xf0]
      %v2321 = vor.u32 %v2319, %v2320
      %s2322 = scalar_lea.vmem [#allocation2], 653
      %v2323 = vld [vmem:[%s2322] ss:$8 sm:$0xf]
      %v2324 = vld [vmem:[%s2322] ss:$8 sm:$0xf0]
      %v2325 = vor.u32 %v2323, %v2324
      %s2326 = scalar_lea.vmem [#allocation2], 717
      %v2327 = vld [vmem:[%s2326] ss:$8 sm:$0xf]
      %v2328 = vld [vmem:[%s2326] ss:$8 sm:$0xf0]
      %v2329 = vor.u32 %v2327, %v2328
      %s2330 = scalar_lea.vmem [#allocation2], 781
      %v2331 = vld [vmem:[%s2330] ss:$8 sm:$0xf]
      %v2332 = vld [vmem:[%s2330] ss:$8 sm:$0xf0]
      %v2333 = vor.u32 %v2331, %v2332
      %s2334 = scalar_lea.vmem [#allocation2], 845
      %v2335 = vld [vmem:[%s2334] ss:$8 sm:$0xf]
      %v2336 = vld [vmem:[%s2334] ss:$8 sm:$0xf0]
      %v2337 = vor.u32 %v2335, %v2336
      %s2338 = scalar_lea.vmem [#allocation2], 909
      %v2339 = vld [vmem:[%s2338] ss:$8 sm:$0xf]
      %v2340 = vld [vmem:[%s2338] ss:$8 sm:$0x30]
      %v2341 = vor.u32 %v2339, %v2340
      %v2342 = vld [vmem:[%s1 + $0x5] sm:$0x1]
      %v2343 = vlaneseq
      %v2344 = vshrl.u32 %v2343, 7
      %v2345 = vsub.s32 0, %v2344
      %v2346 = vrot.slane %v2342, %v2345
      %v2347 = vmul.f32 %v1310, %v2346
      %v2348 = vmul.f32 %v1315, %v2346
      %v2349 = vmul.f32 %v1320, %v2346
      %v2350 = vmul.f32 %v1325, %v2346
      %v2351 = vmul.f32 %v1330, %v2346
      %v2352 = vmul.f32 %v1335, %v2346
      %v2353 = vmul.f32 %v1340, %v2346
      %v2354 = vmul.f32 %v1345, %v2346
      %v2355 = vmul.f32 %v1350, %v2346
      %v2356 = vmul.f32 %v1355, %v2346
      %v2357 = vmul.f32 %v1360, %v2346
      %v2358 = vmul.f32 %v1365, %v2346
      %v2359 = vmul.f32 %v1370, %v2346
      %v2360 = vmul.f32 %v1375, %v2346
      %v2361 = vmul.f32 %v1380, %v2346
      %v2362 = vadd.f32 %v2162, %v2347
      %v2363 = vadd.f32 %v2163, %v2348
      %v2364 = vadd.f32 %v2164, %v2349
      %v2365 = vadd.f32 %v2165, %v2350
      %v2366 = vadd.f32 %v2166, %v2351
      %v2367 = vadd.f32 %v2167, %v2352
      %v2368 = vadd.f32 %v2168, %v2353
      %v2369 = vadd.f32 %v2169, %v2354
      %v2370 = vadd.f32 %v2170, %v2355
      %v2371 = vadd.f32 %v2171, %v2356
      %v2372 = vadd.f32 %v2172, %v2357
      %v2373 = vadd.f32 %v2173, %v2358
      %v2374 = vadd.f32 %v2174, %v2359
      %v2375 = vadd.f32 %v2175, %v2360
      %v2376 = vadd.f32 %v2176, %v2361
      %2378 = vset.pattern.permute.xlu0 0
      %2379 = vperm.xlu0 %2378, %v2285
      %v2380 = vpop.permute.xlu0 %2379
      %2383 = vset.pattern.permute.xlu0 0
      %2384 = vperm.xlu0 %2383, %v2289
      %v2385 = vpop.permute.xlu0 %2384
      %2388 = vset.pattern.permute.xlu0 0
      %2389 = vperm.xlu0 %2388, %v2293
      %v2390 = vpop.permute.xlu0 %2389
      %2393 = vset.pattern.permute.xlu0 0
      %2394 = vperm.xlu0 %2393, %v2297
      %v2395 = vpop.permute.xlu0 %2394
      %2398 = vset.pattern.permute.xlu0 0
      %2399 = vperm.xlu0 %2398, %v2301
      %v2400 = vpop.permute.xlu0 %2399
      %2403 = vset.pattern.permute.xlu0 0
      %2404 = vperm.xlu0 %2403, %v2305
      %v2405 = vpop.permute.xlu0 %2404
      %2408 = vset.pattern.permute.xlu0 0
      %2409 = vperm.xlu0 %2408, %v2309
      %v2410 = vpop.permute.xlu0 %2409
      %2413 = vset.pattern.permute.xlu0 0
      %2414 = vperm.xlu0 %2413, %v2313
      %v2415 = vpop.permute.xlu0 %2414
      %2418 = vset.pattern.permute.xlu0 0
      %2419 = vperm.xlu0 %2418, %v2317
      %v2420 = vpop.permute.xlu0 %2419
      %2423 = vset.pattern.permute.xlu0 0
      %2424 = vperm.xlu0 %2423, %v2321
      %v2425 = vpop.permute.xlu0 %2424
      %2428 = vset.pattern.permute.xlu0 0
      %2429 = vperm.xlu0 %2428, %v2325
      %v2430 = vpop.permute.xlu0 %2429
      %2433 = vset.pattern.permute.xlu0 0
      %2434 = vperm.xlu0 %2433, %v2329
      %v2435 = vpop.permute.xlu0 %2434
      %2438 = vset.pattern.permute.xlu0 0
      %2439 = vperm.xlu0 %2438, %v2333
      %v2440 = vpop.permute.xlu0 %2439
      %2443 = vset.pattern.permute.xlu0 0
      %2444 = vperm.xlu0 %2443, %v2337
      %v2445 = vpop.permute.xlu0 %2444
      %2448 = vset.pattern.permute.xlu0 0
      %2449 = vperm.xlu0 %2448, %v2341
      %v2450 = vpop.permute.xlu0 %2449
      %v2452 = vmul.f32 %v2380, %v2346
      %v2453 = vmul.f32 %v2385, %v2346
      %v2454 = vmul.f32 %v2390, %v2346
      %v2455 = vmul.f32 %v2395, %v2346
      %v2456 = vmul.f32 %v2400, %v2346
      %v2457 = vmul.f32 %v2405, %v2346
      %v2458 = vmul.f32 %v2410, %v2346
      %v2459 = vmul.f32 %v2415, %v2346
      %v2460 = vmul.f32 %v2420, %v2346
      %v2461 = vmul.f32 %v2425, %v2346
      %v2462 = vmul.f32 %v2430, %v2346
      %v2463 = vmul.f32 %v2435, %v2346
      %v2464 = vmul.f32 %v2440, %v2346
      %v2465 = vmul.f32 %v2445, %v2346
      %v2466 = vmul.f32 %v2450, %v2346
      %v2467 = vadd.f32 %v2267, %v2452
      %v2468 = vadd.f32 %v2268, %v2453
      %v2469 = vadd.f32 %v2269, %v2454
      %v2470 = vadd.f32 %v2270, %v2455
      %v2471 = vadd.f32 %v2271, %v2456
      %v2472 = vadd.f32 %v2272, %v2457
      %v2473 = vadd.f32 %v2273, %v2458
      %v2474 = vadd.f32 %v2274, %v2459
      %v2475 = vadd.f32 %v2275, %v2460
      %v2476 = vadd.f32 %v2276, %v2461
      %v2477 = vadd.f32 %v2277, %v2462
      %v2478 = vadd.f32 %v2278, %v2463
      %v2479 = vadd.f32 %v2279, %v2464
      %v2480 = vadd.f32 %v2280, %v2465
      %v2481 = vadd.f32 %v2281, %v2466
      %s2482 = scalar_lea.vmem [#allocation2], 14
      %v2483 = vld [vmem:[%s2482] ss:$8 sm:$0xf]
      %v2484 = vld [vmem:[%s2482] ss:$8 sm:$0xf0]
      %v2485 = vor.u32 %v2483, %v2484
      %s2486 = scalar_lea.vmem [#allocation2], 78
      %v2487 = vld [vmem:[%s2486] ss:$8 sm:$0xf]
      %v2488 = vld [vmem:[%s2486] ss:$8 sm:$0xf0]
      %v2489 = vor.u32 %v2487, %v2488
      %s2490 = scalar_lea.vmem [#allocation2], 142
      %v2491 = vld [vmem:[%s2490] ss:$8 sm:$0xf]
      %v2492 = vld [vmem:[%s2490] ss:$8 sm:$0xf0]
      %v2493 = vor.u32 %v2491, %v2492
      %s2494 = scalar_lea.vmem [#allocation2], 206
      %v2495 = vld [vmem:[%s2494] ss:$8 sm:$0xf]
      %v2496 = vld [vmem:[%s2494] ss:$8 sm:$0xf0]
      %v2497 = vor.u32 %v2495, %v2496
      %s2498 = scalar_lea.vmem [#allocation2], 270
      %v2499 = vld [vmem:[%s2498] ss:$8 sm:$0xf]
      %v2500 = vld [vmem:[%s2498] ss:$8 sm:$0xf0]
      %v2501 = vor.u32 %v2499, %v2500
      %s2502 = scalar_lea.vmem [#allocation2], 334
      %v2503 = vld [vmem:[%s2502] ss:$8 sm:$0xf]
      %v2504 = vld [vmem:[%s2502] ss:$8 sm:$0xf0]
      %v2505 = vor.u32 %v2503, %v2504
      %s2506 = scalar_lea.vmem [#allocation2], 398
      %v2507 = vld [vmem:[%s2506] ss:$8 sm:$0xf]
      %v2508 = vld [vmem:[%s2506] ss:$8 sm:$0xf0]
      %v2509 = vor.u32 %v2507, %v2508
      %s2510 = scalar_lea.vmem [#allocation2], 462
      %v2511 = vld [vmem:[%s2510] ss:$8 sm:$0xf]
      %v2512 = vld [vmem:[%s2510] ss:$8 sm:$0xf0]
      %v2513 = vor.u32 %v2511, %v2512
      %s2514 = scalar_lea.vmem [#allocation2], 526
      %v2515 = vld [vmem:[%s2514] ss:$8 sm:$0xf]
      %v2516 = vld [vmem:[%s2514] ss:$8 sm:$0xf0]
      %v2517 = vor.u32 %v2515, %v2516
      %s2518 = scalar_lea.vmem [#allocation2], 590
      %v2519 = vld [vmem:[%s2518] ss:$8 sm:$0xf]
      %v2520 = vld [vmem:[%s2518] ss:$8 sm:$0xf0]
      %v2521 = vor.u32 %v2519, %v2520
      %s2522 = scalar_lea.vmem [#allocation2], 654
      %v2523 = vld [vmem:[%s2522] ss:$8 sm:$0xf]
      %v2524 = vld [vmem:[%s2522] ss:$8 sm:$0xf0]
      %v2525 = vor.u32 %v2523, %v2524
      %s2526 = scalar_lea.vmem [#allocation2], 718
      %v2527 = vld [vmem:[%s2526] ss:$8 sm:$0xf]
      %v2528 = vld [vmem:[%s2526] ss:$8 sm:$0xf0]
      %v2529 = vor.u32 %v2527, %v2528
      %s2530 = scalar_lea.vmem [#allocation2], 782
      %v2531 = vld [vmem:[%s2530] ss:$8 sm:$0xf]
      %v2532 = vld [vmem:[%s2530] ss:$8 sm:$0xf0]
      %v2533 = vor.u32 %v2531, %v2532
      %s2534 = scalar_lea.vmem [#allocation2], 846
      %v2535 = vld [vmem:[%s2534] ss:$8 sm:$0xf]
      %v2536 = vld [vmem:[%s2534] ss:$8 sm:$0xf0]
      %v2537 = vor.u32 %v2535, %v2536
      %s2538 = scalar_lea.vmem [#allocation2], 910
      %v2539 = vld [vmem:[%s2538] ss:$8 sm:$0xf]
      %v2540 = vld [vmem:[%s2538] ss:$8 sm:$0x30]
      %v2541 = vor.u32 %v2539, %v2540
      %v2542 = vld [vmem:[%s1 + $0x6] sm:$0x1]
      %v2543 = vlaneseq
      %v2544 = vshrl.u32 %v2543, 7
      %v2545 = vsub.s32 0, %v2544
      %v2546 = vrot.slane %v2542, %v2545
      %v2547 = vmul.f32 %v1645, %v2546
      %v2548 = vmul.f32 %v1650, %v2546
      %v2549 = vmul.f32 %v1655, %v2546
      %v2550 = vmul.f32 %v1660, %v2546
      %v2551 = vmul.f32 %v1665, %v2546
      %v2552 = vmul.f32 %v1670, %v2546
      %v2553 = vmul.f32 %v1675, %v2546
      %v2554 = vmul.f32 %v1680, %v2546
      %v2555 = vmul.f32 %v1685, %v2546
      %v2556 = vmul.f32 %v1690, %v2546
      %v2557 = vmul.f32 %v1695, %v2546
      %v2558 = vmul.f32 %v1700, %v2546
      %v2559 = vmul.f32 %v1705, %v2546
      %v2560 = vmul.f32 %v1710, %v2546
      %v2561 = vmul.f32 %v1715, %v2546
      %v2562 = vadd.f32 %v2362, %v2547
      %v2563 = vadd.f32 %v2363, %v2548
      %v2564 = vadd.f32 %v2364, %v2549
      %v2565 = vadd.f32 %v2365, %v2550
      %v2566 = vadd.f32 %v2366, %v2551
      %v2567 = vadd.f32 %v2367, %v2552
      %v2568 = vadd.f32 %v2368, %v2553
      %v2569 = vadd.f32 %v2369, %v2554
      %v2570 = vadd.f32 %v2370, %v2555
      %v2571 = vadd.f32 %v2371, %v2556
      %v2572 = vadd.f32 %v2372, %v2557
      %v2573 = vadd.f32 %v2373, %v2558
      %v2574 = vadd.f32 %v2374, %v2559
      %v2575 = vadd.f32 %v2375, %v2560
      %v2576 = vadd.f32 %v2376, %v2561
      %2578 = vset.pattern.permute.xlu0 0
      %2579 = vperm.xlu0 %2578, %v2485
      %v2580 = vpop.permute.xlu0 %2579
      %2583 = vset.pattern.permute.xlu0 0
      %2584 = vperm.xlu0 %2583, %v2489
      %v2585 = vpop.permute.xlu0 %2584
      %2588 = vset.pattern.permute.xlu0 0
      %2589 = vperm.xlu0 %2588, %v2493
      %v2590 = vpop.permute.xlu0 %2589
      %2593 = vset.pattern.permute.xlu0 0
      %2594 = vperm.xlu0 %2593, %v2497
      %v2595 = vpop.permute.xlu0 %2594
      %2598 = vset.pattern.permute.xlu0 0
      %2599 = vperm.xlu0 %2598, %v2501
      %v2600 = vpop.permute.xlu0 %2599
      %2603 = vset.pattern.permute.xlu0 0
      %2604 = vperm.xlu0 %2603, %v2505
      %v2605 = vpop.permute.xlu0 %2604
      %2608 = vset.pattern.permute.xlu0 0
      %2609 = vperm.xlu0 %2608, %v2509
      %v2610 = vpop.permute.xlu0 %2609
      %2613 = vset.pattern.permute.xlu0 0
      %2614 = vperm.xlu0 %2613, %v2513
      %v2615 = vpop.permute.xlu0 %2614
      %2618 = vset.pattern.permute.xlu0 0
      %2619 = vperm.xlu0 %2618, %v2517
      %v2620 = vpop.permute.xlu0 %2619
      %2623 = vset.pattern.permute.xlu0 0
      %2624 = vperm.xlu0 %2623, %v2521
      %v2625 = vpop.permute.xlu0 %2624
      %2628 = vset.pattern.permute.xlu0 0
      %2629 = vperm.xlu0 %2628, %v2525
      %v2630 = vpop.permute.xlu0 %2629
      %2633 = vset.pattern.permute.xlu0 0
      %2634 = vperm.xlu0 %2633, %v2529
      %v2635 = vpop.permute.xlu0 %2634
      %2638 = vset.pattern.permute.xlu0 0
      %2639 = vperm.xlu0 %2638, %v2533
      %v2640 = vpop.permute.xlu0 %2639
      %2643 = vset.pattern.permute.xlu0 0
      %2644 = vperm.xlu0 %2643, %v2537
      %v2645 = vpop.permute.xlu0 %2644
      %2648 = vset.pattern.permute.xlu0 0
      %2649 = vperm.xlu0 %2648, %v2541
      %v2650 = vpop.permute.xlu0 %2649
      %v2652 = vmul.f32 %v2580, %v2546
      %v2653 = vmul.f32 %v2585, %v2546
      %v2654 = vmul.f32 %v2590, %v2546
      %v2655 = vmul.f32 %v2595, %v2546
      %v2656 = vmul.f32 %v2600, %v2546
      %v2657 = vmul.f32 %v2605, %v2546
      %v2658 = vmul.f32 %v2610, %v2546
      %v2659 = vmul.f32 %v2615, %v2546
      %v2660 = vmul.f32 %v2620, %v2546
      %v2661 = vmul.f32 %v2625, %v2546
      %v2662 = vmul.f32 %v2630, %v2546
      %v2663 = vmul.f32 %v2635, %v2546
      %v2664 = vmul.f32 %v2640, %v2546
      %v2665 = vmul.f32 %v2645, %v2546
      %v2666 = vmul.f32 %v2650, %v2546
      %v2667 = vadd.f32 %v2467, %v2652
      %v2668 = vadd.f32 %v2468, %v2653
      %v2669 = vadd.f32 %v2469, %v2654
      %v2670 = vadd.f32 %v2470, %v2655
      %v2671 = vadd.f32 %v2471, %v2656
      %v2672 = vadd.f32 %v2472, %v2657
      %v2673 = vadd.f32 %v2473, %v2658
      %v2674 = vadd.f32 %v2474, %v2659
      %v2675 = vadd.f32 %v2475, %v2660
      %v2676 = vadd.f32 %v2476, %v2661
      %v2677 = vadd.f32 %v2477, %v2662
      %v2678 = vadd.f32 %v2478, %v2663
      %v2679 = vadd.f32 %v2479, %v2664
      %v2680 = vadd.f32 %v2480, %v2665
      %v2681 = vadd.f32 %v2481, %v2666
      %s2682 = scalar_lea.vmem [#allocation2], 15
      %v2683 = vld [vmem:[%s2682] ss:$8 sm:$0xf]
      %v2684 = vld [vmem:[%s2682] ss:$8 sm:$0xf0]
      %v2685 = vor.u32 %v2683, %v2684
      %s2686 = scalar_lea.vmem [#allocation2], 79
      %v2687 = vld [vmem:[%s2686] ss:$8 sm:$0xf]
      %v2688 = vld [vmem:[%s2686] ss:$8 sm:$0xf0]
      %v2689 = vor.u32 %v2687, %v2688
      %s2690 = scalar_lea.vmem [#allocation2], 143
      %v2691 = vld [vmem:[%s2690] ss:$8 sm:$0xf]
      %v2692 = vld [vmem:[%s2690] ss:$8 sm:$0xf0]
      %v2693 = vor.u32 %v2691, %v2692
      %s2694 = scalar_lea.vmem [#allocation2], 207
      %v2695 = vld [vmem:[%s2694] ss:$8 sm:$0xf]
      %v2696 = vld [vmem:[%s2694] ss:$8 sm:$0xf0]
      %v2697 = vor.u32 %v2695, %v2696
      %s2698 = scalar_lea.vmem [#allocation2], 271
      %v2699 = vld [vmem:[%s2698] ss:$8 sm:$0xf]
      %v2700 = vld [vmem:[%s2698] ss:$8 sm:$0xf0]
      %v2701 = vor.u32 %v2699, %v2700
      %s2702 = scalar_lea.vmem [#allocation2], 335
      %v2703 = vld [vmem:[%s2702] ss:$8 sm:$0xf]
      %v2704 = vld [vmem:[%s2702] ss:$8 sm:$0xf0]
      %v2705 = vor.u32 %v2703, %v2704
      %s2706 = scalar_lea.vmem [#allocation2], 399
      %v2707 = vld [vmem:[%s2706] ss:$8 sm:$0xf]
      %v2708 = vld [vmem:[%s2706] ss:$8 sm:$0xf0]
      %v2709 = vor.u32 %v2707, %v2708
      %s2710 = scalar_lea.vmem [#allocation2], 463
      %v2711 = vld [vmem:[%s2710] ss:$8 sm:$0xf]
      %v2712 = vld [vmem:[%s2710] ss:$8 sm:$0xf0]
      %v2713 = vor.u32 %v2711, %v2712
      %s2714 = scalar_lea.vmem [#allocation2], 527
      %v2715 = vld [vmem:[%s2714] ss:$8 sm:$0xf]
      %v2716 = vld [vmem:[%s2714] ss:$8 sm:$0xf0]
      %v2717 = vor.u32 %v2715, %v2716
      %s2718 = scalar_lea.vmem [#allocation2], 591
      %v2719 = vld [vmem:[%s2718] ss:$8 sm:$0xf]
      %v2720 = vld [vmem:[%s2718] ss:$8 sm:$0xf0]
      %v2721 = vor.u32 %v2719, %v2720
      %s2722 = scalar_lea.vmem [#allocation2], 655
      %v2723 = vld [vmem:[%s2722] ss:$8 sm:$0xf]
      %v2724 = vld [vmem:[%s2722] ss:$8 sm:$0xf0]
      %v2725 = vor.u32 %v2723, %v2724
      %s2726 = scalar_lea.vmem [#allocation2], 719
      %v2727 = vld [vmem:[%s2726] ss:$8 sm:$0xf]
      %v2728 = vld [vmem:[%s2726] ss:$8 sm:$0xf0]
      %v2729 = vor.u32 %v2727, %v2728
      %s2730 = scalar_lea.vmem [#allocation2], 783
      %v2731 = vld [vmem:[%s2730] ss:$8 sm:$0xf]
      %v2732 = vld [vmem:[%s2730] ss:$8 sm:$0xf0]
      %v2733 = vor.u32 %v2731, %v2732
      %s2734 = scalar_lea.vmem [#allocation2], 847
      %v2735 = vld [vmem:[%s2734] ss:$8 sm:$0xf]
      %v2736 = vld [vmem:[%s2734] ss:$8 sm:$0xf0]
      %v2737 = vor.u32 %v2735, %v2736
      %s2738 = scalar_lea.vmem [#allocation2], 911
      %v2739 = vld [vmem:[%s2738] ss:$8 sm:$0xf]
      %v2740 = vld [vmem:[%s2738] ss:$8 sm:$0x30]
      %v2741 = vor.u32 %v2739, %v2740
      %v2742 = vld [vmem:[%s1 + $0x7] sm:$0x1]
      %v2743 = vlaneseq
      %v2744 = vshrl.u32 %v2743, 7
      %v2745 = vsub.s32 0, %v2744
      %v2746 = vrot.slane %v2742, %v2745
      %v2747 = vmul.f32 %v1980, %v2746
      %v2748 = vmul.f32 %v1985, %v2746
      %v2749 = vmul.f32 %v1990, %v2746
      %v2750 = vmul.f32 %v1995, %v2746
      %v2751 = vmul.f32 %v2000, %v2746
      %v2752 = vmul.f32 %v2005, %v2746
      %v2753 = vmul.f32 %v2010, %v2746
      %v2754 = vmul.f32 %v2015, %v2746
      %v2755 = vmul.f32 %v2020, %v2746
      %v2756 = vmul.f32 %v2025, %v2746
      %v2757 = vmul.f32 %v2030, %v2746
      %v2758 = vmul.f32 %v2035, %v2746
      %v2759 = vmul.f32 %v2040, %v2746
      %v2760 = vmul.f32 %v2045, %v2746
      %v2761 = vmul.f32 %v2050, %v2746
      %v2762 = vadd.f32 %v2562, %v2747
      %v2763 = vadd.f32 %v2563, %v2748
      %v2764 = vadd.f32 %v2564, %v2749
      %v2765 = vadd.f32 %v2565, %v2750
      %v2766 = vadd.f32 %v2566, %v2751
      %v2767 = vadd.f32 %v2567, %v2752
      %v2768 = vadd.f32 %v2568, %v2753
      %v2769 = vadd.f32 %v2569, %v2754
      %v2770 = vadd.f32 %v2570, %v2755
      %v2771 = vadd.f32 %v2571, %v2756
      %v2772 = vadd.f32 %v2572, %v2757
      %v2773 = vadd.f32 %v2573, %v2758
      %v2774 = vadd.f32 %v2574, %v2759
      %v2775 = vadd.f32 %v2575, %v2760
      %v2776 = vadd.f32 %v2576, %v2761
      %2778 = vset.pattern.permute.xlu0 0
      %2779 = vperm.xlu0 %2778, %v2685
      %v2780 = vpop.permute.xlu0 %2779
      %2783 = vset.pattern.permute.xlu0 0
      %2784 = vperm.xlu0 %2783, %v2689
      %v2785 = vpop.permute.xlu0 %2784
      %2788 = vset.pattern.permute.xlu0 0
      %2789 = vperm.xlu0 %2788, %v2693
      %v2790 = vpop.permute.xlu0 %2789
      %2793 = vset.pattern.permute.xlu0 0
      %2794 = vperm.xlu0 %2793, %v2697
      %v2795 = vpop.permute.xlu0 %2794
      %2798 = vset.pattern.permute.xlu0 0
      %2799 = vperm.xlu0 %2798, %v2701
      %v2800 = vpop.permute.xlu0 %2799
      %2803 = vset.pattern.permute.xlu0 0
      %2804 = vperm.xlu0 %2803, %v2705
      %v2805 = vpop.permute.xlu0 %2804
      %2808 = vset.pattern.permute.xlu0 0
      %2809 = vperm.xlu0 %2808, %v2709
      %v2810 = vpop.permute.xlu0 %2809
      %2813 = vset.pattern.permute.xlu0 0
      %2814 = vperm.xlu0 %2813, %v2713
      %v2815 = vpop.permute.xlu0 %2814
      %2818 = vset.pattern.permute.xlu0 0
      %2819 = vperm.xlu0 %2818, %v2717
      %v2820 = vpop.permute.xlu0 %2819
      %2823 = vset.pattern.permute.xlu0 0
      %2824 = vperm.xlu0 %2823, %v2721
      %v2825 = vpop.permute.xlu0 %2824
      %2828 = vset.pattern.permute.xlu0 0
      %2829 = vperm.xlu0 %2828, %v2725
      %v2830 = vpop.permute.xlu0 %2829
      %2833 = vset.pattern.permute.xlu0 0
      %2834 = vperm.xlu0 %2833, %v2729
      %v2835 = vpop.permute.xlu0 %2834
      %2838 = vset.pattern.permute.xlu0 0
      %2839 = vperm.xlu0 %2838, %v2733
      %v2840 = vpop.permute.xlu0 %2839
      %2843 = vset.pattern.permute.xlu0 0
      %2844 = vperm.xlu0 %2843, %v2737
      %v2845 = vpop.permute.xlu0 %2844
      %2848 = vset.pattern.permute.xlu0 0
      %2849 = vperm.xlu0 %2848, %v2741
      %v2850 = vpop.permute.xlu0 %2849
      %v2852 = vmul.f32 %v2780, %v2746
      %v2853 = vmul.f32 %v2785, %v2746
      %v2854 = vmul.f32 %v2790, %v2746
      %v2855 = vmul.f32 %v2795, %v2746
      %v2856 = vmul.f32 %v2800, %v2746
      %v2857 = vmul.f32 %v2805, %v2746
      %v2858 = vmul.f32 %v2810, %v2746
      %v2859 = vmul.f32 %v2815, %v2746
      %v2860 = vmul.f32 %v2820, %v2746
      %v2861 = vmul.f32 %v2825, %v2746
      %v2862 = vmul.f32 %v2830, %v2746
      %v2863 = vmul.f32 %v2835, %v2746
      %v2864 = vmul.f32 %v2840, %v2746
      %v2865 = vmul.f32 %v2845, %v2746
      %v2866 = vmul.f32 %v2850, %v2746
      %v2867 = vadd.f32 %v2667, %v2852
      %v2868 = vadd.f32 %v2668, %v2853
      %v2869 = vadd.f32 %v2669, %v2854
      %v2870 = vadd.f32 %v2670, %v2855
      %v2871 = vadd.f32 %v2671, %v2856
      %v2872 = vadd.f32 %v2672, %v2857
      %v2873 = vadd.f32 %v2673, %v2858
      %v2874 = vadd.f32 %v2674, %v2859
      %v2875 = vadd.f32 %v2675, %v2860
      %v2876 = vadd.f32 %v2676, %v2861
      %v2877 = vadd.f32 %v2677, %v2862
      %v2878 = vadd.f32 %v2678, %v2863
      %v2879 = vadd.f32 %v2679, %v2864
      %v2880 = vadd.f32 %v2680, %v2865
      %v2881 = vadd.f32 %v2681, %v2866
      %v2882 = vld [vmem:[%s2] sm:$0x1]
      %v2884 = vlaneseq
      %v2885 = vshrl.u32 %v2884, 7
      %v2886 = vsub.s32 0, %v2885
      %v2887 = vrot.slane %v2882, %v2886
      %v2889 = vadd.f32 %v2762, %v2887
      %v2890 = vadd.f32 %v2763, %v2887
      %v2891 = vadd.f32 %v2764, %v2887
      %v2892 = vadd.f32 %v2765, %v2887
      %v2893 = vadd.f32 %v2766, %v2887
      %v2894 = vadd.f32 %v2767, %v2887
      %v2895 = vadd.f32 %v2768, %v2887
      %v2896 = vadd.f32 %v2769, %v2887
      %v2897 = vadd.f32 %v2770, %v2887
      %v2898 = vadd.f32 %v2771, %v2887
      %v2899 = vadd.f32 %v2772, %v2887
      %v2900 = vadd.f32 %v2773, %v2887
      %v2901 = vadd.f32 %v2774, %v2887
      %v2902 = vadd.f32 %v2775, %v2887
      %v2903 = vadd.f32 %v2776, %v2887
      %v2904 = vmax.f32 %v2889, 0.0
      %v2905 = vmax.f32 %v2890, 0.0
      %v2906 = vmax.f32 %v2891, 0.0
      %v2907 = vmax.f32 %v2892, 0.0
      %v2908 = vmax.f32 %v2893, 0.0
      %v2909 = vmax.f32 %v2894, 0.0
      %v2910 = vmax.f32 %v2895, 0.0
      %v2911 = vmax.f32 %v2896, 0.0
      %v2912 = vmax.f32 %v2897, 0.0
      %v2913 = vmax.f32 %v2898, 0.0
      %v2914 = vmax.f32 %v2899, 0.0
      %v2915 = vmax.f32 %v2900, 0.0
      %v2916 = vmax.f32 %v2901, 0.0
      %v2917 = vmax.f32 %v2902, 0.0
      %v2918 = vmax.f32 %v2903, 0.0
      %v2919 = vadd.f32 %v2867, %v2887
      %v2920 = vadd.f32 %v2868, %v2887
      %v2921 = vadd.f32 %v2869, %v2887
      %v2922 = vadd.f32 %v2870, %v2887
      %v2923 = vadd.f32 %v2871, %v2887
      %v2924 = vadd.f32 %v2872, %v2887
      %v2925 = vadd.f32 %v2873, %v2887
      %v2926 = vadd.f32 %v2874, %v2887
      %v2927 = vadd.f32 %v2875, %v2887
      %v2928 = vadd.f32 %v2876, %v2887
      %v2929 = vadd.f32 %v2877, %v2887
      %v2930 = vadd.f32 %v2878, %v2887
      %v2931 = vadd.f32 %v2879, %v2887
      %v2932 = vadd.f32 %v2880, %v2887
      %v2933 = vadd.f32 %v2881, %v2887
      %v2934 = vmax.f32 %v2919, 0.0
      %v2935 = vmax.f32 %v2920, 0.0
      %v2936 = vmax.f32 %v2921, 0.0
      %v2937 = vmax.f32 %v2922, 0.0
      %v2938 = vmax.f32 %v2923, 0.0
      %v2939 = vmax.f32 %v2924, 0.0
      %v2940 = vmax.f32 %v2925, 0.0
      %v2941 = vmax.f32 %v2926, 0.0
      %v2942 = vmax.f32 %v2927, 0.0
      %v2943 = vmax.f32 %v2928, 0.0
      %v2944 = vmax.f32 %v2929, 0.0
      %v2945 = vmax.f32 %v2930, 0.0
      %v2946 = vmax.f32 %v2931, 0.0
      %v2947 = vmax.f32 %v2932, 0.0
      %v2948 = vmax.f32 %v2933, 0.0
      %v2949 = vmax.f32 %v2904, %v2934
      %v2950 = vmax.f32 %v2905, %v2935
      %v2951 = vmax.f32 %v2906, %v2936
      %v2952 = vmax.f32 %v2907, %v2937
      %v2953 = vmax.f32 %v2908, %v2938
      %v2954 = vmax.f32 %v2909, %v2939
      %v2955 = vmax.f32 %v2910, %v2940
      %v2956 = vmax.f32 %v2911, %v2941
      %v2957 = vmax.f32 %v2912, %v2942
      %v2958 = vmax.f32 %v2913, %v2943
      %v2959 = vmax.f32 %v2914, %v2944
      %v2960 = vmax.f32 %v2915, %v2945
      %v2961 = vmax.f32 %v2916, %v2946
      %v2962 = vmax.f32 %v2917, %v2947
      %v2963 = vmax.f32 %v2918, %v2948
      %vm2964 = vcmask 15360
      %2965 = vst.msk [vmem:[#allocation3] sm:$0xff] %vm2964, 0.0
      %2966 = vst.msk [vmem:[#allocation3 + $0x8] sm:$0xff] %vm2964, 0.0
      %2967 = vst.msk [vmem:[#allocation3 + $0x10] sm:$0xff] %vm2964, 0.0
      %2968 = vst.msk [vmem:[#allocation3 + $0x18] sm:$0xff] %vm2964, 0.0
      %2969 = vst.msk [vmem:[#allocation3 + $0x20] sm:$0xff] %vm2964, 0.0
      %2970 = vst.msk [vmem:[#allocation3 + $0x28] sm:$0xff] %vm2964, 0.0
      %2971 = vst.msk [vmem:[#allocation3 + $0x30] sm:$0xff] %vm2964, 0.0
      %2972 = vst.msk [vmem:[#allocation3 + $0x38] sm:$0xff] %vm2964, 0.0
      %2973 = vst.msk [vmem:[#allocation3 + $0x40] sm:$0xff] %vm2964, 0.0
      %2974 = vst.msk [vmem:[#allocation3 + $0x48] sm:$0xff] %vm2964, 0.0
      %2975 = vst.msk [vmem:[#allocation3 + $0x50] sm:$0xff] %vm2964, 0.0
      %2976 = vst.msk [vmem:[#allocation3 + $0x58] sm:$0xff] %vm2964, 0.0
      %2977 = vst.msk [vmem:[#allocation3 + $0x60] sm:$0xff] %vm2964, 0.0
      %2978 = vst.msk [vmem:[#allocation3 + $0x68] sm:$0xff] %vm2964, 0.0
      %2979 = vst.msk [vmem:[#allocation3 + $0x70] sm:$0xff] %vm2964, 0.0
      %2980 = vst.msk [vmem:[#allocation3 + $0x78] sm:$0xff] %vm2964, 0.0
      %2981 = vst.msk [vmem:[#allocation3 + $0x8] sm:$0xff] %vm2964, %v2949
      %2982 = vst.msk [vmem:[#allocation3 + $0x10] sm:$0xff] %vm2964, %v2950
      %2983 = vst.msk [vmem:[#allocation3 + $0x18] sm:$0xff] %vm2964, %v2951
      %2984 = vst.msk [vmem:[#allocation3 + $0x20] sm:$0xff] %vm2964, %v2952
      %2985 = vst.msk [vmem:[#allocation3 + $0x28] sm:$0xff] %vm2964, %v2953
      %2986 = vst.msk [vmem:[#allocation3 + $0x30] sm:$0xff] %vm2964, %v2954
      %2987 = vst.msk [vmem:[#allocation3 + $0x38] sm:$0xff] %vm2964, %v2955
      %2988 = vst.msk [vmem:[#allocation3 + $0x40] sm:$0xff] %vm2964, %v2956
      %2989 = vst.msk [vmem:[#allocation3 + $0x48] sm:$0xff] %vm2964, %v2957
      %2990 = vst.msk [vmem:[#allocation3 + $0x50] sm:$0xff] %vm2964, %v2958
      %2991 = vst.msk [vmem:[#allocation3 + $0x58] sm:$0xff] %vm2964, %v2959
      %2992 = vst.msk [vmem:[#allocation3 + $0x60] sm:$0xff] %vm2964, %v2960
      %2993 = vst.msk [vmem:[#allocation3 + $0x68] sm:$0xff] %vm2964, %v2961
      %2994 = vst.msk [vmem:[#allocation3 + $0x70] sm:$0xff] %vm2964, %v2962
      %vm2995 = vcmask 13312
      %2996 = vst.msk [vmem:[#allocation3 + $0x78] sm:$0x3f] %vm2995, %v2963
      %s2997 = scalar_lea.vmem [#allocation3], 6
      %v2998 = vld [vmem:[%s2997] ss:$4 sm:$0xff]
      %s2999 = scalar_lea.vmem [#allocation3], 38
      %v3000 = vld [vmem:[%s2999] ss:$4 sm:$0xff]
      %s3001 = scalar_lea.vmem [#allocation3], 70
      %v3002 = vld [vmem:[%s3001] ss:$4 sm:$0xff]
      %s3003 = scalar_lea.vmem [#allocation3], 102
      %v3004 = vld [vmem:[%s3003] ss:$4 sm:$0x3f]
      %s3005 = scalar_lea.vmem [#allocation3], 8
      %v3006 = vld [vmem:[%s3005] ss:$4 sm:$0xff]
      %s3007 = scalar_lea.vmem [#allocation3], 40
      %v3008 = vld [vmem:[%s3007] ss:$4 sm:$0xff]
      %s3009 = scalar_lea.vmem [#allocation3], 72
      %v3010 = vld [vmem:[%s3009] ss:$4 sm:$0xff]
      %s3011 = scalar_lea.vmem [#allocation3], 104
      %v3012 = vld [vmem:[%s3011] ss:$4 sm:$0x3f]
      %v3013 = vld [vmem:[%s3] sm:$0x1]
      %3015 = vset.pattern.permute.xlu0 0
      %3016 = vperm.xlu0 %3015, %v2998
      %v3017 = vpop.permute.xlu0 %3016
      %3020 = vset.pattern.permute.xlu0 0
      %3021 = vperm.xlu0 %3020, %v3000
      %v3022 = vpop.permute.xlu0 %3021
      %3025 = vset.pattern.permute.xlu0 0
      %3026 = vperm.xlu0 %3025, %v3002
      %v3027 = vpop.permute.xlu0 %3026
      %3030 = vset.pattern.permute.xlu0 0
      %3031 = vperm.xlu0 %3030, %v3004
      %v3032 = vpop.permute.xlu0 %3031
      %v3034 = vlaneseq
      %v3035 = vshrl.u32 %v3034, 7
      %v3036 = vsub.s32 0, %v3035
      %v3037 = vrot.slane %v3013, %v3036
      %v3038 = vmul.f32 %v3017, %v3037
      %v3039 = vmul.f32 %v3022, %v3037
      %v3040 = vmul.f32 %v3027, %v3037
      %v3041 = vmul.f32 %v3032, %v3037
      %v3042 = vadd.f32 %v3038, 0.0
      %v3043 = vadd.f32 %v3039, 0.0
      %v3044 = vadd.f32 %v3040, 0.0
      %v3045 = vadd.f32 %v3041, 0.0
      %3047 = vset.pattern.permute.xlu0 0
      %3048 = vperm.xlu0 %3047, %v3006
      %v3049 = vpop.permute.xlu0 %3048
      %3052 = vset.pattern.permute.xlu0 0
      %3053 = vperm.xlu0 %3052, %v3008
      %v3054 = vpop.permute.xlu0 %3053
      %3057 = vset.pattern.permute.xlu0 0
      %3058 = vperm.xlu0 %3057, %v3010
      %v3059 = vpop.permute.xlu0 %3058
      %3062 = vset.pattern.permute.xlu0 0
      %3063 = vperm.xlu0 %3062, %v3012
      %v3064 = vpop.permute.xlu0 %3063
      %v3066 = vmul.f32 %v3049, %v3037
      %v3067 = vmul.f32 %v3054, %v3037
      %v3068 = vmul.f32 %v3059, %v3037
      %v3069 = vmul.f32 %v3064, %v3037
      %v3070 = vadd.f32 %v3066, 0.0
      %v3071 = vadd.f32 %v3067, 0.0
      %v3072 = vadd.f32 %v3068, 0.0
      %v3073 = vadd.f32 %v3069, 0.0
      %v3074 = vld [vmem:[%s3 + $0x1] sm:$0x1]
      %3075 = vset.pattern.permute.xlu0 1
      %3076 = vperm.xlu0 %3075, %v2998
      %v3077 = vpop.permute.xlu0 %3076
      %3079 = vset.pattern.permute.xlu0 1
      %3080 = vperm.xlu0 %3079, %v3000
      %v3081 = vpop.permute.xlu0 %3080
      %3083 = vset.pattern.permute.xlu0 1
      %3084 = vperm.xlu0 %3083, %v3002
      %v3085 = vpop.permute.xlu0 %3084
      %3087 = vset.pattern.permute.xlu0 1
      %3088 = vperm.xlu0 %3087, %v3004
      %v3089 = vpop.permute.xlu0 %3088
      %v3091 = vlaneseq
      %v3092 = vshrl.u32 %v3091, 7
      %v3093 = vsub.s32 0, %v3092
      %v3094 = vrot.slane %v3074, %v3093
      %v3095 = vmul.f32 %v3077, %v3094
      %v3096 = vmul.f32 %v3081, %v3094
      %v3097 = vmul.f32 %v3085, %v3094
      %v3098 = vmul.f32 %v3089, %v3094
      %v3099 = vadd.f32 %v3042, %v3095
      %v3100 = vadd.f32 %v3043, %v3096
      %v3101 = vadd.f32 %v3044, %v3097
      %v3102 = vadd.f32 %v3045, %v3098
      %3103 = vset.pattern.permute.xlu0 1
      %3104 = vperm.xlu0 %3103, %v3006
      %v3105 = vpop.permute.xlu0 %3104
      %3107 = vset.pattern.permute.xlu0 1
      %3108 = vperm.xlu0 %3107, %v3008
      %v3109 = vpop.permute.xlu0 %3108
      %3111 = vset.pattern.permute.xlu0 1
      %3112 = vperm.xlu0 %3111, %v3010
      %v3113 = vpop.permute.xlu0 %3112
      %3115 = vset.pattern.permute.xlu0 1
      %3116 = vperm.xlu0 %3115, %v3012
      %v3117 = vpop.permute.xlu0 %3116
      %v3119 = vmul.f32 %v3105, %v3094
      %v3120 = vmul.f32 %v3109, %v3094
      %v3121 = vmul.f32 %v3113, %v3094
      %v3122 = vmul.f32 %v3117, %v3094
      %v3123 = vadd.f32 %v3070, %v3119
      %v3124 = vadd.f32 %v3071, %v3120
      %v3125 = vadd.f32 %v3072, %v3121
      %v3126 = vadd.f32 %v3073, %v3122
      %s3127 = scalar_lea.vmem [#allocation3], 7
      %v3128 = vld [vmem:[%s3127] ss:$4 sm:$0xff]
      %s3129 = scalar_lea.vmem [#allocation3], 39
      %v3130 = vld [vmem:[%s3129] ss:$4 sm:$0xff]
      %s3131 = scalar_lea.vmem [#allocation3], 71
      %v3132 = vld [vmem:[%s3131] ss:$4 sm:$0xff]
      %s3133 = scalar_lea.vmem [#allocation3], 103
      %v3134 = vld [vmem:[%s3133] ss:$4 sm:$0x3f]
      %s3135 = scalar_lea.vmem [#allocation3], 9
      %v3136 = vld [vmem:[%s3135] ss:$4 sm:$0xff]
      %s3137 = scalar_lea.vmem [#allocation3], 41
      %v3138 = vld [vmem:[%s3137] ss:$4 sm:$0xff]
      %s3139 = scalar_lea.vmem [#allocation3], 73
      %v3140 = vld [vmem:[%s3139] ss:$4 sm:$0xff]
      %s3141 = scalar_lea.vmem [#allocation3], 105
      %v3142 = vld [vmem:[%s3141] ss:$4 sm:$0x3f]
      %v3143 = vld [vmem:[%s3 + $0x2] sm:$0x1]
      %3145 = vset.pattern.permute.xlu0 0
      %3146 = vperm.xlu0 %3145, %v3128
      %v3147 = vpop.permute.xlu0 %3146
      %3150 = vset.pattern.permute.xlu0 0
      %3151 = vperm.xlu0 %3150, %v3130
      %v3152 = vpop.permute.xlu0 %3151
      %3155 = vset.pattern.permute.xlu0 0
      %3156 = vperm.xlu0 %3155, %v3132
      %v3157 = vpop.permute.xlu0 %3156
      %3160 = vset.pattern.permute.xlu0 0
      %3161 = vperm.xlu0 %3160, %v3134
      %v3162 = vpop.permute.xlu0 %3161
      %v3164 = vlaneseq
      %v3165 = vshrl.u32 %v3164, 7
      %v3166 = vsub.s32 0, %v3165
      %v3167 = vrot.slane %v3143, %v3166
      %v3168 = vmul.f32 %v3147, %v3167
      %v3169 = vmul.f32 %v3152, %v3167
      %v3170 = vmul.f32 %v3157, %v3167
      %v3171 = vmul.f32 %v3162, %v3167
      %v3172 = vadd.f32 %v3099, %v3168
      %v3173 = vadd.f32 %v3100, %v3169
      %v3174 = vadd.f32 %v3101, %v3170
      %v3175 = vadd.f32 %v3102, %v3171
      %3177 = vset.pattern.permute.xlu0 0
      %3178 = vperm.xlu0 %3177, %v3136
      %v3179 = vpop.permute.xlu0 %3178
      %3182 = vset.pattern.permute.xlu0 0
      %3183 = vperm.xlu0 %3182, %v3138
      %v3184 = vpop.permute.xlu0 %3183
      %3187 = vset.pattern.permute.xlu0 0
      %3188 = vperm.xlu0 %3187, %v3140
      %v3189 = vpop.permute.xlu0 %3188
      %3192 = vset.pattern.permute.xlu0 0
      %3193 = vperm.xlu0 %3192, %v3142
      %v3194 = vpop.permute.xlu0 %3193
      %v3196 = vmul.f32 %v3179, %v3167
      %v3197 = vmul.f32 %v3184, %v3167
      %v3198 = vmul.f32 %v3189, %v3167
      %v3199 = vmul.f32 %v3194, %v3167
      %v3200 = vadd.f32 %v3123, %v3196
      %v3201 = vadd.f32 %v3124, %v3197
      %v3202 = vadd.f32 %v3125, %v3198
      %v3203 = vadd.f32 %v3126, %v3199
      %v3204 = vld [vmem:[%s3 + $0x3] sm:$0x1]
      %3205 = vset.pattern.permute.xlu0 1
      %3206 = vperm.xlu0 %3205, %v3128
      %v3207 = vpop.permute.xlu0 %3206
      %3209 = vset.pattern.permute.xlu0 1
      %3210 = vperm.xlu0 %3209, %v3130
      %v3211 = vpop.permute.xlu0 %3210
      %3213 = vset.pattern.permute.xlu0 1
      %3214 = vperm.xlu0 %3213, %v3132
      %v3215 = vpop.permute.xlu0 %3214
      %3217 = vset.pattern.permute.xlu0 1
      %3218 = vperm.xlu0 %3217, %v3134
      %v3219 = vpop.permute.xlu0 %3218
      %v3221 = vlaneseq
      %v3222 = vshrl.u32 %v3221, 7
      %v3223 = vsub.s32 0, %v3222
      %v3224 = vrot.slane %v3204, %v3223
      %v3225 = vmul.f32 %v3207, %v3224
      %v3226 = vmul.f32 %v3211, %v3224
      %v3227 = vmul.f32 %v3215, %v3224
      %v3228 = vmul.f32 %v3219, %v3224
      %v3229 = vadd.f32 %v3172, %v3225
      %v3230 = vadd.f32 %v3173, %v3226
      %v3231 = vadd.f32 %v3174, %v3227
      %v3232 = vadd.f32 %v3175, %v3228
      %3233 = vset.pattern.permute.xlu0 1
      %3234 = vperm.xlu0 %3233, %v3136
      %v3235 = vpop.permute.xlu0 %3234
      %3237 = vset.pattern.permute.xlu0 1
      %3238 = vperm.xlu0 %3237, %v3138
      %v3239 = vpop.permute.xlu0 %3238
      %3241 = vset.pattern.permute.xlu0 1
      %3242 = vperm.xlu0 %3241, %v3140
      %v3243 = vpop.permute.xlu0 %3242
      %3245 = vset.pattern.permute.xlu0 1
      %3246 = vperm.xlu0 %3245, %v3142
      %v3247 = vpop.permute.xlu0 %3246
      %v3249 = vmul.f32 %v3235, %v3224
      %v3250 = vmul.f32 %v3239, %v3224
      %v3251 = vmul.f32 %v3243, %v3224
      %v3252 = vmul.f32 %v3247, %v3224
      %v3253 = vadd.f32 %v3200, %v3249
      %v3254 = vadd.f32 %v3201, %v3250
      %v3255 = vadd.f32 %v3202, %v3251
      %v3256 = vadd.f32 %v3203, %v3252
      %s3257 = scalar_lea.vmem [#allocation3], 10
      %v3258 = vld [vmem:[%s3257] ss:$4 sm:$0xff]
      %s3259 = scalar_lea.vmem [#allocation3], 42
      %v3260 = vld [vmem:[%s3259] ss:$4 sm:$0xff]
      %s3261 = scalar_lea.vmem [#allocation3], 74
      %v3262 = vld [vmem:[%s3261] ss:$4 sm:$0xff]
      %s3263 = scalar_lea.vmem [#allocation3], 106
      %v3264 = vld [vmem:[%s3263] ss:$4 sm:$0x3f]
      %v3265 = vld [vmem:[%s3 + $0x4] sm:$0x1]
      %v3266 = vlaneseq
      %v3267 = vshrl.u32 %v3266, 7
      %v3268 = vsub.s32 0, %v3267
      %v3269 = vrot.slane %v3265, %v3268
      %v3270 = vmul.f32 %v3049, %v3269
      %v3271 = vmul.f32 %v3054, %v3269
      %v3272 = vmul.f32 %v3059, %v3269
      %v3273 = vmul.f32 %v3064, %v3269
      %v3274 = vadd.f32 %v3229, %v3270
      %v3275 = vadd.f32 %v3230, %v3271
      %v3276 = vadd.f32 %v3231, %v3272
      %v3277 = vadd.f32 %v3232, %v3273
      %3279 = vset.pattern.permute.xlu0 0
      %3280 = vperm.xlu0 %3279, %v3258
      %v3281 = vpop.permute.xlu0 %3280
      %3284 = vset.pattern.permute.xlu0 0
      %3285 = vperm.xlu0 %3284, %v3260
      %v3286 = vpop.permute.xlu0 %3285
      %3289 = vset.pattern.permute.xlu0 0
      %3290 = vperm.xlu0 %3289, %v3262
      %v3291 = vpop.permute.xlu0 %3290
      %3294 = vset.pattern.permute.xlu0 0
      %3295 = vperm.xlu0 %3294, %v3264
      %v3296 = vpop.permute.xlu0 %3295
      %v3298 = vmul.f32 %v3281, %v3269
      %v3299 = vmul.f32 %v3286, %v3269
      %v3300 = vmul.f32 %v3291, %v3269
      %v3301 = vmul.f32 %v3296, %v3269
      %v3302 = vadd.f32 %v3253, %v3298
      %v3303 = vadd.f32 %v3254, %v3299
      %v3304 = vadd.f32 %v3255, %v3300
      %v3305 = vadd.f32 %v3256, %v3301
      %v3306 = vld [vmem:[%s3 + $0x5] sm:$0x1]
      %v3307 = vlaneseq
      %v3308 = vshrl.u32 %v3307, 7
      %v3309 = vsub.s32 0, %v3308
      %v3310 = vrot.slane %v3306, %v3309
      %v3311 = vmul.f32 %v3105, %v3310
      %v3312 = vmul.f32 %v3109, %v3310
      %v3313 = vmul.f32 %v3113, %v3310
      %v3314 = vmul.f32 %v3117, %v3310
      %v3315 = vadd.f32 %v3274, %v3311
      %v3316 = vadd.f32 %v3275, %v3312
      %v3317 = vadd.f32 %v3276, %v3313
      %v3318 = vadd.f32 %v3277, %v3314
      %3319 = vset.pattern.permute.xlu0 1
      %3320 = vperm.xlu0 %3319, %v3258
      %v3321 = vpop.permute.xlu0 %3320
      %3323 = vset.pattern.permute.xlu0 1
      %3324 = vperm.xlu0 %3323, %v3260
      %v3325 = vpop.permute.xlu0 %3324
      %3327 = vset.pattern.permute.xlu0 1
      %3328 = vperm.xlu0 %3327, %v3262
      %v3329 = vpop.permute.xlu0 %3328
      %3331 = vset.pattern.permute.xlu0 1
      %3332 = vperm.xlu0 %3331, %v3264
      %v3333 = vpop.permute.xlu0 %3332
      %v3335 = vmul.f32 %v3321, %v3310
      %v3336 = vmul.f32 %v3325, %v3310
      %v3337 = vmul.f32 %v3329, %v3310
      %v3338 = vmul.f32 %v3333, %v3310
      %v3339 = vadd.f32 %v3302, %v3335
      %v3340 = vadd.f32 %v3303, %v3336
      %v3341 = vadd.f32 %v3304, %v3337
      %v3342 = vadd.f32 %v3305, %v3338
      %s3343 = scalar_lea.vmem [#allocation3], 11
      %v3344 = vld [vmem:[%s3343] ss:$4 sm:$0xff]
      %s3345 = scalar_lea.vmem [#allocation3], 43
      %v3346 = vld [vmem:[%s3345] ss:$4 sm:$0xff]
      %s3347 = scalar_lea.vmem [#allocation3], 75
      %v3348 = vld [vmem:[%s3347] ss:$4 sm:$0xff]
      %s3349 = scalar_lea.vmem [#allocation3], 107
      %v3350 = vld [vmem:[%s3349] ss:$4 sm:$0x3f]
      %v3351 = vld [vmem:[%s3 + $0x6] sm:$0x1]
      %v3352 = vlaneseq
      %v3353 = vshrl.u32 %v3352, 7
      %v3354 = vsub.s32 0, %v3353
      %v3355 = vrot.slane %v3351, %v3354
      %v3356 = vmul.f32 %v3179, %v3355
      %v3357 = vmul.f32 %v3184, %v3355
      %v3358 = vmul.f32 %v3189, %v3355
      %v3359 = vmul.f32 %v3194, %v3355
      %v3360 = vadd.f32 %v3315, %v3356
      %v3361 = vadd.f32 %v3316, %v3357
      %v3362 = vadd.f32 %v3317, %v3358
      %v3363 = vadd.f32 %v3318, %v3359
      %3365 = vset.pattern.permute.xlu0 0
      %3366 = vperm.xlu0 %3365, %v3344
      %v3367 = vpop.permute.xlu0 %3366
      %3370 = vset.pattern.permute.xlu0 0
      %3371 = vperm.xlu0 %3370, %v3346
      %v3372 = vpop.permute.xlu0 %3371
      %3375 = vset.pattern.permute.xlu0 0
      %3376 = vperm.xlu0 %3375, %v3348
      %v3377 = vpop.permute.xlu0 %3376
      %3380 = vset.pattern.permute.xlu0 0
      %3381 = vperm.xlu0 %3380, %v3350
      %v3382 = vpop.permute.xlu0 %3381
      %v3384 = vmul.f32 %v3367, %v3355
      %v3385 = vmul.f32 %v3372, %v3355
      %v3386 = vmul.f32 %v3377, %v3355
      %v3387 = vmul.f32 %v3382, %v3355
      %v3388 = vadd.f32 %v3339, %v3384
      %v3389 = vadd.f32 %v3340, %v3385
      %v3390 = vadd.f32 %v3341, %v3386
      %v3391 = vadd.f32 %v3342, %v3387
      %v3392 = vld [vmem:[%s3 + $0x7] sm:$0x1]
      %v3393 = vlaneseq
      %v3394 = vshrl.u32 %v3393, 7
      %v3395 = vsub.s32 0, %v3394
      %v3396 = vrot.slane %v3392, %v3395
      %v3397 = vmul.f32 %v3235, %v3396
      %v3398 = vmul.f32 %v3239, %v3396
      %v3399 = vmul.f32 %v3243, %v3396
      %v3400 = vmul.f32 %v3247, %v3396
      %v3401 = vadd.f32 %v3360, %v3397
      %v3402 = vadd.f32 %v3361, %v3398
      %v3403 = vadd.f32 %v3362, %v3399
      %v3404 = vadd.f32 %v3363, %v3400
      %3405 = vset.pattern.permute.xlu0 1
      %3406 = vperm.xlu0 %3405, %v3344
      %v3407 = vpop.permute.xlu0 %3406
      %3409 = vset.pattern.permute.xlu0 1
      %3410 = vperm.xlu0 %3409, %v3346
      %v3411 = vpop.permute.xlu0 %3410
      %3413 = vset.pattern.permute.xlu0 1
      %3414 = vperm.xlu0 %3413, %v3348
      %v3415 = vpop.permute.xlu0 %3414
      %3417 = vset.pattern.permute.xlu0 1
      %3418 = vperm.xlu0 %3417, %v3350
      %v3419 = vpop.permute.xlu0 %3418
      %v3421 = vmul.f32 %v3407, %v3396
      %v3422 = vmul.f32 %v3411, %v3396
      %v3423 = vmul.f32 %v3415, %v3396
      %v3424 = vmul.f32 %v3419, %v3396
      %v3425 = vadd.f32 %v3388, %v3421
      %v3426 = vadd.f32 %v3389, %v3422
      %v3427 = vadd.f32 %v3390, %v3423
      %v3428 = vadd.f32 %v3391, %v3424
      %v3429 = vld [vmem:[%s4] sm:$0x1]
      %v3431 = vlaneseq
      %v3432 = vshrl.u32 %v3431, 7
      %v3433 = vsub.s32 0, %v3432
      %v3434 = vrot.slane %v3429, %v3433
      %v3436 = vadd.f32 %v3401, %v3434
      %v3437 = vadd.f32 %v3402, %v3434
      %v3438 = vadd.f32 %v3403, %v3434
      %v3439 = vadd.f32 %v3404, %v3434
      %v3440 = vmax.f32 %v3436, 0.0
      %v3441 = vmax.f32 %v3437, 0.0
      %v3442 = vmax.f32 %v3438, 0.0
      %v3443 = vmax.f32 %v3439, 0.0
      %v3444 = vadd.f32 %v3425, %v3434
      %v3445 = vadd.f32 %v3426, %v3434
      %v3446 = vadd.f32 %v3427, %v3434
      %v3447 = vadd.f32 %v3428, %v3434
      %v3448 = vmax.f32 %v3444, 0.0
      %v3449 = vmax.f32 %v3445, 0.0
      %v3450 = vmax.f32 %v3446, 0.0
      %v3451 = vmax.f32 %v3447, 0.0
      %v3452 = vmax.f32 %v3440, %v3448
      %v3453 = vmax.f32 %v3441, %v3449
      %v3454 = vmax.f32 %v3442, %v3450
      %v3455 = vmax.f32 %v3443, %v3451
      %vm3456 = vcmask 23552
      %3457 = vst.msk [vmem:[#allocation4] sm:$0xff] %vm3456, 0.0
      %3458 = vst.msk [vmem:[#allocation4 + $0x8] sm:$0xff] %vm3456, 0.0
      %3459 = vst.msk [vmem:[#allocation4 + $0x10] sm:$0xff] %vm3456, 0.0
      %3460 = vst.msk [vmem:[#allocation4 + $0x18] sm:$0xff] %vm3456, 0.0
      %3461 = vst.msk [vmem:[#allocation4 + $0x20] sm:$0xff] %vm3456, 0.0
      %3462 = vst.msk [vmem:[#allocation4 + $0x8] sm:$0xff] %vm3456, %v3452
      %3463 = vst.msk [vmem:[#allocation4 + $0x10] sm:$0xff] %vm3456, %v3453
      %3464 = vst.msk [vmem:[#allocation4 + $0x18] sm:$0xff] %vm3456, %v3454
      %vm3465 = vcmask 21504
      %3466 = vst.msk [vmem:[#allocation4 + $0x20] sm:$0x3f] %vm3465, %v3455
      %s3467 = scalar_lea.vmem [#allocation4], 6
      %v3468 = vld [vmem:[%s3467] ss:$4 sm:$0xff]
      %s3469 = scalar_lea.vmem [#allocation4], 8
      %v3470 = vld [vmem:[%s3469] ss:$4 sm:$0xff]
      %v3471 = vld [vmem:[%s5] sm:$0x1]
      %3473 = vset.pattern.permute.xlu0 0
      %3474 = vperm.xlu0 %3473, %v3468
      %v3475 = vpop.permute.xlu0 %3474
      %v3477 = vlaneseq
      %v3478 = vshrl.u32 %v3477, 7
      %v3479 = vsub.s32 0, %v3478
      %v3480 = vrot.slane %v3471, %v3479
      %v3481 = vmul.f32 %v3475, %v3480
      %v3482 = vadd.f32 %v3481, 0.0
      %3484 = vset.pattern.permute.xlu0 0
      %3485 = vperm.xlu0 %3484, %v3470
      %v3486 = vpop.permute.xlu0 %3485
      %v3488 = vmul.f32 %v3486, %v3480
      %v3489 = vadd.f32 %v3488, 0.0
      %v3490 = vld [vmem:[%s5 + $0x1] sm:$0x1]
      %3491 = vset.pattern.permute.xlu0 1
      %3492 = vperm.xlu0 %3491, %v3468
      %v3493 = vpop.permute.xlu0 %3492
      %v3495 = vlaneseq
      %v3496 = vshrl.u32 %v3495, 7
      %v3497 = vsub.s32 0, %v3496
      %v3498 = vrot.slane %v3490, %v3497
      %v3499 = vmul.f32 %v3493, %v3498
      %v3500 = vadd.f32 %v3482, %v3499
      %3501 = vset.pattern.permute.xlu0 1
      %3502 = vperm.xlu0 %3501, %v3470
      %v3503 = vpop.permute.xlu0 %3502
      %v3505 = vmul.f32 %v3503, %v3498
      %v3506 = vadd.f32 %v3489, %v3505
      %v3507 = vld [vmem:[%s5 + $0x2] sm:$0x1]
      %3508 = vset.pattern.permute.xlu0 2
      %3509 = vperm.xlu0 %3508, %v3468
      %v3510 = vpop.permute.xlu0 %3509
      %v3512 = vlaneseq
      %v3513 = vshrl.u32 %v3512, 7
      %v3514 = vsub.s32 0, %v3513
      %v3515 = vrot.slane %v3507, %v3514
      %v3516 = vmul.f32 %v3510, %v3515
      %v3517 = vadd.f32 %v3500, %v3516
      %3518 = vset.pattern.permute.xlu0 2
      %3519 = vperm.xlu0 %3518, %v3470
      %v3520 = vpop.permute.xlu0 %3519
      %v3522 = vmul.f32 %v3520, %v3515
      %v3523 = vadd.f32 %v3506, %v3522
      %s3524 = scalar_lea.vmem [#allocation4], 7
      %v3525 = vld [vmem:[%s3524] ss:$4 sm:$0xff]
      %s3526 = scalar_lea.vmem [#allocation4], 9
      %v3527 = vld [vmem:[%s3526] ss:$4 sm:$0xff]
      %v3528 = vld [vmem:[%s5 + $0x3] sm:$0x1]
      %3530 = vset.pattern.permute.xlu0 0
      %3531 = vperm.xlu0 %3530, %v3525
      %v3532 = vpop.permute.xlu0 %3531
      %v3534 = vlaneseq
      %v3535 = vshrl.u32 %v3534, 7
      %v3536 = vsub.s32 0, %v3535
      %v3537 = vrot.slane %v3528, %v3536
      %v3538 = vmul.f32 %v3532, %v3537
      %v3539 = vadd.f32 %v3517, %v3538
      %3541 = vset.pattern.permute.xlu0 0
      %3542 = vperm.xlu0 %3541, %v3527
      %v3543 = vpop.permute.xlu0 %3542
      %v3545 = vmul.f32 %v3543, %v3537
      %v3546 = vadd.f32 %v3523, %v3545
      %v3547 = vld [vmem:[%s5 + $0x4] sm:$0x1]
      %3548 = vset.pattern.permute.xlu0 1
      %3549 = vperm.xlu0 %3548, %v3525
      %v3550 = vpop.permute.xlu0 %3549
      %v3552 = vlaneseq
      %v3553 = vshrl.u32 %v3552, 7
      %v3554 = vsub.s32 0, %v3553
      %v3555 = vrot.slane %v3547, %v3554
      %v3556 = vmul.f32 %v3550, %v3555
      %v3557 = vadd.f32 %v3539, %v3556
      %3558 = vset.pattern.permute.xlu0 1
      %3559 = vperm.xlu0 %3558, %v3527
      %v3560 = vpop.permute.xlu0 %3559
      %v3562 = vmul.f32 %v3560, %v3555
      %v3563 = vadd.f32 %v3546, %v3562
      %v3564 = vld [vmem:[%s5 + $0x5] sm:$0x1]
      %3565 = vset.pattern.permute.xlu0 2
      %3566 = vperm.xlu0 %3565, %v3525
      %v3567 = vpop.permute.xlu0 %3566
      %v3569 = vlaneseq
      %v3570 = vshrl.u32 %v3569, 7
      %v3571 = vsub.s32 0, %v3570
      %v3572 = vrot.slane %v3564, %v3571
      %v3573 = vmul.f32 %v3567, %v3572
      %v3574 = vadd.f32 %v3557, %v3573
      %3575 = vset.pattern.permute.xlu0 2
      %3576 = vperm.xlu0 %3575, %v3527
      %v3577 = vpop.permute.xlu0 %3576
      %v3579 = vmul.f32 %v3577, %v3572
      %v3580 = vadd.f32 %v3563, %v3579
      %s3581 = scalar_lea.vmem [#allocation4], 10
      %v3582 = vld [vmem:[%s3581] ss:$4 sm:$0xff]
      %v3583 = vld [vmem:[%s5 + $0x6] sm:$0x1]
      %v3584 = vlaneseq
      %v3585 = vshrl.u32 %v3584, 7
      %v3586 = vsub.s32 0, %v3585
      %v3587 = vrot.slane %v3583, %v3586
      %v3588 = vmul.f32 %v3486, %v3587
      %v3589 = vadd.f32 %v3574, %v3588
      %3591 = vset.pattern.permute.xlu0 0
      %3592 = vperm.xlu0 %3591, %v3582
      %v3593 = vpop.permute.xlu0 %3592
      %v3595 = vmul.f32 %v3593, %v3587
      %v3596 = vadd.f32 %v3580, %v3595
      %v3597 = vld [vmem:[%s5 + $0x7] sm:$0x1]
      %v3598 = vlaneseq
      %v3599 = vshrl.u32 %v3598, 7
      %v3600 = vsub.s32 0, %v3599
      %v3601 = vrot.slane %v3597, %v3600
      %v3602 = vmul.f32 %v3503, %v3601
      %v3603 = vadd.f32 %v3589, %v3602
      %3604 = vset.pattern.permute.xlu0 1
      %3605 = vperm.xlu0 %3604, %v3582
      %v3606 = vpop.permute.xlu0 %3605
      %v3608 = vmul.f32 %v3606, %v3601
      %v3609 = vadd.f32 %v3596, %v3608
      %v3610 = vld [vmem:[%s5 + $0x8] sm:$0x1]
      %v3611 = vlaneseq
      %v3612 = vshrl.u32 %v3611, 7
      %v3613 = vsub.s32 0, %v3612
      %v3614 = vrot.slane %v3610, %v3613
      %v3615 = vmul.f32 %v3520, %v3614
      %v3616 = vadd.f32 %v3603, %v3615
      %3617 = vset.pattern.permute.xlu0 2
      %3618 = vperm.xlu0 %3617, %v3582
      %v3619 = vpop.permute.xlu0 %3618
      %v3621 = vmul.f32 %v3619, %v3614
      %v3622 = vadd.f32 %v3609, %v3621
      %s3623 = scalar_lea.vmem [#allocation4], 11
      %v3624 = vld [vmem:[%s3623] ss:$4 sm:$0xff]
      %v3625 = vld [vmem:[%s5 + $0x9] sm:$0x1]
      %v3626 = vlaneseq
      %v3627 = vshrl.u32 %v3626, 7
      %v3628 = vsub.s32 0, %v3627
      %v3629 = vrot.slane %v3625, %v3628
      %v3630 = vmul.f32 %v3543, %v3629
      %v3631 = vadd.f32 %v3616, %v3630
      %3633 = vset.pattern.permute.xlu0 0
      %3634 = vperm.xlu0 %3633, %v3624
      %v3635 = vpop.permute.xlu0 %3634
      %v3637 = vmul.f32 %v3635, %v3629
      %v3638 = vadd.f32 %v3622, %v3637
      %v3639 = vld [vmem:[%s5 + $0xa] sm:$0x1]
      %v3640 = vlaneseq
      %v3641 = vshrl.u32 %v3640, 7
      %v3642 = vsub.s32 0, %v3641
      %v3643 = vrot.slane %v3639, %v3642
      %v3644 = vmul.f32 %v3560, %v3643
      %v3645 = vadd.f32 %v3631, %v3644
      %3646 = vset.pattern.permute.xlu0 1
      %3647 = vperm.xlu0 %3646, %v3624
      %v3648 = vpop.permute.xlu0 %3647
      %v3650 = vmul.f32 %v3648, %v3643
      %v3651 = vadd.f32 %v3638, %v3650
      %v3652 = vld [vmem:[%s5 + $0xb] sm:$0x1]
      %v3653 = vlaneseq
      %v3654 = vshrl.u32 %v3653, 7
      %v3655 = vsub.s32 0, %v3654
      %v3656 = vrot.slane %v3652, %v3655
      %v3657 = vmul.f32 %v3577, %v3656
      %v3658 = vadd.f32 %v3645, %v3657
      %3659 = vset.pattern.permute.xlu0 2
      %3660 = vperm.xlu0 %3659, %v3624
      %v3661 = vpop.permute.xlu0 %3660
      %v3663 = vmul.f32 %v3661, %v3656
      %v3664 = vadd.f32 %v3651, %v3663
      %v3665 = vld [vmem:[%s6] sm:$0x1]
      %v3667 = vlaneseq
      %v3668 = vshrl.u32 %v3667, 7
      %v3669 = vsub.s32 0, %v3668
      %v3670 = vrot.slane %v3665, %v3669
      %v3672 = vadd.f32 %v3658, %v3670
      %v3673 = vmax.f32 %v3672, 0.0
      %v3674 = vadd.f32 %v3664, %v3670
      %v3675 = vmax.f32 %v3674, 0.0
      %v3676 = vmax.f32 %v3673, %v3675
      %v3677 = vld [vmem:[%s8] sm:$0xff]
      %v3678 = vld [vmem:[%s7] sm:$0xff]
      %vm3679 = vcmask 64512
      %v3681 = vsel %vm3679, %v3678, 0
      %3683 = vmatprep.subr.mxu0 0.0
      %3684 = vmatpush1.msra.mxu0 0.0
      %3685 = vmatprep.subr.mxu0 0.0
      %3686 = vmatpush1.msra.mxu0 0.0
      %3687 = vmatprep.subr.mxu0 0.0
      %3688 = vmatpush1.msra.mxu0 0.0
      %3689 = vmatprep.subr.mxu0 0.0
      %3690 = vmatpush1.msra.mxu0 0.0
      %3691 = vmatprep.subr.mxu0 0.0
      %3692 = vmatpush1.msra.mxu0 0.0
      %3693 = vmatprep.subr.mxu0 0.0
      %3694 = vmatpush1.msra.mxu0 0.0
      %3695 = vmatprep.subr.mxu0 0.0
      %3696 = vmatpush1.msra.mxu0 0.0
      %3697 = vmatprep.subr.mxu0 0.0
      %3698 = vmatpush1.msra.mxu0 0.0
      %3699 = vmatprep.subr.mxu0 0.0
      %3700 = vmatpush1.msra.mxu0 0.0
      %3701 = vmatprep.subr.mxu0 0.0
      %3702 = vmatpush1.msra.mxu0 0.0
      %3703 = vmatprep.subr.mxu0 0.0
      %3704 = vmatpush1.msra.mxu0 0.0
      %3705 = vmatprep.subr.mxu0 0.0
      %3706 = vmatpush1.msra.mxu0 0.0
      %3707 = vmatprep.subr.mxu0 0.0
      %3708 = vmatpush1.msra.mxu0 0.0
      %3709 = vmatprep.subr.mxu0 0.0
      %3710 = vmatpush1.msra.mxu0 0.0
      %3711 = vmatprep.subr.mxu0 0.0
      %3712 = vmatpush1.msra.mxu0 0.0
      %3713 = vmatprep.subr.mxu0 0.0
      %3714 = vmatpush1.msra.mxu0 %v3676
      %3715 = vmatprep.subr.mxu0 0.0
      %3716 = vmatpush2.msra.mxu0 0.0
      %3717 = vmatprep.subr.mxu0 0.0
      %3718 = vmatpush2.msra.mxu0 0.0
      %3719 = vmatprep.subr.mxu0 0.0
      %3720 = vmatpush2.msra.mxu0 0.0
      %3721 = vmatprep.subr.mxu0 0.0
      %3722 = vmatpush2.msra.mxu0 0.0
      %3723 = vmatprep.subr.mxu0 0.0
      %3724 = vmatpush2.msra.mxu0 0.0
      %3725 = vmatprep.subr.mxu0 0.0
      %3726 = vmatpush2.msra.mxu0 0.0
      %3727 = vmatprep.subr.mxu0 0.0
      %3728 = vmatpush2.msra.mxu0 0.0
      %3729 = vmatprep.subr.mxu0 0.0
      %3730 = vmatpush2.msra.mxu0 0.0
      %3731 = vmatprep.subr.mxu0 0.0
      %3732 = vmatpush2.msra.mxu0 0.0
      %3733 = vmatprep.subr.mxu0 0.0
      %3734 = vmatpush2.msra.mxu0 0.0
      %3735 = vmatprep.subr.mxu0 0.0
      %3736 = vmatpush2.msra.mxu0 0.0
      %3737 = vmatprep.subr.mxu0 0.0
      %3738 = vmatpush2.msra.mxu0 0.0
      %3739 = vmatprep.subr.mxu0 0.0
      %3740 = vmatpush2.msra.mxu0 0.0
      %3741 = vmatprep.subr.mxu0 0.0
      %3742 = vmatpush2.msra.mxu0 0.0
      %3743 = vmatprep.subr.mxu0 0.0
      %3744 = vmatpush2.msra.mxu0 0.0
      %3745 = vmatprep.subr.mxu0 0.0
      %3746 = vmatpush2.msra.mxu0 0.0
      %3747 = vmatprep.mubr.f32.mxu0 0.0
      %3748 = vmatmul.mubr.f32.gmra.mxu0 %v3681
      %v3749 = vpop.f32.mrf.mxu0
      %v3750 = vadd.f32 0.0, %v3749
      %v3751 = vpop.f32.mrf.mxu0
      %3752 = vdwg.mxu0
      %v3753 = vadd.f32 %v3677, %v3750
      %s3754 = scalar_lea.vmem %s7, 8
      %v3755 = vld [vmem:[%s3754] sm:$0xff]
      %3757 = vrot.lane.b32.xlu0 %v3676, 127
      %v3758 = vpop.permute.xlu0 %3757
      %v3761 = vsel %vm3679, %v3755, 0
      %3763 = vmatprep.subr.mxu0 0.0
      %3764 = vmatpush1.msra.mxu0 0.0
      %3765 = vmatprep.subr.mxu0 0.0
      %3766 = vmatpush1.msra.mxu0 0.0
      %3767 = vmatprep.subr.mxu0 0.0
      %3768 = vmatpush1.msra.mxu0 0.0
      %3769 = vmatprep.subr.mxu0 0.0
      %3770 = vmatpush1.msra.mxu0 0.0
      %3771 = vmatprep.subr.mxu0 0.0
      %3772 = vmatpush1.msra.mxu0 0.0
      %3773 = vmatprep.subr.mxu0 0.0
      %3774 = vmatpush1.msra.mxu0 0.0
      %3775 = vmatprep.subr.mxu0 0.0
      %3776 = vmatpush1.msra.mxu0 0.0
      %3777 = vmatprep.subr.mxu0 0.0
      %3778 = vmatpush1.msra.mxu0 0.0
      %3779 = vmatprep.subr.mxu0 0.0
      %3780 = vmatpush1.msra.mxu0 0.0
      %3781 = vmatprep.subr.mxu0 0.0
      %3782 = vmatpush1.msra.mxu0 0.0
      %3783 = vmatprep.subr.mxu0 0.0
      %3784 = vmatpush1.msra.mxu0 0.0
      %3785 = vmatprep.subr.mxu0 0.0
      %3786 = vmatpush1.msra.mxu0 0.0
      %3787 = vmatprep.subr.mxu0 0.0
      %3788 = vmatpush1.msra.mxu0 0.0
      %3789 = vmatprep.subr.mxu0 0.0
      %3790 = vmatpush1.msra.mxu0 0.0
      %3791 = vmatprep.subr.mxu0 0.0
      %3792 = vmatpush1.msra.mxu0 0.0
      %3793 = vmatprep.subr.mxu0 0.0
      %3794 = vmatpush1.msra.mxu0 %v3758
      %3795 = vmatprep.subr.mxu0 0.0
      %3796 = vmatpush2.msra.mxu0 0.0
      %3797 = vmatprep.subr.mxu0 0.0
      %3798 = vmatpush2.msra.mxu0 0.0
      %3799 = vmatprep.subr.mxu0 0.0
      %3800 = vmatpush2.msra.mxu0 0.0
      %3801 = vmatprep.subr.mxu0 0.0
      %3802 = vmatpush2.msra.mxu0 0.0
      %3803 = vmatprep.subr.mxu0 0.0
      %3804 = vmatpush2.msra.mxu0 0.0
      %3805 = vmatprep.subr.mxu0 0.0
      %3806 = vmatpush2.msra.mxu0 0.0
      %3807 = vmatprep.subr.mxu0 0.0
      %3808 = vmatpush2.msra.mxu0 0.0
      %3809 = vmatprep.subr.mxu0 0.0
      %3810 = vmatpush2.msra.mxu0 0.0
      %3811 = vmatprep.subr.mxu0 0.0
      %3812 = vmatpush2.msra.mxu0 0.0
      %3813 = vmatprep.subr.mxu0 0.0
      %3814 = vmatpush2.msra.mxu0 0.0
      %3815 = vmatprep.subr.mxu0 0.0
      %3816 = vmatpush2.msra.mxu0 0.0
      %3817 = vmatprep.subr.mxu0 0.0
      %3818 = vmatpush2.msra.mxu0 0.0
      %3819 = vmatprep.subr.mxu0 0.0
      %3820 = vmatpush2.msra.mxu0 0.0
      %3821 = vmatprep.subr.mxu0 0.0
      %3822 = vmatpush2.msra.mxu0 0.0
      %3823 = vmatprep.subr.mxu0 0.0
      %3824 = vmatpush2.msra.mxu0 0.0
      %3825 = vmatprep.subr.mxu0 0.0
      %3826 = vmatpush2.msra.mxu0 0.0
      %3827 = vmatprep.mubr.f32.mxu0 0.0
      %3828 = vmatmul.mubr.f32.gmra.mxu0 %v3761
      %v3829 = vpop.f32.mrf.mxu0
      %v3830 = vadd.f32 0.0, %v3829
      %v3831 = vpop.f32.mrf.mxu0
      %3832 = vdwg.mxu0
      %v3833 = vadd.f32 %v3753, %v3830
      %s3834 = scalar_lea.vmem %s7, 16
      %v3835 = vld [vmem:[%s3834] sm:$0xff]
      %3836 = vrot.lane.b32.xlu0 %v3676, 126
      %v3837 = vpop.permute.xlu0 %3836
      %v3840 = vsel %vm3679, %v3835, 0
      %3842 = vmatprep.subr.mxu0 0.0
      %3843 = vmatpush1.msra.mxu0 0.0
      %3844 = vmatprep.subr.mxu0 0.0
      %3845 = vmatpush1.msra.mxu0 0.0
      %3846 = vmatprep.subr.mxu0 0.0
      %3847 = vmatpush1.msra.mxu0 0.0
      %3848 = vmatprep.subr.mxu0 0.0
      %3849 = vmatpush1.msra.mxu0 0.0
      %3850 = vmatprep.subr.mxu0 0.0
      %3851 = vmatpush1.msra.mxu0 0.0
      %3852 = vmatprep.subr.mxu0 0.0
      %3853 = vmatpush1.msra.mxu0 0.0
      %3854 = vmatprep.subr.mxu0 0.0
      %3855 = vmatpush1.msra.mxu0 0.0
      %3856 = vmatprep.subr.mxu0 0.0
      %3857 = vmatpush1.msra.mxu0 0.0
      %3858 = vmatprep.subr.mxu0 0.0
      %3859 = vmatpush1.msra.mxu0 0.0
      %3860 = vmatprep.subr.mxu0 0.0
      %3861 = vmatpush1.msra.mxu0 0.0
      %3862 = vmatprep.subr.mxu0 0.0
      %3863 = vmatpush1.msra.mxu0 0.0
      %3864 = vmatprep.subr.mxu0 0.0
      %3865 = vmatpush1.msra.mxu0 0.0
      %3866 = vmatprep.subr.mxu0 0.0
      %3867 = vmatpush1.msra.mxu0 0.0
      %3868 = vmatprep.subr.mxu0 0.0
      %3869 = vmatpush1.msra.mxu0 0.0
      %3870 = vmatprep.subr.mxu0 0.0
      %3871 = vmatpush1.msra.mxu0 0.0
      %3872 = vmatprep.subr.mxu0 0.0
      %3873 = vmatpush1.msra.mxu0 %v3837
      %3874 = vmatprep.subr.mxu0 0.0
      %3875 = vmatpush2.msra.mxu0 0.0
      %3876 = vmatprep.subr.mxu0 0.0
      %3877 = vmatpush2.msra.mxu0 0.0
      %3878 = vmatprep.subr.mxu0 0.0
      %3879 = vmatpush2.msra.mxu0 0.0
      %3880 = vmatprep.subr.mxu0 0.0
      %3881 = vmatpush2.msra.mxu0 0.0
      %3882 = vmatprep.subr.mxu0 0.0
      %3883 = vmatpush2.msra.mxu0 0.0
      %3884 = vmatprep.subr.mxu0 0.0
      %3885 = vmatpush2.msra.mxu0 0.0
      %3886 = vmatprep.subr.mxu0 0.0
      %3887 = vmatpush2.msra.mxu0 0.0
      %3888 = vmatprep.subr.mxu0 0.0
      %3889 = vmatpush2.msra.mxu0 0.0
      %3890 = vmatprep.subr.mxu0 0.0
      %3891 = vmatpush2.msra.mxu0 0.0
      %3892 = vmatprep.subr.mxu0 0.0
      %3893 = vmatpush2.msra.mxu0 0.0
      %3894 = vmatprep.subr.mxu0 0.0
      %3895 = vmatpush2.msra.mxu0 0.0
      %3896 = vmatprep.subr.mxu0 0.0
      %3897 = vmatpush2.msra.mxu0 0.0
      %3898 = vmatprep.subr.mxu0 0.0
      %3899 = vmatpush2.msra.mxu0 0.0
      %3900 = vmatprep.subr.mxu0 0.0
      %3901 = vmatpush2.msra.mxu0 0.0
      %3902 = vmatprep.subr.mxu0 0.0
      %3903 = vmatpush2.msra.mxu0 0.0
      %3904 = vmatprep.subr.mxu0 0.0
      %3905 = vmatpush2.msra.mxu0 0.0
      %3906 = vmatprep.mubr.f32.mxu0 0.0
      %3907 = vmatmul.mubr.f32.gmra.mxu0 %v3840
      %v3908 = vpop.f32.mrf.mxu0
      %v3909 = vadd.f32 0.0, %v3908
      %v3910 = vpop.f32.mrf.mxu0
      %3911 = vdwg.mxu0
      %v3912 = vadd.f32 %v3833, %v3909
      %s3913 = scalar_lea.vmem %s7, 24
      %v3914 = vld [vmem:[%s3913] sm:$0xff]
      %3915 = vrot.lane.b32.xlu0 %v3676, 125
      %v3916 = vpop.permute.xlu0 %3915
      %v3919 = vsel %vm3679, %v3914, 0
      %3921 = vmatprep.subr.mxu0 0.0
      %3922 = vmatpush1.msra.mxu0 0.0
      %3923 = vmatprep.subr.mxu0 0.0
      %3924 = vmatpush1.msra.mxu0 0.0
      %3925 = vmatprep.subr.mxu0 0.0
      %3926 = vmatpush1.msra.mxu0 0.0
      %3927 = vmatprep.subr.mxu0 0.0
      %3928 = vmatpush1.msra.mxu0 0.0
      %3929 = vmatprep.subr.mxu0 0.0
      %3930 = vmatpush1.msra.mxu0 0.0
      %3931 = vmatprep.subr.mxu0 0.0
      %3932 = vmatpush1.msra.mxu0 0.0
      %3933 = vmatprep.subr.mxu0 0.0
      %3934 = vmatpush1.msra.mxu0 0.0
      %3935 = vmatprep.subr.mxu0 0.0
      %3936 = vmatpush1.msra.mxu0 0.0
      %3937 = vmatprep.subr.mxu0 0.0
      %3938 = vmatpush1.msra.mxu0 0.0
      %3939 = vmatprep.subr.mxu0 0.0
      %3940 = vmatpush1.msra.mxu0 0.0
      %3941 = vmatprep.subr.mxu0 0.0
      %3942 = vmatpush1.msra.mxu0 0.0
      %3943 = vmatprep.subr.mxu0 0.0
      %3944 = vmatpush1.msra.mxu0 0.0
      %3945 = vmatprep.subr.mxu0 0.0
      %3946 = vmatpush1.msra.mxu0 0.0
      %3947 = vmatprep.subr.mxu0 0.0
      %3948 = vmatpush1.msra.mxu0 0.0
      %3949 = vmatprep.subr.mxu0 0.0
      %3950 = vmatpush1.msra.mxu0 0.0
      %3951 = vmatprep.subr.mxu0 0.0
      %3952 = vmatpush1.msra.mxu0 %v3916
      %3953 = vmatprep.subr.mxu0 0.0
      %3954 = vmatpush2.msra.mxu0 0.0
      %3955 = vmatprep.subr.mxu0 0.0
      %3956 = vmatpush2.msra.mxu0 0.0
      %3957 = vmatprep.subr.mxu0 0.0
      %3958 = vmatpush2.msra.mxu0 0.0
      %3959 = vmatprep.subr.mxu0 0.0
      %3960 = vmatpush2.msra.mxu0 0.0
      %3961 = vmatprep.subr.mxu0 0.0
      %3962 = vmatpush2.msra.mxu0 0.0
      %3963 = vmatprep.subr.mxu0 0.0
      %3964 = vmatpush2.msra.mxu0 0.0
      %3965 = vmatprep.subr.mxu0 0.0
      %3966 = vmatpush2.msra.mxu0 0.0
      %3967 = vmatprep.subr.mxu0 0.0
      %3968 = vmatpush2.msra.mxu0 0.0
      %3969 = vmatprep.subr.mxu0 0.0
      %3970 = vmatpush2.msra.mxu0 0.0
      %3971 = vmatprep.subr.mxu0 0.0
      %3972 = vmatpush2.msra.mxu0 0.0
      %3973 = vmatprep.subr.mxu0 0.0
      %3974 = vmatpush2.msra.mxu0 0.0
      %3975 = vmatprep.subr.mxu0 0.0
      %3976 = vmatpush2.msra.mxu0 0.0
      %3977 = vmatprep.subr.mxu0 0.0
      %3978 = vmatpush2.msra.mxu0 0.0
      %3979 = vmatprep.subr.mxu0 0.0
      %3980 = vmatpush2.msra.mxu0 0.0
      %3981 = vmatprep.subr.mxu0 0.0
      %3982 = vmatpush2.msra.mxu0 0.0
      %3983 = vmatprep.subr.mxu0 0.0
      %3984 = vmatpush2.msra.mxu0 0.0
      %3985 = vmatprep.mubr.f32.mxu0 0.0
      %3986 = vmatmul.mubr.f32.gmra.mxu0 %v3919
      %v3987 = vpop.f32.mrf.mxu0
      %v3988 = vadd.f32 0.0, %v3987
      %v3989 = vpop.f32.mrf.mxu0
      %3990 = vdwg.mxu0
      %v3991 = vadd.f32 %v3912, %v3988
      %v3992 = vmax.f32 %v3991, 0.0
      %v3993 = vld [vmem:[%s9] sm:$0x3]
      %v3994 = vld [vmem:[%s10] sm:$0x3]
      %v3996 = vsel %vm3679, %v3993, 0
      %3998 = vmatprep.subr.mxu0 0.0
      %3999 = vmatpush1.msra.mxu0 0.0
      %4000 = vmatprep.subr.mxu0 0.0
      %4001 = vmatpush1.msra.mxu0 0.0
      %4002 = vmatprep.subr.mxu0 0.0
      %4003 = vmatpush1.msra.mxu0 0.0
      %4004 = vmatprep.subr.mxu0 0.0
      %4005 = vmatpush1.msra.mxu0 0.0
      %4006 = vmatprep.subr.mxu0 0.0
      %4007 = vmatpush1.msra.mxu0 0.0
      %4008 = vmatprep.subr.mxu0 0.0
      %4009 = vmatpush1.msra.mxu0 0.0
      %4010 = vmatprep.subr.mxu0 0.0
      %4011 = vmatpush1.msra.mxu0 0.0
      %4012 = vmatprep.subr.mxu0 0.0
      %4013 = vmatpush1.msra.mxu0 0.0
      %4014 = vmatprep.subr.mxu0 0.0
      %4015 = vmatpush1.msra.mxu0 0.0
      %4016 = vmatprep.subr.mxu0 0.0
      %4017 = vmatpush1.msra.mxu0 0.0
      %4018 = vmatprep.subr.mxu0 0.0
      %4019 = vmatpush1.msra.mxu0 0.0
      %4020 = vmatprep.subr.mxu0 0.0
      %4021 = vmatpush1.msra.mxu0 0.0
      %4022 = vmatprep.subr.mxu0 0.0
      %4023 = vmatpush1.msra.mxu0 0.0
      %4024 = vmatprep.subr.mxu0 0.0
      %4025 = vmatpush1.msra.mxu0 0.0
      %4026 = vmatprep.subr.mxu0 0.0
      %4027 = vmatpush1.msra.mxu0 0.0
      %4028 = vmatprep.subr.mxu0 0.0
      %4029 = vmatpush1.msra.mxu0 %v3992
      %4030 = vmatprep.subr.mxu0 0.0
      %4031 = vmatpush2.msra.mxu0 0.0
      %4032 = vmatprep.subr.mxu0 0.0
      %4033 = vmatpush2.msra.mxu0 0.0
      %4034 = vmatprep.subr.mxu0 0.0
      %4035 = vmatpush2.msra.mxu0 0.0
      %4036 = vmatprep.subr.mxu0 0.0
      %4037 = vmatpush2.msra.mxu0 0.0
      %4038 = vmatprep.subr.mxu0 0.0
      %4039 = vmatpush2.msra.mxu0 0.0
      %4040 = vmatprep.subr.mxu0 0.0
      %4041 = vmatpush2.msra.mxu0 0.0
      %4042 = vmatprep.subr.mxu0 0.0
      %4043 = vmatpush2.msra.mxu0 0.0
      %4044 = vmatprep.subr.mxu0 0.0
      %4045 = vmatpush2.msra.mxu0 0.0
      %4046 = vmatprep.subr.mxu0 0.0
      %4047 = vmatpush2.msra.mxu0 0.0
      %4048 = vmatprep.subr.mxu0 0.0
      %4049 = vmatpush2.msra.mxu0 0.0
      %4050 = vmatprep.subr.mxu0 0.0
      %4051 = vmatpush2.msra.mxu0 0.0
      %4052 = vmatprep.subr.mxu0 0.0
      %4053 = vmatpush2.msra.mxu0 0.0
      %4054 = vmatprep.subr.mxu0 0.0
      %4055 = vmatpush2.msra.mxu0 0.0
      %4056 = vmatprep.subr.mxu0 0.0
      %4057 = vmatpush2.msra.mxu0 0.0
      %4058 = vmatprep.subr.mxu0 0.0
      %4059 = vmatpush2.msra.mxu0 0.0
      %4060 = vmatprep.subr.mxu0 0.0
      %4061 = vmatpush2.msra.mxu0 0.0
      %4062 = vmatprep.mubr.f32.mxu0 0.0
      %4063 = vmatmul.mubr.f32.gmra.mxu0 %v3996
      %v4064 = vpop.f32.mrf.mxu0
      %v4065 = vadd.f32 %v3994, %v4064
      %v4066 = vpop.f32.mrf.mxu0
      %4067 = vdwg.mxu0
      %vm4068 = vcmask 1024
      %4069 = vst.msk [vmem:[%s384] sm:$0x3] %vm4068, %v4065
      %p4070 = scmp.lt.s32.totalorder %s22, 1
      %s4071 = scalar_select %p4070, %s22, 1
      %s4072 = smul.addr %s4071, 2
      %s4073 = scalar_lea.vmem %s11, %s4072
      // Predicated region
      $region65: #{_lambda_.1} parent=63 // pred_check
        %p4074 = pneg %p276
      $region66: #{_lambda_.1} parent=63 // pred_check_branch
        %4076 = sbr.rel (%p4074) target = $region68
      $region67: #{_lambda_.1} parent=63 // pred_region
        _
      $region68: #{_lambda_.1} parent=63 // pred_fallthru
        _
    $region64: #{_lambda_.1} parent=5 // pred_fallthru
      _
    %p4077 = scmp.le.s32.totalorder 2, %s17
    // Predicated region
    $region69: #{_lambda_.1} parent=5 // pred_check
      %p4078 = pneg %p4077
    $region70: #{_lambda_.1} parent=5 // pred_check_branch
      %4080 = sbr.rel (%p4078) target = $region72
    $region71: #{_lambda_.1} parent=5 // pred_region
      %s4081 = ssub.s32 %s17, 2
      // Predicated region
      $region73: #{_lambda_.1} parent=71 // pred_check
        %p4082 = pneg %p282
      $region74: #{_lambda_.1} parent=71 // pred_check_branch
        %4084 = sbr.rel (%p4082) target = $region76
      $region75: #{_lambda_.1} parent=71 // pred_region
        %p4085 = scmp.lt.s32.totalorder %s23, 1
        %s4086 = scalar_select %p4085, %s23, 1
        %s4087 = smul.addr %s4086, 2
        %s4088 = scalar_lea.vmem %s11, %s4087
      $region76: #{_lambda_.1} parent=71 // pred_fallthru
        _
    $region72: #{_lambda_.1} parent=5 // pred_fallthru
      _
  $region6: #{_lambda_.1} parent=0 // loop_footer
    %s21 = sadd.s32 1, %s17
  $region7: #{_lambda_.1} parent=0 // loop_footer_branch
    %16 = sbr.rel target = $region3
  $region8: #{_lambda_.1} parent=0 // loop_exit
    _

</llo_original>
